<compile_context>
chip_gen: v6e
topology: v6e:2x2x1
jax: 0.10.0
libtpu: 0.0.40
codegen_flags: <defaults>
</compile_context>

<pallas_src>
import functools

import jax
import jax.numpy as jnp
from jax.experimental import pallas as pl
from jax.experimental.pallas import tpu as pltpu


def _round_up(n, m):
    return ((n + m - 1) // m) * m


# ---------------------------------------------------------------------------
# Fused DenseBlock kernel (batch_tile images per grid step)
# ---------------------------------------------------------------------------
def _dense_block_kernel(x_ref, mask_ref, w_ref, b_ref, o_ref, fbuf_ref, pstk_ref,
                        *, num_layer, growth_rate, in_channels, H, W,
                        lead, pf, wfa, batch_tile, row_offs):
    L, G, B = num_layer, growth_rate, batch_tile
    Wp = W + 2
    WF = H * Wp
    lead0 = lead - (Wp + 1)          # lane of padded-flat index 0 inside a slab
    nfeat = (L - 1) * G

    mask = mask_ref[...]             # (1, B*wfa) f32; 1.0 on valid interior cols

    # Zero ONLY the halo lanes of the feature buffer (per image slab).  The
    # interior window [lead, lead+wfa) is fully overwritten with masked values
    # every layer; the halos provide the 3x3 conv's implicit zero padding.
    # Done every grid step (cheap) -- never key this off program_id: on v7x
    # the grid may be split across TensorCores.
    for img in range(B):
        base = img * pf
        fbuf_ref[:, base:base + lead] = jnp.zeros((nfeat, lead), fbuf_ref.dtype)
        fbuf_ref[:, base + lead + WF:base + pf] = jnp.zeros(
            (nfeat, pf - lead - WF), fbuf_ref.dtype)

    # Incremental channel-block-major patch stack: rows [blk*9G, (blk+1)*9G)
    # hold the 9 shifted taps of feature block `blk` (tap-major inside the
    # block); only the newly produced G channels are gathered each layer.
    def gather(read_row, cin, dst_row0):
        for kh in range(3):
            for kw in range(3):
                t = kh * 3 + kw
                a = lead0 + kh * Wp + kw
                for img in range(B):
                    pstk_ref[dst_row0 + t * cin:dst_row0 + (t + 1) * cin,
                             img * wfa:(img + 1) * wfa] = read_row(img, a)

    def conv(layer_idx, k):
        roff, cout = row_offs[layer_idx]
        acc = jax.lax.dot_general(
            w_ref[roff:roff + cout, 0:k], pstk_ref[0:k, :],
            dimension_numbers=(((1,), (0,)), ((), ())),
            preferred_element_type=jnp.float32)            # (cout, B*wfa) f32
        return acc + b_ref[roff:roff + cout, :]

    def store_feature(y, blk):       # y: (G, B*wfa) f32, junk columns zeroed
        for img in range(B):
            fbuf_ref[blk * G:(blk + 1) * G,
                     img * pf + lead:img * pf + lead + wfa] = (
                y[:, img * wfa:(img + 1) * wfa].astype(fbuf_ref.dtype))

    # conv0 consumes the pre-padded, pre-flattened input x.
    gather(lambda img, a: x_ref[img, 0:in_channels, a:a + wfa], in_channels, 0)
    y = jnp.maximum(conv(0, 9 * in_channels), 0.0) * mask
    store_feature(y, 0)

    # Dense layers: layer i consumes feature blocks 0..i already resident in
    # VMEM; only block i's taps are new in the patch stack.
    for i in range(L - 1):
        c0 = i * G
        gather(lambda img, a, c0=c0: fbuf_ref[c0:c0 + G,
                                              img * pf + a:img * pf + a + wfa],
               G, i * 9 * G)
        acc = conv(i + 1, 9 * (i + 1) * G)
        if i < L - 2:
            store_feature(jnp.maximum(acc, 0.0) * mask, i + 1)
        else:
            # act[-1] == ReLU; junk / alignment columns are sliced off outside,
            # so no mask multiply is needed for the final layer.
            y = jnp.maximum(acc, 0.0)
            for img in range(B):
                o_ref[img, :, :] = y[:, img * wfa:(img + 1) * wfa].astype(o_ref.dtype)


# ---------------------------------------------------------------------------
# Wrapper
# ---------------------------------------------------------------------------
@functools.partial(jax.jit,
                   static_argnames=("num_layer", "compute_dtype", "batch_tile"))
def dense_block_forward(x_nchw, params, num_layer, *,
                        compute_dtype=jnp.float32, batch_tile=None):
    N, Cin, H, W = x_nchw.shape
    L = num_layer
    G = params["conv0"][0].shape[-1]
    out_channels = params["conv"][-1][0].shape[-1]

    bt = batch_tile if batch_tile is not None else (2 if N % 2 == 0 else 1)
    assert N % bt == 0

    Wp = W + 2
    WF = H * Wp                               # wide flat interior (2 junk cols/row)
    WFA = _round_up(WF, 128)                  # lane-aligned matmul / store width
    LEAD = _round_up(Wp + 1, 128)             # interior starts on a vreg boundary
    LEAD0 = LEAD - (Wp + 1)                   # lane of padded-flat index 0
    PF = _round_up(LEAD0 + 2 * Wp + 2 + WFA, 128)   # per-image slab width

    # One-time pad + flatten of the input; all per-layer feature traffic then
    # stays inside VMEM.
    xp = jnp.pad(x_nchw, ((0, 0), (0, 0), (1, 1), (1, 1)))
    xpf = xp.reshape(N, Cin, (H + 2) * Wp)
    xpf = jnp.pad(xpf, ((0, 0), (0, 0), (LEAD0, PF - LEAD0 - (H + 2) * Wp)))
    xpf = xpf.astype(compute_dtype)

    # 1.0 on valid interior output columns of each image's WFA-wide slab.
    col = jnp.arange(WFA)
    m1 = ((col < WF) & ((col % Wp) < W)).astype(jnp.float32)
    mask = jnp.tile(m1, (bt,)).reshape(1, bt * WFA)

    # Pack all layer weights / biases into a single slab each (fewer
    # grid-invariant operands).  Per-layer row blocks are 8-aligned.
    layers = []
    w0, b0 = params["conv0"]                               # HWIO (3,3,Cin,G)
    layers.append((w0.reshape(9 * Cin, G).T, b0.reshape(G, 1)))   # tap-major block
    for (wi, bi) in params["conv"]:
        cin, cout = wi.shape[2], wi.shape[3]
        m = cin // G
        wm = (wi.reshape(3, 3, m, G, cout)
                .transpose(2, 0, 1, 3, 4)     # channel-block major, tap-major in block
                .reshape(9 * cin, cout).T)
        layers.append((wm, bi.reshape(cout, 1)))

    KMAX = _round_up(max(w.shape[1] for w, _ in layers), 128)
    row_offs, off = [], 0
    for w, _ in layers:
        row_offs.append((off, w.shape[0]))
        off += _round_up(w.shape[0], 8)
    WROWS = off
    wslab = jnp.zeros((WROWS, KMAX), compute_dtype)
    bslab = jnp.zeros((WROWS, 1), jnp.float32)
    for (roff, cout), (w, b) in zip(row_offs, layers):
        wslab = wslab.at[roff:roff + cout, 0:w.shape[1]].set(w.astype(compute_dtype))
        bslab = bslab.at[roff:roff + cout, :].set(b.astype(jnp.float32))

    max_cin = max(Cin, (L - 1) * G)
    kernel = functools.partial(
        _dense_block_kernel, num_layer=L, growth_rate=G, in_channels=Cin,
        H=H, W=W, lead=LEAD, pf=PF, wfa=WFA, batch_tile=bt,
        row_offs=tuple(row_offs))

    out_wide = pl.pallas_call(
        kernel,
        out_shape=jax.ShapeDtypeStruct((N, out_channels, WFA), x_nchw.dtype),
        grid=(N // bt,),
        in_specs=[
            pl.BlockSpec((bt, Cin, PF), lambda b: (b, 0, 0)),
            pl.BlockSpec((1, bt * WFA), lambda b: (0, 0)),
            pl.BlockSpec((WROWS, KMAX), lambda b: (0, 0)),
            pl.BlockSpec((WROWS, 1), lambda b: (0, 0)),
        ],
        out_specs=pl.BlockSpec((bt, out_channels, WFA), lambda b: (b, 0, 0)),
        scratch_shapes=[
            pltpu.VMEM(((L - 1) * G, bt * PF), compute_dtype),   # feature buffer
            pltpu.VMEM((9 * max_cin, bt * WFA), compute_dtype),  # 9-tap patch stack
        ],
        compiler_params=pltpu.CompilerParams(
            dimension_semantics=("parallel",),
            vmem_limit_bytes=32 * 1024 * 1024),
    )(xpf, mask, wslab, bslab)

    # Wide column j = h*(W+2) + w ; drop the junk columns and alignment pad.
    return out_wide[:, :, :WF].reshape(N, out_channels, H, Wp)[:, :, :, :W]


# ---------------------------------------------------------------------------
# DenseBlock parameter construction (deterministic, PyTorch-default-like init)
# ---------------------------------------------------------------------------
def init_dense_block_params(key, in_channels, out_channels, num_layer):
    assert out_channels % num_layer == 0
    growth_rate = out_channels // num_layer

    def conv_init(key, cin, cout):
        kw_, kb_ = jax.random.split(key)
        bound = 1.0 / jnp.sqrt(cin * 9.0)
        w = jax.random.uniform(kw_, (3, 3, cin, cout), jnp.float32,
                               -bound, bound)                 # HWIO
        b = jax.random.uniform(kb_, (cout,), jnp.float32, -bound, bound)
        return w, b

    keys = jax.random.split(key, num_layer)
    params = {"conv0": conv_init(keys[0], in_channels, growth_rate), "conv": []}
    for i in range(1, num_layer - 1):
        params["conv"].append(conv_init(keys[i], i * growth_rate, growth_rate))
    params["conv"].append(
        conv_init(keys[num_layer - 1], (num_layer - 1) * growth_rate,
                  out_channels))
    return params


# ---------------------------------------------------------------------------
# Pure-JAX reference (correctness check of the Pallas path)
# ---------------------------------------------------------------------------
def _ref_conv(x, w, b):
    y = jax.lax.conv_general_dilated(
        x, w, window_strides=(1, 1), padding="SAME",
        dimension_numbers=("NHWC", "HWIO", "NHWC"))
    return y + b[None, None, None, :]


def dense_block_reference(x_nchw, params, num_layer):
    x = jnp.transpose(x_nchw, (0, 2, 3, 1))
    w0, b0 = params["conv0"]
    x = _ref_conv(x, w0, b0)
    feats = [x]
    feat = x
    for i in range(num_layer - 1):
        xcat = jnp.concatenate(feats, axis=-1)
        wi, bi = params["conv"][i]
        feat = _ref_conv(jnp.maximum(xcat, 0.0), wi, bi)
        feats.append(feat)
    feat = jnp.maximum(feat, 0.0)
    return jnp.transpose(feat, (0, 3, 1, 2))


if __name__ == "__main__":
    in_channels, out_channels, num_layer = 4, 16, 4   # growth_rate = 4
    N, H, W = 4, 16, 16

    key = jax.random.PRNGKey(0)
    kx, kp = jax.random.split(key)
    x = jax.random.normal(kx, (N, in_channels, H, W), jnp.float32)   # NCHW
    params = init_dense_block_params(kp, in_channels, out_channels, num_layer)

    ref = jax.block_until_ready(dense_block_reference(x, params, num_layer))

    # f32 path, default batch_tile=2 -> grid=(2,) with 2 images per step.
    out = jax.block_until_ready(
        dense_block_forward(x, params, num_layer=num_layer))
    assert out.shape == (N, out_channels, H, W)
    assert jnp.allclose(out, ref, atol=1e-4, rtol=1e-4)

    # Degenerate batch_tile=1 path (one image per grid step).
    out_b1 = jax.block_until_ready(
        dense_block_forward(x, params, num_layer=num_layer, batch_tile=1))
    assert jnp.allclose(out_b1, ref, atol=1e-4, rtol=1e-4)

    # bf16 MXU-operand / resident-feature path (v6e/v7x fast path); f32
    # accumulation and f32 bias/ReLU/mask, so only operand-rounding error.
    out_bf16 = jax.block_until_ready(
        dense_block_forward(x, params, num_layer=num_layer,
                            compute_dtype=jnp.bfloat16))
    assert jnp.allclose(out_bf16, ref, atol=0.15, rtol=0.05)

    print("KERNEL_OK")
</pallas_src>

<mosaic_0001>
module attributes {stable_mosaic.version = 11 : i64} {
  func.func @_dense_block_kernel(%arg0: i32, %arg1: memref<2x4x640xf32, #tpu.memory_space<vmem>>, %arg2: memref<1x768xf32, #tpu.memory_space<vmem>>, %arg3: memref<40x128xf32, #tpu.memory_space<vmem>>, %arg4: memref<40x1xf32, #tpu.memory_space<vmem>>, %arg5: memref<2x16x384xf32, #tpu.memory_space<vmem>>, %arg6: memref<12x1280xf32, #tpu.memory_space<vmem>>, %arg7: memref<108x768xf32, #tpu.memory_space<vmem>>) attributes {dimension_semantics = [#tpu.dimension_semantics<parallel>], iteration_bounds = array<i64: 2>, scalar_prefetch = 0 : i64, scratch_operands = 2 : i64, tpu.core_type = #tpu.core_type<tc>, window_params = [{transform_indices = @transform_0, window_bounds = array<i64: 2, 4, 640>}, {pipeline_mode = #tpu.pipeline_mode<synchronous>, transform_indices = @transform_1, window_bounds = array<i64: 1, 768>}, {pipeline_mode = #tpu.pipeline_mode<synchronous>, transform_indices = @transform_2, window_bounds = array<i64: 40, 128>}, {pipeline_mode = #tpu.pipeline_mode<synchronous>, transform_indices = @transform_3, window_bounds = array<i64: 40, 1>}, {transform_indices = @transform_4, window_bounds = array<i64: 2, 16, 384>}]} {
    %c0 = arith.constant 0 : index
    %c0_0 = arith.constant 0 : index
    %0 = vector.load %arg2[%c0, %c0_0] : memref<1x768xf32, #tpu.memory_space<vmem>>, vector<1x768xf32>
    %cst = arith.constant 0.000000e+00 : f32
    %1 = vector.broadcast %cst : f32 to vector<12x128xf32>
    %c0_1 = arith.constant 0 : index
    %c0_2 = arith.constant 0 : index
    %2 = vector.load %arg6[%c0_1, %c0_2] : memref<12x1280xf32, #tpu.memory_space<vmem>>, vector<12x128xf32>
    tpu.vector_store %arg6[%c0_1, %c0_2], %1 {strides = array<i32>} : memref<12x1280xf32, #tpu.memory_space<vmem>>, vector<12x128xf32>,
    %cst_3 = arith.constant 0.000000e+00 : f32
    %3 = vector.broadcast %cst_3 : f32 to vector<12x224xf32>
    %c0_4 = arith.constant 0 : index
    %c416 = arith.constant 416 : index
    %4 = vector.load %arg6[%c0_4, %c416] : memref<12x1280xf32, #tpu.memory_space<vmem>>, vector<12x224xf32>
    tpu.vector_store %arg6[%c0_4, %c416], %3 {strides = array<i32>} : memref<12x1280xf32, #tpu.memory_space<vmem>>, vector<12x224xf32>,
    %cst_5 = arith.constant 0.000000e+00 : f32
    %5 = vector.broadcast %cst_5 : f32 to vector<12x128xf32>
    %c0_6 = arith.constant 0 : index
    %c640 = arith.constant 640 : index
    %6 = vector.load %arg6[%c0_6, %c640] : memref<12x1280xf32, #tpu.memory_space<vmem>>, vector<12x128xf32>
    tpu.vector_store %arg6[%c0_6, %c640], %5 {strides = array<i32>} : memref<12x1280xf32, #tpu.memory_space<vmem>>, vector<12x128xf32>,
    %cst_7 = arith.constant 0.000000e+00 : f32
    %7 = vector.broadcast %cst_7 : f32 to vector<12x224xf32>
    %c0_8 = arith.constant 0 : index
    %c1056 = arith.constant 1056 : index
    %8 = vector.load %arg6[%c0_8, %c1056] : memref<12x1280xf32, #tpu.memory_space<vmem>>, vector<12x224xf32>
    tpu.vector_store %arg6[%c0_8, %c1056], %7 {strides = array<i32>} : memref<12x1280xf32, #tpu.memory_space<vmem>>, vector<12x224xf32>,
    %c0_9 = arith.constant 0 : index
    %c0_10 = arith.constant 0 : index
    %c109 = arith.constant 109 : index
    %9 = vector.load %arg1[%c0_9, %c0_10, %c109] : memref<2x4x640xf32, #tpu.memory_space<vmem>>, vector<1x4x384xf32>
    %10 = vector.shape_cast %9 : vector<1x4x384xf32> to vector<4x384xf32>
    %c0_11 = arith.constant 0 : index
    %c0_12 = arith.constant 0 : index
    %11 = vector.load %arg7[%c0_11, %c0_12] : memref<108x768xf32, #tpu.memory_space<vmem>>, vector<4x384xf32>
    tpu.vector_store %arg7[%c0_11, %c0_12], %10 {strides = array<i32>} : memref<108x768xf32, #tpu.memory_space<vmem>>, vector<4x384xf32>,
    %c1 = arith.constant 1 : index
    %c0_13 = arith.constant 0 : index
    %c109_14 = arith.constant 109 : index
    %12 = vector.load %arg1[%c1, %c0_13, %c109_14] : memref<2x4x640xf32, #tpu.memory_space<vmem>>, vector<1x4x384xf32>
    %13 = vector.shape_cast %12 : vector<1x4x384xf32> to vector<4x384xf32>
    %c0_15 = arith.constant 0 : index
    %c384 = arith.constant 384 : index
    %14 = vector.load %arg7[%c0_15, %c384] : memref<108x768xf32, #tpu.memory_space<vmem>>, vector<4x384xf32>
    tpu.vector_store %arg7[%c0_15, %c384], %13 {strides = array<i32>} : memref<108x768xf32, #tpu.memory_space<vmem>>, vector<4x384xf32>,
    %c0_16 = arith.constant 0 : index
    %c0_17 = arith.constant 0 : index
    %c110 = arith.constant 110 : index
    %15 = vector.load %arg1[%c0_16, %c0_17, %c110] : memref<2x4x640xf32, #tpu.memory_space<vmem>>, vector<1x4x384xf32>
    %16 = vector.shape_cast %15 : vector<1x4x384xf32> to vector<4x384xf32>
    %c4 = arith.constant 4 : index
    %c0_18 = arith.constant 0 : index
    %17 = vector.load %arg7[%c4, %c0_18] : memref<108x768xf32, #tpu.memory_space<vmem>>, vector<4x384xf32>
    tpu.vector_store %arg7[%c4, %c0_18], %16 {strides = array<i32>} : memref<108x768xf32, #tpu.memory_space<vmem>>, vector<4x384xf32>,
    %c1_19 = arith.constant 1 : index
    %c0_20 = arith.constant 0 : index
    %c110_21 = arith.constant 110 : index
    %18 = vector.load %arg1[%c1_19, %c0_20, %c110_21] : memref<2x4x640xf32, #tpu.memory_space<vmem>>, vector<1x4x384xf32>
    %19 = vector.shape_cast %18 : vector<1x4x384xf32> to vector<4x384xf32>
    %c4_22 = arith.constant 4 : index
    %c384_23 = arith.constant 384 : index
    %20 = vector.load %arg7[%c4_22, %c384_23] : memref<108x768xf32, #tpu.memory_space<vmem>>, vector<4x384xf32>
    tpu.vector_store %arg7[%c4_22, %c384_23], %19 {strides = array<i32>} : memref<108x768xf32, #tpu.memory_space<vmem>>, vector<4x384xf32>,
    %c0_24 = arith.constant 0 : index
    %c0_25 = arith.constant 0 : index
    %c111 = arith.constant 111 : index
    %21 = vector.load %arg1[%c0_24, %c0_25, %c111] : memref<2x4x640xf32, #tpu.memory_space<vmem>>, vector<1x4x384xf32>
    %22 = vector.shape_cast %21 : vector<1x4x384xf32> to vector<4x384xf32>
    %c8 = arith.constant 8 : index
    %c0_26 = arith.constant 0 : index
    %23 = vector.load %arg7[%c8, %c0_26] : memref<108x768xf32, #tpu.memory_space<vmem>>, vector<4x384xf32>
    tpu.vector_store %arg7[%c8, %c0_26], %22 {strides = array<i32>} : memref<108x768xf32, #tpu.memory_space<vmem>>, vector<4x384xf32>,
    %c1_27 = arith.constant 1 : index
    %c0_28 = arith.constant 0 : index
    %c111_29 = arith.constant 111 : index
    %24 = vector.load %arg1[%c1_27, %c0_28, %c111_29] : memref<2x4x640xf32, #tpu.memory_space<vmem>>, vector<1x4x384xf32>
    %25 = vector.shape_cast %24 : vector<1x4x384xf32> to vector<4x384xf32>
    %c8_30 = arith.constant 8 : index
    %c384_31 = arith.constant 384 : index
    %26 = vector.load %arg7[%c8_30, %c384_31] : memref<108x768xf32, #tpu.memory_space<vmem>>, vector<4x384xf32>
    tpu.vector_store %arg7[%c8_30, %c384_31], %25 {strides = array<i32>} : memref<108x768xf32, #tpu.memory_space<vmem>>, vector<4x384xf32>,
    %c0_32 = arith.constant 0 : index
    %c0_33 = arith.constant 0 : index
    %c127 = arith.constant 127 : index
    %27 = vector.load %arg1[%c0_32, %c0_33, %c127] : memref<2x4x640xf32, #tpu.memory_space<vmem>>, vector<1x4x384xf32>
    %28 = vector.shape_cast %27 : vector<1x4x384xf32> to vector<4x384xf32>
    %c12 = arith.constant 12 : index
    %c0_34 = arith.constant 0 : index
    %29 = vector.load %arg7[%c12, %c0_34] : memref<108x768xf32, #tpu.memory_space<vmem>>, vector<4x384xf32>
    tpu.vector_store %arg7[%c12, %c0_34], %28 {strides = array<i32>} : memref<108x768xf32, #tpu.memory_space<vmem>>, vector<4x384xf32>,
    %c1_35 = arith.constant 1 : index
    %c0_36 = arith.constant 0 : index
    %c127_37 = arith.constant 127 : index
    %30 = vector.load %arg1[%c1_35, %c0_36, %c127_37] : memref<2x4x640xf32, #tpu.memory_space<vmem>>, vector<1x4x384xf32>
    %31 = vector.shape_cast %30 : vector<1x4x384xf32> to vector<4x384xf32>
    %c12_38 = arith.constant 12 : index
    %c384_39 = arith.constant 384 : index
    %32 = vector.load %arg7[%c12_38, %c384_39] : memref<108x768xf32, #tpu.memory_space<vmem>>, vector<4x384xf32>
    tpu.vector_store %arg7[%c12_38, %c384_39], %31 {strides = array<i32>} : memref<108x768xf32, #tpu.memory_space<vmem>>, vector<4x384xf32>,
    %c0_40 = arith.constant 0 : index
    %c0_41 = arith.constant 0 : index
    %c128 = arith.constant 128 : index
    %33 = vector.load %arg1[%c0_40, %c0_41, %c128] : memref<2x4x640xf32, #tpu.memory_space<vmem>>, vector<1x4x384xf32>
    %34 = vector.shape_cast %33 : vector<1x4x384xf32> to vector<4x384xf32>
    %c16 = arith.constant 16 : index
    %c0_42 = arith.constant 0 : index
    %35 = vector.load %arg7[%c16, %c0_42] : memref<108x768xf32, #tpu.memory_space<vmem>>, vector<4x384xf32>
    tpu.vector_store %arg7[%c16, %c0_42], %34 {strides = array<i32>} : memref<108x768xf32, #tpu.memory_space<vmem>>, vector<4x384xf32>,
    %c1_43 = arith.constant 1 : index
    %c0_44 = arith.constant 0 : index
    %c128_45 = arith.constant 128 : index
    %36 = vector.load %arg1[%c1_43, %c0_44, %c128_45] : memref<2x4x640xf32, #tpu.memory_space<vmem>>, vector<1x4x384xf32>
    %37 = vector.shape_cast %36 : vector<1x4x384xf32> to vector<4x384xf32>
    %c16_46 = arith.constant 16 : index
    %c384_47 = arith.constant 384 : index
    %38 = vector.load %arg7[%c16_46, %c384_47] : memref<108x768xf32, #tpu.memory_space<vmem>>, vector<4x384xf32>
    tpu.vector_store %arg7[%c16_46, %c384_47], %37 {strides = array<i32>} : memref<108x768xf32, #tpu.memory_space<vmem>>, vector<4x384xf32>,
    %c0_48 = arith.constant 0 : index
    %c0_49 = arith.constant 0 : index
    %c129 = arith.constant 129 : index
    %39 = vector.load %arg1[%c0_48, %c0_49, %c129] : memref<2x4x640xf32, #tpu.memory_space<vmem>>, vector<1x4x384xf32>
    %40 = vector.shape_cast %39 : vector<1x4x384xf32> to vector<4x384xf32>
    %c20 = arith.constant 20 : index
    %c0_50 = arith.constant 0 : index
    %41 = vector.load %arg7[%c20, %c0_50] : memref<108x768xf32, #tpu.memory_space<vmem>>, vector<4x384xf32>
    tpu.vector_store %arg7[%c20, %c0_50], %40 {strides = array<i32>} : memref<108x768xf32, #tpu.memory_space<vmem>>, vector<4x384xf32>,
    %c1_51 = arith.constant 1 : index
    %c0_52 = arith.constant 0 : index
    %c129_53 = arith.constant 129 : index
    %42 = vector.load %arg1[%c1_51, %c0_52, %c129_53] : memref<2x4x640xf32, #tpu.memory_space<vmem>>, vector<1x4x384xf32>
    %43 = vector.shape_cast %42 : vector<1x4x384xf32> to vector<4x384xf32>
    %c20_54 = arith.constant 20 : index
    %c384_55 = arith.constant 384 : index
    %44 = vector.load %arg7[%c20_54, %c384_55] : memref<108x768xf32, #tpu.memory_space<vmem>>, vector<4x384xf32>
    tpu.vector_store %arg7[%c20_54, %c384_55], %43 {strides = array<i32>} : memref<108x768xf32, #tpu.memory_space<vmem>>, vector<4x384xf32>,
    %c0_56 = arith.constant 0 : index
    %c0_57 = arith.constant 0 : index
    %c145 = arith.constant 145 : index
    %45 = vector.load %arg1[%c0_56, %c0_57, %c145] : memref<2x4x640xf32, #tpu.memory_space<vmem>>, vector<1x4x384xf32>
    %46 = vector.shape_cast %45 : vector<1x4x384xf32> to vector<4x384xf32>
    %c24 = arith.constant 24 : index
    %c0_58 = arith.constant 0 : index
    %47 = vector.load %arg7[%c24, %c0_58] : memref<108x768xf32, #tpu.memory_space<vmem>>, vector<4x384xf32>
    tpu.vector_store %arg7[%c24, %c0_58], %46 {strides = array<i32>} : memref<108x768xf32, #tpu.memory_space<vmem>>, vector<4x384xf32>,
    %c1_59 = arith.constant 1 : index
    %c0_60 = arith.constant 0 : index
    %c145_61 = arith.constant 145 : index
    %48 = vector.load %arg1[%c1_59, %c0_60, %c145_61] : memref<2x4x640xf32, #tpu.memory_space<vmem>>, vector<1x4x384xf32>
    %49 = vector.shape_cast %48 : vector<1x4x384xf32> to vector<4x384xf32>
    %c24_62 = arith.constant 24 : index
    %c384_63 = arith.constant 384 : index
    %50 = vector.load %arg7[%c24_62, %c384_63] : memref<108x768xf32, #tpu.memory_space<vmem>>, vector<4x384xf32>
    tpu.vector_store %arg7[%c24_62, %c384_63], %49 {strides = array<i32>} : memref<108x768xf32, #tpu.memory_space<vmem>>, vector<4x384xf32>,
    %c0_64 = arith.constant 0 : index
    %c0_65 = arith.constant 0 : index
    %c146 = arith.constant 146 : index
    %51 = vector.load %arg1[%c0_64, %c0_65, %c146] : memref<2x4x640xf32, #tpu.memory_space<vmem>>, vector<1x4x384xf32>
    %52 = vector.shape_cast %51 : vector<1x4x384xf32> to vector<4x384xf32>
    %c28 = arith.constant 28 : index
    %c0_66 = arith.constant 0 : index
    %53 = vector.load %arg7[%c28, %c0_66] : memref<108x768xf32, #tpu.memory_space<vmem>>, vector<4x384xf32>
    tpu.vector_store %arg7[%c28, %c0_66], %52 {strides = array<i32>} : memref<108x768xf32, #tpu.memory_space<vmem>>, vector<4x384xf32>,
    %c1_67 = arith.constant 1 : index
    %c0_68 = arith.constant 0 : index
    %c146_69 = arith.constant 146 : index
    %54 = vector.load %arg1[%c1_67, %c0_68, %c146_69] : memref<2x4x640xf32, #tpu.memory_space<vmem>>, vector<1x4x384xf32>
    %55 = vector.shape_cast %54 : vector<1x4x384xf32> to vector<4x384xf32>
    %c28_70 = arith.constant 28 : index
    %c384_71 = arith.constant 384 : index
    %56 = vector.load %arg7[%c28_70, %c384_71] : memref<108x768xf32, #tpu.memory_space<vmem>>, vector<4x384xf32>
    tpu.vector_store %arg7[%c28_70, %c384_71], %55 {strides = array<i32>} : memref<108x768xf32, #tpu.memory_space<vmem>>, vector<4x384xf32>,
    %c0_72 = arith.constant 0 : index
    %c0_73 = arith.constant 0 : index
    %c147 = arith.constant 147 : index
    %57 = vector.load %arg1[%c0_72, %c0_73, %c147] : memref<2x4x640xf32, #tpu.memory_space<vmem>>, vector<1x4x384xf32>
    %58 = vector.shape_cast %57 : vector<1x4x384xf32> to vector<4x384xf32>
    %c32 = arith.constant 32 : index
    %c0_74 = arith.constant 0 : index
    %59 = vector.load %arg7[%c32, %c0_74] : memref<108x768xf32, #tpu.memory_space<vmem>>, vector<4x384xf32>
    tpu.vector_store %arg7[%c32, %c0_74], %58 {strides = array<i32>} : memref<108x768xf32, #tpu.memory_space<vmem>>, vector<4x384xf32>,
    %c1_75 = arith.constant 1 : index
    %c0_76 = arith.constant 0 : index
    %c147_77 = arith.constant 147 : index
    %60 = vector.load %arg1[%c1_75, %c0_76, %c147_77] : memref<2x4x640xf32, #tpu.memory_space<vmem>>, vector<1x4x384xf32>
    %61 = vector.shape_cast %60 : vector<1x4x384xf32> to vector<4x384xf32>
    %c32_78 = arith.constant 32 : index
    %c384_79 = arith.constant 384 : index
    %62 = vector.load %arg7[%c32_78, %c384_79] : memref<108x768xf32, #tpu.memory_space<vmem>>, vector<4x384xf32>
    tpu.vector_store %arg7[%c32_78, %c384_79], %61 {strides = array<i32>} : memref<108x768xf32, #tpu.memory_space<vmem>>, vector<4x384xf32>,
    %c0_80 = arith.constant 0 : index
    %c0_81 = arith.constant 0 : index
    %63 = vector.load %arg3[%c0_80, %c0_81] : memref<40x128xf32, #tpu.memory_space<vmem>>, vector<4x36xf32>
    %c0_82 = arith.constant 0 : index
    %c0_83 = arith.constant 0 : index
    %64 = vector.load %arg7[%c0_82, %c0_83] : memref<108x768xf32, #tpu.memory_space<vmem>>, vector<36x768xf32>
    %cst_84 = arith.constant dense<0.000000e+00> : vector<4x768xf32>
    %65 = tpu.matmul %63, %64, %cst_84 {dimension_numbers = #tpu.dot_dimension_numbers<[1], [0], [0], [1], [0, 0, 1, 1], [], []>} : vector<4x36xf32>, vector<36x768xf32>, vector<4x768xf32> -> vector<4x768xf32>
    %c0_85 = arith.constant 0 : index
    %c0_86 = arith.constant 0 : index
    %66 = vector.load %arg4[%c0_85, %c0_86] : memref<40x1xf32, #tpu.memory_space<vmem>>, vector<4x1xf32>
    %67 = vector.broadcast %66 : vector<4x1xf32> to vector<4x768xf32>
    %68 = arith.addf %65, %67 : vector<4x768xf32>
    %cst_87 = arith.constant 0.000000e+00 : f32
    %69 = vector.broadcast %cst_87 : f32 to vector<4x768xf32>
    %70 = arith.maximumf %68, %69 : vector<4x768xf32>
    %71 = vector.broadcast %0 : vector<1x768xf32> to vector<4x768xf32>
    %72 = arith.mulf %70, %71 : vector<4x768xf32>
    %73 = vector.extract_strided_slice %72 {offsets = [0, 0], sizes = [4, 384], strides = [1, 1]} : vector<4x768xf32> to vector<4x384xf32>
    %c0_88 = arith.constant 0 : index
    %c128_89 = arith.constant 128 : index
    %74 = vector.load %arg6[%c0_88, %c128_89] : memref<12x1280xf32, #tpu.memory_space<vmem>>, vector<4x384xf32>
    tpu.vector_store %arg6[%c0_88, %c128_89], %73 {strides = array<i32>} : memref<12x1280xf32, #tpu.memory_space<vmem>>, vector<4x384xf32>,
    %75 = vector.extract_strided_slice %72 {offsets = [0, 384], sizes = [4, 384], strides = [1, 1]} : vector<4x768xf32> to vector<4x384xf32>
    %c0_90 = arith.constant 0 : index
    %c768 = arith.constant 768 : index
    %76 = vector.load %arg6[%c0_90, %c768] : memref<12x1280xf32, #tpu.memory_space<vmem>>, vector<4x384xf32>
    tpu.vector_store %arg6[%c0_90, %c768], %75 {strides = array<i32>} : memref<12x1280xf32, #tpu.memory_space<vmem>>, vector<4x384xf32>,
    %c0_91 = arith.constant 0 : index
    %c109_92 = arith.constant 109 : index
    %77 = vector.load %arg6[%c0_91, %c109_92] : memref<12x1280xf32, #tpu.memory_space<vmem>>, vector<4x384xf32>
    %c0_93 = arith.constant 0 : index
    %c0_94 = arith.constant 0 : index
    %78 = vector.load %arg7[%c0_93, %c0_94] : memref<108x768xf32, #tpu.memory_space<vmem>>, vector<4x384xf32>
    tpu.vector_store %arg7[%c0_93, %c0_94], %77 {strides = array<i32>} : memref<108x768xf32, #tpu.memory_space<vmem>>, vector<4x384xf32>,
    %c0_95 = arith.constant 0 : index
    %c749 = arith.constant 749 : index
    %79 = vector.load %arg6[%c0_95, %c749] : memref<12x1280xf32, #tpu.memory_space<vmem>>, vector<4x384xf32>
    %c0_96 = arith.constant 0 : index
    %c384_97 = arith.constant 384 : index
    %80 = vector.load %arg7[%c0_96, %c384_97] : memref<108x768xf32, #tpu.memory_space<vmem>>, vector<4x384xf32>
    tpu.vector_store %arg7[%c0_96, %c384_97], %79 {strides = array<i32>} : memref<108x768xf32, #tpu.memory_space<vmem>>, vector<4x384xf32>,
    %c0_98 = arith.constant 0 : index
    %c110_99 = arith.constant 110 : index
    %81 = vector.load %arg6[%c0_98, %c110_99] : memref<12x1280xf32, #tpu.memory_space<vmem>>, vector<4x384xf32>
    %c4_100 = arith.constant 4 : index
    %c0_101 = arith.constant 0 : index
    %82 = vector.load %arg7[%c4_100, %c0_101] : memref<108x768xf32, #tpu.memory_space<vmem>>, vector<4x384xf32>
    tpu.vector_store %arg7[%c4_100, %c0_101], %81 {strides = array<i32>} : memref<108x768xf32, #tpu.memory_space<vmem>>, vector<4x384xf32>,
    %c0_102 = arith.constant 0 : index
    %c750 = arith.constant 750 : index
    %83 = vector.load %arg6[%c0_102, %c750] : memref<12x1280xf32, #tpu.memory_space<vmem>>, vector<4x384xf32>
    %c4_103 = arith.constant 4 : index
    %c384_104 = arith.constant 384 : index
    %84 = vector.load %arg7[%c4_103, %c384_104] : memref<108x768xf32, #tpu.memory_space<vmem>>, vector<4x384xf32>
    tpu.vector_store %arg7[%c4_103, %c384_104], %83 {strides = array<i32>} : memref<108x768xf32, #tpu.memory_space<vmem>>, vector<4x384xf32>,
    %c0_105 = arith.constant 0 : index
    %c111_106 = arith.constant 111 : index
    %85 = vector.load %arg6[%c0_105, %c111_106] : memref<12x1280xf32, #tpu.memory_space<vmem>>, vector<4x384xf32>
    %c8_107 = arith.constant 8 : index
    %c0_108 = arith.constant 0 : index
    %86 = vector.load %arg7[%c8_107, %c0_108] : memref<108x768xf32, #tpu.memory_space<vmem>>, vector<4x384xf32>
    tpu.vector_store %arg7[%c8_107, %c0_108], %85 {strides = array<i32>} : memref<108x768xf32, #tpu.memory_space<vmem>>, vector<4x384xf32>,
    %c0_109 = arith.constant 0 : index
    %c751 = arith.constant 751 : index
    %87 = vector.load %arg6[%c0_109, %c751] : memref<12x1280xf32, #tpu.memory_space<vmem>>, vector<4x384xf32>
    %c8_110 = arith.constant 8 : index
    %c384_111 = arith.constant 384 : index
    %88 = vector.load %arg7[%c8_110, %c384_111] : memref<108x768xf32, #tpu.memory_space<vmem>>, vector<4x384xf32>
    tpu.vector_store %arg7[%c8_110, %c384_111], %87 {strides = array<i32>} : memref<108x768xf32, #tpu.memory_space<vmem>>, vector<4x384xf32>,
    %c0_112 = arith.constant 0 : index
    %c127_113 = arith.constant 127 : index
    %89 = vector.load %arg6[%c0_112, %c127_113] : memref<12x1280xf32, #tpu.memory_space<vmem>>, vector<4x384xf32>
    %c12_114 = arith.constant 12 : index
    %c0_115 = arith.constant 0 : index
    %90 = vector.load %arg7[%c12_114, %c0_115] : memref<108x768xf32, #tpu.memory_space<vmem>>, vector<4x384xf32>
    tpu.vector_store %arg7[%c12_114, %c0_115], %89 {strides = array<i32>} : memref<108x768xf32, #tpu.memory_space<vmem>>, vector<4x384xf32>,
    %c0_116 = arith.constant 0 : index
    %c767 = arith.constant 767 : index
    %91 = vector.load %arg6[%c0_116, %c767] : memref<12x1280xf32, #tpu.memory_space<vmem>>, vector<4x384xf32>
    %c12_117 = arith.constant 12 : index
    %c384_118 = arith.constant 384 : index
    %92 = vector.load %arg7[%c12_117, %c384_118] : memref<108x768xf32, #tpu.memory_space<vmem>>, vector<4x384xf32>
    tpu.vector_store %arg7[%c12_117, %c384_118], %91 {strides = array<i32>} : memref<108x768xf32, #tpu.memory_space<vmem>>, vector<4x384xf32>,
    %c0_119 = arith.constant 0 : index
    %c128_120 = arith.constant 128 : index
    %93 = vector.load %arg6[%c0_119, %c128_120] : memref<12x1280xf32, #tpu.memory_space<vmem>>, vector<4x384xf32>
    %c16_121 = arith.constant 16 : index
    %c0_122 = arith.constant 0 : index
    %94 = vector.load %arg7[%c16_121, %c0_122] : memref<108x768xf32, #tpu.memory_space<vmem>>, vector<4x384xf32>
    tpu.vector_store %arg7[%c16_121, %c0_122], %93 {strides = array<i32>} : memref<108x768xf32, #tpu.memory_space<vmem>>, vector<4x384xf32>,
    %c0_123 = arith.constant 0 : index
    %c768_124 = arith.constant 768 : index
    %95 = vector.load %arg6[%c0_123, %c768_124] : memref<12x1280xf32, #tpu.memory_space<vmem>>, vector<4x384xf32>
    %c16_125 = arith.constant 16 : index
    %c384_126 = arith.constant 384 : index
    %96 = vector.load %arg7[%c16_125, %c384_126] : memref<108x768xf32, #tpu.memory_space<vmem>>, vector<4x384xf32>
    tpu.vector_store %arg7[%c16_125, %c384_126], %95 {strides = array<i32>} : memref<108x768xf32, #tpu.memory_space<vmem>>, vector<4x384xf32>,
    %c0_127 = arith.constant 0 : index
    %c129_128 = arith.constant 129 : index
    %97 = vector.load %arg6[%c0_127, %c129_128] : memref<12x1280xf32, #tpu.memory_space<vmem>>, vector<4x384xf32>
    %c20_129 = arith.constant 20 : index
    %c0_130 = arith.constant 0 : index
    %98 = vector.load %arg7[%c20_129, %c0_130] : memref<108x768xf32, #tpu.memory_space<vmem>>, vector<4x384xf32>
    tpu.vector_store %arg7[%c20_129, %c0_130], %97 {strides = array<i32>} : memref<108x768xf32, #tpu.memory_space<vmem>>, vector<4x384xf32>,
    %c0_131 = arith.constant 0 : index
    %c769 = arith.constant 769 : index
    %99 = vector.load %arg6[%c0_131, %c769] : memref<12x1280xf32, #tpu.memory_space<vmem>>, vector<4x384xf32>
    %c20_132 = arith.constant 20 : index
    %c384_133 = arith.constant 384 : index
    %100 = vector.load %arg7[%c20_132, %c384_133] : memref<108x768xf32, #tpu.memory_space<vmem>>, vector<4x384xf32>
    tpu.vector_store %arg7[%c20_132, %c384_133], %99 {strides = array<i32>} : memref<108x768xf32, #tpu.memory_space<vmem>>, vector<4x384xf32>,
    %c0_134 = arith.constant 0 : index
    %c145_135 = arith.constant 145 : index
    %101 = vector.load %arg6[%c0_134, %c145_135] : memref<12x1280xf32, #tpu.memory_space<vmem>>, vector<4x384xf32>
    %c24_136 = arith.constant 24 : index
    %c0_137 = arith.constant 0 : index
    %102 = vector.load %arg7[%c24_136, %c0_137] : memref<108x768xf32, #tpu.memory_space<vmem>>, vector<4x384xf32>
    tpu.vector_store %arg7[%c24_136, %c0_137], %101 {strides = array<i32>} : memref<108x768xf32, #tpu.memory_space<vmem>>, vector<4x384xf32>,
    %c0_138 = arith.constant 0 : index
    %c785 = arith.constant 785 : index
    %103 = vector.load %arg6[%c0_138, %c785] : memref<12x1280xf32, #tpu.memory_space<vmem>>, vector<4x384xf32>
    %c24_139 = arith.constant 24 : index
    %c384_140 = arith.constant 384 : index
    %104 = vector.load %arg7[%c24_139, %c384_140] : memref<108x768xf32, #tpu.memory_space<vmem>>, vector<4x384xf32>
    tpu.vector_store %arg7[%c24_139, %c384_140], %103 {strides = array<i32>} : memref<108x768xf32, #tpu.memory_space<vmem>>, vector<4x384xf32>,
    %c0_141 = arith.constant 0 : index
    %c146_142 = arith.constant 146 : index
    %105 = vector.load %arg6[%c0_141, %c146_142] : memref<12x1280xf32, #tpu.memory_space<vmem>>, vector<4x384xf32>
    %c28_143 = arith.constant 28 : index
    %c0_144 = arith.constant 0 : index
    %106 = vector.load %arg7[%c28_143, %c0_144] : memref<108x768xf32, #tpu.memory_space<vmem>>, vector<4x384xf32>
    tpu.vector_store %arg7[%c28_143, %c0_144], %105 {strides = array<i32>} : memref<108x768xf32, #tpu.memory_space<vmem>>, vector<4x384xf32>,
    %c0_145 = arith.constant 0 : index
    %c786 = arith.constant 786 : index
    %107 = vector.load %arg6[%c0_145, %c786] : memref<12x1280xf32, #tpu.memory_space<vmem>>, vector<4x384xf32>
    %c28_146 = arith.constant 28 : index
    %c384_147 = arith.constant 384 : index
    %108 = vector.load %arg7[%c28_146, %c384_147] : memref<108x768xf32, #tpu.memory_space<vmem>>, vector<4x384xf32>
    tpu.vector_store %arg7[%c28_146, %c384_147], %107 {strides = array<i32>} : memref<108x768xf32, #tpu.memory_space<vmem>>, vector<4x384xf32>,
    %c0_148 = arith.constant 0 : index
    %c147_149 = arith.constant 147 : index
    %109 = vector.load %arg6[%c0_148, %c147_149] : memref<12x1280xf32, #tpu.memory_space<vmem>>, vector<4x384xf32>
    %c32_150 = arith.constant 32 : index
    %c0_151 = arith.constant 0 : index
    %110 = vector.load %arg7[%c32_150, %c0_151] : memref<108x768xf32, #tpu.memory_space<vmem>>, vector<4x384xf32>
    tpu.vector_store %arg7[%c32_150, %c0_151], %109 {strides = array<i32>} : memref<108x768xf32, #tpu.memory_space<vmem>>, vector<4x384xf32>,
    %c0_152 = arith.constant 0 : index
    %c787 = arith.constant 787 : index
    %111 = vector.load %arg6[%c0_152, %c787] : memref<12x1280xf32, #tpu.memory_space<vmem>>, vector<4x384xf32>
    %c32_153 = arith.constant 32 : index
    %c384_154 = arith.constant 384 : index
    %112 = vector.load %arg7[%c32_153, %c384_154] : memref<108x768xf32, #tpu.memory_space<vmem>>, vector<4x384xf32>
    tpu.vector_store %arg7[%c32_153, %c384_154], %111 {strides = array<i32>} : memref<108x768xf32, #tpu.memory_space<vmem>>, vector<4x384xf32>,
    %c8_155 = arith.constant 8 : index
    %c0_156 = arith.constant 0 : index
    %113 = vector.load %arg3[%c8_155, %c0_156] : memref<40x128xf32, #tpu.memory_space<vmem>>, vector<4x36xf32>
    %c0_157 = arith.constant 0 : index
    %c0_158 = arith.constant 0 : index
    %114 = vector.load %arg7[%c0_157, %c0_158] : memref<108x768xf32, #tpu.memory_space<vmem>>, vector<36x768xf32>
    %cst_159 = arith.constant dense<0.000000e+00> : vector<4x768xf32>
    %115 = tpu.matmul %113, %114, %cst_159 {dimension_numbers = #tpu.dot_dimension_numbers<[1], [0], [0], [1], [0, 0, 1, 1], [], []>} : vector<4x36xf32>, vector<36x768xf32>, vector<4x768xf32> -> vector<4x768xf32>
    %c8_160 = arith.constant 8 : index
    %c0_161 = arith.constant 0 : index
    %116 = vector.load %arg4[%c8_160, %c0_161] : memref<40x1xf32, #tpu.memory_space<vmem>>, vector<4x1xf32>
    %117 = vector.broadcast %116 : vector<4x1xf32> to vector<4x768xf32>
    %118 = arith.addf %115, %117 : vector<4x768xf32>
    %cst_162 = arith.constant 0.000000e+00 : f32
    %119 = vector.broadcast %cst_162 : f32 to vector<4x768xf32>
    %120 = arith.maximumf %118, %119 : vector<4x768xf32>
    %121 = vector.broadcast %0 : vector<1x768xf32> to vector<4x768xf32>
    %122 = arith.mulf %120, %121 : vector<4x768xf32>
    %123 = vector.extract_strided_slice %122 {offsets = [0, 0], sizes = [4, 384], strides = [1, 1]} : vector<4x768xf32> to vector<4x384xf32>
    %c4_163 = arith.constant 4 : index
    %c128_164 = arith.constant 128 : index
    %124 = vector.load %arg6[%c4_163, %c128_164] : memref<12x1280xf32, #tpu.memory_space<vmem>>, vector<4x384xf32>
    tpu.vector_store %arg6[%c4_163, %c128_164], %123 {strides = array<i32>} : memref<12x1280xf32, #tpu.memory_space<vmem>>, vector<4x384xf32>,
    %125 = vector.extract_strided_slice %122 {offsets = [0, 384], sizes = [4, 384], strides = [1, 1]} : vector<4x768xf32> to vector<4x384xf32>
    %c4_165 = arith.constant 4 : index
    %c768_166 = arith.constant 768 : index
    %126 = vector.load %arg6[%c4_165, %c768_166] : memref<12x1280xf32, #tpu.memory_space<vmem>>, vector<4x384xf32>
    tpu.vector_store %arg6[%c4_165, %c768_166], %125 {strides = array<i32>} : memref<12x1280xf32, #tpu.memory_space<vmem>>, vector<4x384xf32>,
    %c4_167 = arith.constant 4 : index
    %c109_168 = arith.constant 109 : index
    %127 = vector.load %arg6[%c4_167, %c109_168] : memref<12x1280xf32, #tpu.memory_space<vmem>>, vector<4x384xf32>
    %c36 = arith.constant 36 : index
    %c0_169 = arith.constant 0 : index
    %128 = vector.load %arg7[%c36, %c0_169] : memref<108x768xf32, #tpu.memory_space<vmem>>, vector<4x384xf32>
    tpu.vector_store %arg7[%c36, %c0_169], %127 {strides = array<i32>} : memref<108x768xf32, #tpu.memory_space<vmem>>, vector<4x384xf32>,
    %c4_170 = arith.constant 4 : index
    %c749_171 = arith.constant 749 : index
    %129 = vector.load %arg6[%c4_170, %c749_171] : memref<12x1280xf32, #tpu.memory_space<vmem>>, vector<4x384xf32>
    %c36_172 = arith.constant 36 : index
    %c384_173 = arith.constant 384 : index
    %130 = vector.load %arg7[%c36_172, %c384_173] : memref<108x768xf32, #tpu.memory_space<vmem>>, vector<4x384xf32>
    tpu.vector_store %arg7[%c36_172, %c384_173], %129 {strides = array<i32>} : memref<108x768xf32, #tpu.memory_space<vmem>>, vector<4x384xf32>,
    %c4_174 = arith.constant 4 : index
    %c110_175 = arith.constant 110 : index
    %131 = vector.load %arg6[%c4_174, %c110_175] : memref<12x1280xf32, #tpu.memory_space<vmem>>, vector<4x384xf32>
    %c40 = arith.constant 40 : index
    %c0_176 = arith.constant 0 : index
    %132 = vector.load %arg7[%c40, %c0_176] : memref<108x768xf32, #tpu.memory_space<vmem>>, vector<4x384xf32>
    tpu.vector_store %arg7[%c40, %c0_176], %131 {strides = array<i32>} : memref<108x768xf32, #tpu.memory_space<vmem>>, vector<4x384xf32>,
    %c4_177 = arith.constant 4 : index
    %c750_178 = arith.constant 750 : index
    %133 = vector.load %arg6[%c4_177, %c750_178] : memref<12x1280xf32, #tpu.memory_space<vmem>>, vector<4x384xf32>
    %c40_179 = arith.constant 40 : index
    %c384_180 = arith.constant 384 : index
    %134 = vector.load %arg7[%c40_179, %c384_180] : memref<108x768xf32, #tpu.memory_space<vmem>>, vector<4x384xf32>
    tpu.vector_store %arg7[%c40_179, %c384_180], %133 {strides = array<i32>} : memref<108x768xf32, #tpu.memory_space<vmem>>, vector<4x384xf32>,
    %c4_181 = arith.constant 4 : index
    %c111_182 = arith.constant 111 : index
    %135 = vector.load %arg6[%c4_181, %c111_182] : memref<12x1280xf32, #tpu.memory_space<vmem>>, vector<4x384xf32>
    %c44 = arith.constant 44 : index
    %c0_183 = arith.constant 0 : index
    %136 = vector.load %arg7[%c44, %c0_183] : memref<108x768xf32, #tpu.memory_space<vmem>>, vector<4x384xf32>
    tpu.vector_store %arg7[%c44, %c0_183], %135 {strides = array<i32>} : memref<108x768xf32, #tpu.memory_space<vmem>>, vector<4x384xf32>,
    %c4_184 = arith.constant 4 : index
    %c751_185 = arith.constant 751 : index
    %137 = vector.load %arg6[%c4_184, %c751_185] : memref<12x1280xf32, #tpu.memory_space<vmem>>, vector<4x384xf32>
    %c44_186 = arith.constant 44 : index
    %c384_187 = arith.constant 384 : index
    %138 = vector.load %arg7[%c44_186, %c384_187] : memref<108x768xf32, #tpu.memory_space<vmem>>, vector<4x384xf32>
    tpu.vector_store %arg7[%c44_186, %c384_187], %137 {strides = array<i32>} : memref<108x768xf32, #tpu.memory_space<vmem>>, vector<4x384xf32>,
    %c4_188 = arith.constant 4 : index
    %c127_189 = arith.constant 127 : index
    %139 = vector.load %arg6[%c4_188, %c127_189] : memref<12x1280xf32, #tpu.memory_space<vmem>>, vector<4x384xf32>
    %c48 = arith.constant 48 : index
    %c0_190 = arith.constant 0 : index
    %140 = vector.load %arg7[%c48, %c0_190] : memref<108x768xf32, #tpu.memory_space<vmem>>, vector<4x384xf32>
    tpu.vector_store %arg7[%c48, %c0_190], %139 {strides = array<i32>} : memref<108x768xf32, #tpu.memory_space<vmem>>, vector<4x384xf32>,
    %c4_191 = arith.constant 4 : index
    %c767_192 = arith.constant 767 : index
    %141 = vector.load %arg6[%c4_191, %c767_192] : memref<12x1280xf32, #tpu.memory_space<vmem>>, vector<4x384xf32>
    %c48_193 = arith.constant 48 : index
    %c384_194 = arith.constant 384 : index
    %142 = vector.load %arg7[%c48_193, %c384_194] : memref<108x768xf32, #tpu.memory_space<vmem>>, vector<4x384xf32>
    tpu.vector_store %arg7[%c48_193, %c384_194], %141 {strides = array<i32>} : memref<108x768xf32, #tpu.memory_space<vmem>>, vector<4x384xf32>,
    %c4_195 = arith.constant 4 : index
    %c128_196 = arith.constant 128 : index
    %143 = vector.load %arg6[%c4_195, %c128_196] : memref<12x1280xf32, #tpu.memory_space<vmem>>, vector<4x384xf32>
    %c52 = arith.constant 52 : index
    %c0_197 = arith.constant 0 : index
    %144 = vector.load %arg7[%c52, %c0_197] : memref<108x768xf32, #tpu.memory_space<vmem>>, vector<4x384xf32>
    tpu.vector_store %arg7[%c52, %c0_197], %143 {strides = array<i32>} : memref<108x768xf32, #tpu.memory_space<vmem>>, vector<4x384xf32>,
    %c4_198 = arith.constant 4 : index
    %c768_199 = arith.constant 768 : index
    %145 = vector.load %arg6[%c4_198, %c768_199] : memref<12x1280xf32, #tpu.memory_space<vmem>>, vector<4x384xf32>
    %c52_200 = arith.constant 52 : index
    %c384_201 = arith.constant 384 : index
    %146 = vector.load %arg7[%c52_200, %c384_201] : memref<108x768xf32, #tpu.memory_space<vmem>>, vector<4x384xf32>
    tpu.vector_store %arg7[%c52_200, %c384_201], %145 {strides = array<i32>} : memref<108x768xf32, #tpu.memory_space<vmem>>, vector<4x384xf32>,
    %c4_202 = arith.constant 4 : index
    %c129_203 = arith.constant 129 : index
    %147 = vector.load %arg6[%c4_202, %c129_203] : memref<12x1280xf32, #tpu.memory_space<vmem>>, vector<4x384xf32>
    %c56 = arith.constant 56 : index
    %c0_204 = arith.constant 0 : index
    %148 = vector.load %arg7[%c56, %c0_204] : memref<108x768xf32, #tpu.memory_space<vmem>>, vector<4x384xf32>
    tpu.vector_store %arg7[%c56, %c0_204], %147 {strides = array<i32>} : memref<108x768xf32, #tpu.memory_space<vmem>>, vector<4x384xf32>,
    %c4_205 = arith.constant 4 : index
    %c769_206 = arith.constant 769 : index
    %149 = vector.load %arg6[%c4_205, %c769_206] : memref<12x1280xf32, #tpu.memory_space<vmem>>, vector<4x384xf32>
    %c56_207 = arith.constant 56 : index
    %c384_208 = arith.constant 384 : index
    %150 = vector.load %arg7[%c56_207, %c384_208] : memref<108x768xf32, #tpu.memory_space<vmem>>, vector<4x384xf32>
    tpu.vector_store %arg7[%c56_207, %c384_208], %149 {strides = array<i32>} : memref<108x768xf32, #tpu.memory_space<vmem>>, vector<4x384xf32>,
    %c4_209 = arith.constant 4 : index
    %c145_210 = arith.constant 145 : index
    %151 = vector.load %arg6[%c4_209, %c145_210] : memref<12x1280xf32, #tpu.memory_space<vmem>>, vector<4x384xf32>
    %c60 = arith.constant 60 : index
    %c0_211 = arith.constant 0 : index
    %152 = vector.load %arg7[%c60, %c0_211] : memref<108x768xf32, #tpu.memory_space<vmem>>, vector<4x384xf32>
    tpu.vector_store %arg7[%c60, %c0_211], %151 {strides = array<i32>} : memref<108x768xf32, #tpu.memory_space<vmem>>, vector<4x384xf32>,
    %c4_212 = arith.constant 4 : index
    %c785_213 = arith.constant 785 : index
    %153 = vector.load %arg6[%c4_212, %c785_213] : memref<12x1280xf32, #tpu.memory_space<vmem>>, vector<4x384xf32>
    %c60_214 = arith.constant 60 : index
    %c384_215 = arith.constant 384 : index
    %154 = vector.load %arg7[%c60_214, %c384_215] : memref<108x768xf32, #tpu.memory_space<vmem>>, vector<4x384xf32>
    tpu.vector_store %arg7[%c60_214, %c384_215], %153 {strides = array<i32>} : memref<108x768xf32, #tpu.memory_space<vmem>>, vector<4x384xf32>,
    %c4_216 = arith.constant 4 : index
    %c146_217 = arith.constant 146 : index
    %155 = vector.load %arg6[%c4_216, %c146_217] : memref<12x1280xf32, #tpu.memory_space<vmem>>, vector<4x384xf32>
    %c64 = arith.constant 64 : index
    %c0_218 = arith.constant 0 : index
    %156 = vector.load %arg7[%c64, %c0_218] : memref<108x768xf32, #tpu.memory_space<vmem>>, vector<4x384xf32>
    tpu.vector_store %arg7[%c64, %c0_218], %155 {strides = array<i32>} : memref<108x768xf32, #tpu.memory_space<vmem>>, vector<4x384xf32>,
    %c4_219 = arith.constant 4 : index
    %c786_220 = arith.constant 786 : index
    %157 = vector.load %arg6[%c4_219, %c786_220] : memref<12x1280xf32, #tpu.memory_space<vmem>>, vector<4x384xf32>
    %c64_221 = arith.constant 64 : index
    %c384_222 = arith.constant 384 : index
    %158 = vector.load %arg7[%c64_221, %c384_222] : memref<108x768xf32, #tpu.memory_space<vmem>>, vector<4x384xf32>
    tpu.vector_store %arg7[%c64_221, %c384_222], %157 {strides = array<i32>} : memref<108x768xf32, #tpu.memory_space<vmem>>, vector<4x384xf32>,
    %c4_223 = arith.constant 4 : index
    %c147_224 = arith.constant 147 : index
    %159 = vector.load %arg6[%c4_223, %c147_224] : memref<12x1280xf32, #tpu.memory_space<vmem>>, vector<4x384xf32>
    %c68 = arith.constant 68 : index
    %c0_225 = arith.constant 0 : index
    %160 = vector.load %arg7[%c68, %c0_225] : memref<108x768xf32, #tpu.memory_space<vmem>>, vector<4x384xf32>
    tpu.vector_store %arg7[%c68, %c0_225], %159 {strides = array<i32>} : memref<108x768xf32, #tpu.memory_space<vmem>>, vector<4x384xf32>,
    %c4_226 = arith.constant 4 : index
    %c787_227 = arith.constant 787 : index
    %161 = vector.load %arg6[%c4_226, %c787_227] : memref<12x1280xf32, #tpu.memory_space<vmem>>, vector<4x384xf32>
    %c68_228 = arith.constant 68 : index
    %c384_229 = arith.constant 384 : index
    %162 = vector.load %arg7[%c68_228, %c384_229] : memref<108x768xf32, #tpu.memory_space<vmem>>, vector<4x384xf32>
    tpu.vector_store %arg7[%c68_228, %c384_229], %161 {strides = array<i32>} : memref<108x768xf32, #tpu.memory_space<vmem>>, vector<4x384xf32>,
    %c16_230 = arith.constant 16 : index
    %c0_231 = arith.constant 0 : index
    %163 = vector.load %arg3[%c16_230, %c0_231] : memref<40x128xf32, #tpu.memory_space<vmem>>, vector<4x72xf32>
    %c0_232 = arith.constant 0 : index
    %c0_233 = arith.constant 0 : index
    %164 = vector.load %arg7[%c0_232, %c0_233] : memref<108x768xf32, #tpu.memory_space<vmem>>, vector<72x768xf32>
    %cst_234 = arith.constant dense<0.000000e+00> : vector<4x768xf32>
    %165 = tpu.matmul %163, %164, %cst_234 {dimension_numbers = #tpu.dot_dimension_numbers<[1], [0], [0], [1], [0, 0, 1, 1], [], []>} : vector<4x72xf32>, vector<72x768xf32>, vector<4x768xf32> -> vector<4x768xf32>
    %c16_235 = arith.constant 16 : index
    %c0_236 = arith.constant 0 : index
    %166 = vector.load %arg4[%c16_235, %c0_236] : memref<40x1xf32, #tpu.memory_space<vmem>>, vector<4x1xf32>
    %167 = vector.broadcast %166 : vector<4x1xf32> to vector<4x768xf32>
    %168 = arith.addf %165, %167 : vector<4x768xf32>
    %cst_237 = arith.constant 0.000000e+00 : f32
    %169 = vector.broadcast %cst_237 : f32 to vector<4x768xf32>
    %170 = arith.maximumf %168, %169 : vector<4x768xf32>
    %171 = vector.broadcast %0 : vector<1x768xf32> to vector<4x768xf32>
    %172 = arith.mulf %170, %171 : vector<4x768xf32>
    %173 = vector.extract_strided_slice %172 {offsets = [0, 0], sizes = [4, 384], strides = [1, 1]} : vector<4x768xf32> to vector<4x384xf32>
    %c8_238 = arith.constant 8 : index
    %c128_239 = arith.constant 128 : index
    %174 = vector.load %arg6[%c8_238, %c128_239] : memref<12x1280xf32, #tpu.memory_space<vmem>>, vector<4x384xf32>
    tpu.vector_store %arg6[%c8_238, %c128_239], %173 {strides = array<i32>} : memref<12x1280xf32, #tpu.memory_space<vmem>>, vector<4x384xf32>,
    %175 = vector.extract_strided_slice %172 {offsets = [0, 384], sizes = [4, 384], strides = [1, 1]} : vector<4x768xf32> to vector<4x384xf32>
    %c8_240 = arith.constant 8 : index
    %c768_241 = arith.constant 768 : index
    %176 = vector.load %arg6[%c8_240, %c768_241] : memref<12x1280xf32, #tpu.memory_space<vmem>>, vector<4x384xf32>
    tpu.vector_store %arg6[%c8_240, %c768_241], %175 {strides = array<i32>} : memref<12x1280xf32, #tpu.memory_space<vmem>>, vector<4x384xf32>,
    %c8_242 = arith.constant 8 : index
    %c109_243 = arith.constant 109 : index
    %177 = vector.load %arg6[%c8_242, %c109_243] : memref<12x1280xf32, #tpu.memory_space<vmem>>, vector<4x384xf32>
    %c72 = arith.constant 72 : index
    %c0_244 = arith.constant 0 : index
    %178 = vector.load %arg7[%c72, %c0_244] : memref<108x768xf32, #tpu.memory_space<vmem>>, vector<4x384xf32>
    tpu.vector_store %arg7[%c72, %c0_244], %177 {strides = array<i32>} : memref<108x768xf32, #tpu.memory_space<vmem>>, vector<4x384xf32>,
    %c8_245 = arith.constant 8 : index
    %c749_246 = arith.constant 749 : index
    %179 = vector.load %arg6[%c8_245, %c749_246] : memref<12x1280xf32, #tpu.memory_space<vmem>>, vector<4x384xf32>
    %c72_247 = arith.constant 72 : index
    %c384_248 = arith.constant 384 : index
    %180 = vector.load %arg7[%c72_247, %c384_248] : memref<108x768xf32, #tpu.memory_space<vmem>>, vector<4x384xf32>
    tpu.vector_store %arg7[%c72_247, %c384_248], %179 {strides = array<i32>} : memref<108x768xf32, #tpu.memory_space<vmem>>, vector<4x384xf32>,
    %c8_249 = arith.constant 8 : index
    %c110_250 = arith.constant 110 : index
    %181 = vector.load %arg6[%c8_249, %c110_250] : memref<12x1280xf32, #tpu.memory_space<vmem>>, vector<4x384xf32>
    %c76 = arith.constant 76 : index
    %c0_251 = arith.constant 0 : index
    %182 = vector.load %arg7[%c76, %c0_251] : memref<108x768xf32, #tpu.memory_space<vmem>>, vector<4x384xf32>
    tpu.vector_store %arg7[%c76, %c0_251], %181 {strides = array<i32>} : memref<108x768xf32, #tpu.memory_space<vmem>>, vector<4x384xf32>,
    %c8_252 = arith.constant 8 : index
    %c750_253 = arith.constant 750 : index
    %183 = vector.load %arg6[%c8_252, %c750_253] : memref<12x1280xf32, #tpu.memory_space<vmem>>, vector<4x384xf32>
    %c76_254 = arith.constant 76 : index
    %c384_255 = arith.constant 384 : index
    %184 = vector.load %arg7[%c76_254, %c384_255] : memref<108x768xf32, #tpu.memory_space<vmem>>, vector<4x384xf32>
    tpu.vector_store %arg7[%c76_254, %c384_255], %183 {strides = array<i32>} : memref<108x768xf32, #tpu.memory_space<vmem>>, vector<4x384xf32>,
    %c8_256 = arith.constant 8 : index
    %c111_257 = arith.constant 111 : index
    %185 = vector.load %arg6[%c8_256, %c111_257] : memref<12x1280xf32, #tpu.memory_space<vmem>>, vector<4x384xf32>
    %c80 = arith.constant 80 : index
    %c0_258 = arith.constant 0 : index
    %186 = vector.load %arg7[%c80, %c0_258] : memref<108x768xf32, #tpu.memory_space<vmem>>, vector<4x384xf32>
    tpu.vector_store %arg7[%c80, %c0_258], %185 {strides = array<i32>} : memref<108x768xf32, #tpu.memory_space<vmem>>, vector<4x384xf32>,
    %c8_259 = arith.constant 8 : index
    %c751_260 = arith.constant 751 : index
    %187 = vector.load %arg6[%c8_259, %c751_260] : memref<12x1280xf32, #tpu.memory_space<vmem>>, vector<4x384xf32>
    %c80_261 = arith.constant 80 : index
    %c384_262 = arith.constant 384 : index
    %188 = vector.load %arg7[%c80_261, %c384_262] : memref<108x768xf32, #tpu.memory_space<vmem>>, vector<4x384xf32>
    tpu.vector_store %arg7[%c80_261, %c384_262], %187 {strides = array<i32>} : memref<108x768xf32, #tpu.memory_space<vmem>>, vector<4x384xf32>,
    %c8_263 = arith.constant 8 : index
    %c127_264 = arith.constant 127 : index
    %189 = vector.load %arg6[%c8_263, %c127_264] : memref<12x1280xf32, #tpu.memory_space<vmem>>, vector<4x384xf32>
    %c84 = arith.constant 84 : index
    %c0_265 = arith.constant 0 : index
    %190 = vector.load %arg7[%c84, %c0_265] : memref<108x768xf32, #tpu.memory_space<vmem>>, vector<4x384xf32>
    tpu.vector_store %arg7[%c84, %c0_265], %189 {strides = array<i32>} : memref<108x768xf32, #tpu.memory_space<vmem>>, vector<4x384xf32>,
    %c8_266 = arith.constant 8 : index
    %c767_267 = arith.constant 767 : index
    %191 = vector.load %arg6[%c8_266, %c767_267] : memref<12x1280xf32, #tpu.memory_space<vmem>>, vector<4x384xf32>
    %c84_268 = arith.constant 84 : index
    %c384_269 = arith.constant 384 : index
    %192 = vector.load %arg7[%c84_268, %c384_269] : memref<108x768xf32, #tpu.memory_space<vmem>>, vector<4x384xf32>
    tpu.vector_store %arg7[%c84_268, %c384_269], %191 {strides = array<i32>} : memref<108x768xf32, #tpu.memory_space<vmem>>, vector<4x384xf32>,
    %c8_270 = arith.constant 8 : index
    %c128_271 = arith.constant 128 : index
    %193 = vector.load %arg6[%c8_270, %c128_271] : memref<12x1280xf32, #tpu.memory_space<vmem>>, vector<4x384xf32>
    %c88 = arith.constant 88 : index
    %c0_272 = arith.constant 0 : index
    %194 = vector.load %arg7[%c88, %c0_272] : memref<108x768xf32, #tpu.memory_space<vmem>>, vector<4x384xf32>
    tpu.vector_store %arg7[%c88, %c0_272], %193 {strides = array<i32>} : memref<108x768xf32, #tpu.memory_space<vmem>>, vector<4x384xf32>,
    %c8_273 = arith.constant 8 : index
    %c768_274 = arith.constant 768 : index
    %195 = vector.load %arg6[%c8_273, %c768_274] : memref<12x1280xf32, #tpu.memory_space<vmem>>, vector<4x384xf32>
    %c88_275 = arith.constant 88 : index
    %c384_276 = arith.constant 384 : index
    %196 = vector.load %arg7[%c88_275, %c384_276] : memref<108x768xf32, #tpu.memory_space<vmem>>, vector<4x384xf32>
    tpu.vector_store %arg7[%c88_275, %c384_276], %195 {strides = array<i32>} : memref<108x768xf32, #tpu.memory_space<vmem>>, vector<4x384xf32>,
    %c8_277 = arith.constant 8 : index
    %c129_278 = arith.constant 129 : index
    %197 = vector.load %arg6[%c8_277, %c129_278] : memref<12x1280xf32, #tpu.memory_space<vmem>>, vector<4x384xf32>
    %c92 = arith.constant 92 : index
    %c0_279 = arith.constant 0 : index
    %198 = vector.load %arg7[%c92, %c0_279] : memref<108x768xf32, #tpu.memory_space<vmem>>, vector<4x384xf32>
    tpu.vector_store %arg7[%c92, %c0_279], %197 {strides = array<i32>} : memref<108x768xf32, #tpu.memory_space<vmem>>, vector<4x384xf32>,
    %c8_280 = arith.constant 8 : index
    %c769_281 = arith.constant 769 : index
    %199 = vector.load %arg6[%c8_280, %c769_281] : memref<12x1280xf32, #tpu.memory_space<vmem>>, vector<4x384xf32>
    %c92_282 = arith.constant 92 : index
    %c384_283 = arith.constant 384 : index
    %200 = vector.load %arg7[%c92_282, %c384_283] : memref<108x768xf32, #tpu.memory_space<vmem>>, vector<4x384xf32>
    tpu.vector_store %arg7[%c92_282, %c384_283], %199 {strides = array<i32>} : memref<108x768xf32, #tpu.memory_space<vmem>>, vector<4x384xf32>,
    %c8_284 = arith.constant 8 : index
    %c145_285 = arith.constant 145 : index
    %201 = vector.load %arg6[%c8_284, %c145_285] : memref<12x1280xf32, #tpu.memory_space<vmem>>, vector<4x384xf32>
    %c96 = arith.constant 96 : index
    %c0_286 = arith.constant 0 : index
    %202 = vector.load %arg7[%c96, %c0_286] : memref<108x768xf32, #tpu.memory_space<vmem>>, vector<4x384xf32>
    tpu.vector_store %arg7[%c96, %c0_286], %201 {strides = array<i32>} : memref<108x768xf32, #tpu.memory_space<vmem>>, vector<4x384xf32>,
    %c8_287 = arith.constant 8 : index
    %c785_288 = arith.constant 785 : index
    %203 = vector.load %arg6[%c8_287, %c785_288] : memref<12x1280xf32, #tpu.memory_space<vmem>>, vector<4x384xf32>
    %c96_289 = arith.constant 96 : index
    %c384_290 = arith.constant 384 : index
    %204 = vector.load %arg7[%c96_289, %c384_290] : memref<108x768xf32, #tpu.memory_space<vmem>>, vector<4x384xf32>
    tpu.vector_store %arg7[%c96_289, %c384_290], %203 {strides = array<i32>} : memref<108x768xf32, #tpu.memory_space<vmem>>, vector<4x384xf32>,
    %c8_291 = arith.constant 8 : index
    %c146_292 = arith.constant 146 : index
    %205 = vector.load %arg6[%c8_291, %c146_292] : memref<12x1280xf32, #tpu.memory_space<vmem>>, vector<4x384xf32>
    %c100 = arith.constant 100 : index
    %c0_293 = arith.constant 0 : index
    %206 = vector.load %arg7[%c100, %c0_293] : memref<108x768xf32, #tpu.memory_space<vmem>>, vector<4x384xf32>
    tpu.vector_store %arg7[%c100, %c0_293], %205 {strides = array<i32>} : memref<108x768xf32, #tpu.memory_space<vmem>>, vector<4x384xf32>,
    %c8_294 = arith.constant 8 : index
    %c786_295 = arith.constant 786 : index
    %207 = vector.load %arg6[%c8_294, %c786_295] : memref<12x1280xf32, #tpu.memory_space<vmem>>, vector<4x384xf32>
    %c100_296 = arith.constant 100 : index
    %c384_297 = arith.constant 384 : index
    %208 = vector.load %arg7[%c100_296, %c384_297] : memref<108x768xf32, #tpu.memory_space<vmem>>, vector<4x384xf32>
    tpu.vector_store %arg7[%c100_296, %c384_297], %207 {strides = array<i32>} : memref<108x768xf32, #tpu.memory_space<vmem>>, vector<4x384xf32>,
    %c8_298 = arith.constant 8 : index
    %c147_299 = arith.constant 147 : index
    %209 = vector.load %arg6[%c8_298, %c147_299] : memref<12x1280xf32, #tpu.memory_space<vmem>>, vector<4x384xf32>
    %c104 = arith.constant 104 : index
    %c0_300 = arith.constant 0 : index
    %210 = vector.load %arg7[%c104, %c0_300] : memref<108x768xf32, #tpu.memory_space<vmem>>, vector<4x384xf32>
    tpu.vector_store %arg7[%c104, %c0_300], %209 {strides = array<i32>} : memref<108x768xf32, #tpu.memory_space<vmem>>, vector<4x384xf32>,
    %c8_301 = arith.constant 8 : index
    %c787_302 = arith.constant 787 : index
    %211 = vector.load %arg6[%c8_301, %c787_302] : memref<12x1280xf32, #tpu.memory_space<vmem>>, vector<4x384xf32>
    %c104_303 = arith.constant 104 : index
    %c384_304 = arith.constant 384 : index
    %212 = vector.load %arg7[%c104_303, %c384_304] : memref<108x768xf32, #tpu.memory_space<vmem>>, vector<4x384xf32>
    tpu.vector_store %arg7[%c104_303, %c384_304], %211 {strides = array<i32>} : memref<108x768xf32, #tpu.memory_space<vmem>>, vector<4x384xf32>,
    %c24_305 = arith.constant 24 : index
    %c0_306 = arith.constant 0 : index
    %213 = vector.load %arg3[%c24_305, %c0_306] : memref<40x128xf32, #tpu.memory_space<vmem>>, vector<16x108xf32>
    %c0_307 = arith.constant 0 : index
    %c0_308 = arith.constant 0 : index
    %214 = vector.load %arg7[%c0_307, %c0_308] : memref<108x768xf32, #tpu.memory_space<vmem>>, vector<108x768xf32>
    %cst_309 = arith.constant dense<0.000000e+00> : vector<16x768xf32>
    %215 = tpu.matmul %213, %214, %cst_309 {dimension_numbers = #tpu.dot_dimension_numbers<[1], [0], [0], [1], [0, 0, 1, 1], [], []>} : vector<16x108xf32>, vector<108x768xf32>, vector<16x768xf32> -> vector<16x768xf32>
    %c24_310 = arith.constant 24 : index
    %c0_311 = arith.constant 0 : index
    %216 = vector.load %arg4[%c24_310, %c0_311] : memref<40x1xf32, #tpu.memory_space<vmem>>, vector<16x1xf32>
    %217 = vector.broadcast %216 : vector<16x1xf32> to vector<16x768xf32>
    %218 = arith.addf %215, %217 : vector<16x768xf32>
    %cst_312 = arith.constant 0.000000e+00 : f32
    %219 = vector.broadcast %cst_312 : f32 to vector<16x768xf32>
    %220 = arith.maximumf %218, %219 : vector<16x768xf32>
    %221 = vector.extract_strided_slice %220 {offsets = [0, 0], sizes = [16, 384], strides = [1, 1]} : vector<16x768xf32> to vector<16x384xf32>
    %c0_313 = arith.constant 0 : index
    %c0_314 = arith.constant 0 : index
    %c0_315 = arith.constant 0 : index
    %222 = vector.load %arg5[%c0_313, %c0_314, %c0_315] : memref<2x16x384xf32, #tpu.memory_space<vmem>>, vector<1x16x384xf32>
    %223 = vector.shape_cast %222 : vector<1x16x384xf32> to vector<16x384xf32>
    %224 = vector.shape_cast %221 : vector<16x384xf32> to vector<1x16x384xf32>
    tpu.vector_store %arg5[%c0_313, %c0_314, %c0_315], %224 {strides = array<i32>} : memref<2x16x384xf32, #tpu.memory_space<vmem>>, vector<1x16x384xf32>,
    %225 = vector.extract_strided_slice %220 {offsets = [0, 384], sizes = [16, 384], strides = [1, 1]} : vector<16x768xf32> to vector<16x384xf32>
    %c1_316 = arith.constant 1 : index
    %c0_317 = arith.constant 0 : index
    %c0_318 = arith.constant 0 : index
    %226 = vector.load %arg5[%c1_316, %c0_317, %c0_318] : memref<2x16x384xf32, #tpu.memory_space<vmem>>, vector<1x16x384xf32>
    %227 = vector.shape_cast %226 : vector<1x16x384xf32> to vector<16x384xf32>
    %228 = vector.shape_cast %225 : vector<16x384xf32> to vector<1x16x384xf32>
    tpu.vector_store %arg5[%c1_316, %c0_317, %c0_318], %228 {strides = array<i32>} : memref<2x16x384xf32, #tpu.memory_space<vmem>>, vector<1x16x384xf32>,
    return
  }
  func.func @transform_0(%arg0: i32) -> (i32, i32, i32) {
    %c0_i32 = arith.constant 0 : i32
    %c0_i32_0 = arith.constant 0 : i32
    %c0_i32_1 = arith.constant 0 : i32
    return %arg0, %c0_i32, %c0_i32_0 : i32, i32, i32
  }
  func.func @transform_1(%arg0: i32) -> (i32, i32) {
    %c0_i32 = arith.constant 0 : i32
    %c0_i32_0 = arith.constant 0 : i32
    %c0_i32_1 = arith.constant 0 : i32
    return %c0_i32, %c0_i32_0 : i32, i32
  }
  func.func @transform_2(%arg0: i32) -> (i32, i32) {
    %c0_i32 = arith.constant 0 : i32
    %c0_i32_0 = arith.constant 0 : i32
    %c0_i32_1 = arith.constant 0 : i32
    return %c0_i32, %c0_i32_0 : i32, i32
  }
  func.func @transform_3(%arg0: i32) -> (i32, i32) {
    %c0_i32 = arith.constant 0 : i32
    %c0_i32_0 = arith.constant 0 : i32
    %c0_i32_1 = arith.constant 0 : i32
    return %c0_i32, %c0_i32_0 : i32, i32
  }
  func.func @transform_4(%arg0: i32) -> (i32, i32, i32) {
    %c0_i32 = arith.constant 0 : i32
    %c0_i32_0 = arith.constant 0 : i32
    %c0_i32_1 = arith.constant 0 : i32
    return %arg0, %c0_i32, %c0_i32_0 : i32, i32, i32
  }
}

</mosaic_0001>

<llo_original>
// kernel: dense_block_forward.1
$region0: #{dense_block_forward.1}
  #allocation0 [shape = 'u32[]', space=smem, size = 0x4, offset = 0x4, fixed_abs, tag = 'smem constant byte address 0x4 - core index']
  #allocation1 [shape = 'u32[144,128]{1,0:T(1,128)}', space=vmem, size = 0x12000, scoped, tag = 'internal scratch']
  #allocation2 [shape = 'f32[12,1280]{1,0:T(8,128)}', space=vmem, size = 0x14000, scoped, tag = 'scratch operand']
  #allocation3 [shape = 'f32[108,768]{1,0:T(8,128)}', space=vmem, size = 0x54000, scoped, tag = 'scratch operand']
  %s0 = inlined_call_operand.vmem [shape: f32[4,4,640], index: 0, kind: input, shape index: {}]
  %s1 = inlined_call_operand.vmem [shape: f32[1,768], index: 1, kind: input, shape index: {}]
  %s2 = inlined_call_operand.vmem [shape: f32[40,128], index: 2, kind: input, shape index: {}]
  %s3 = inlined_call_operand.vmem [shape: f32[40,1], index: 3, kind: input, shape index: {}]
  %s4 = inlined_call_operand.vmem [shape: f32[4,16,384], index: 4, kind: output, shape index: {}]
  %s5 = sld [smem:[#allocation0]]
  $region49: #{dense_block_forward.1} parent=0
    _
  %s7 = ssub.s32 1, %s5
  %s8 = scalar_select 0, %s7, %s5
  loop: start=0, step=1, limit=4
  $region2: #{dense_block_forward.1} parent=0 // loop_pre_header
    _
  $region3: #{dense_block_forward.1} parent=0 // loop_header
    %s10 = sphi 0, %s14
    %p11 = scmp.ge.s32.totalorder %s10, 4
    %s20 = sphi 0, %s22
    %s23 = sphi 0, %s20
    %s24 = sphi 0, %s23
    %s40 = sphi 0, %s24
    %s44 = sphi 0, %s44
    %s46 = sphi 0, %s44
    %s47 = sphi 0, %s46
    %s61 = sphi 0, %s47
    %s65 = sphi 0, %s65
    %s67 = sphi 0, %s65
    %s68 = sphi 0, %s67
    %s82 = sphi 0, %s68
    %s86 = sphi 0, %s86
    %s88 = sphi 0, %s86
    %s89 = sphi 0, %s88
    %s103 = sphi 0, %s89
    %s109 = sphi 0, %s111
    %s112 = sphi 0, %s109
    %s113 = sphi 0, %s112
    %s129 = sphi 0, %s113
  $region4: #{dense_block_forward.1} parent=0 // loop_header_branch
    %13 = sbr.rel (%p11) target = $region8
  $region5: #{dense_block_forward.1} parent=0 // loop_body
    %s15 = ssub.s32 %s10, 1
    %s16 = ssub.s32 %s10, 2
    %s17 = sadd.s32 %s10, 1
    %s18 = ssub.s32 %s10, %s17
    %p19 = scmp.eq.s32.totalorder %s18, 0
    %s21 = sadd.s32 %s20, 1
    %s22 = scalar_select %p19, %s20, %s21
    %p25 = pneg %p19
    %p26 = scmp.eq.s32.totalorder %s10, 1
    %p27 = por %p25, %p26
    %p28 = scmp.ne.s32.totalorder %s20, %s23
    %p29 = scmp.eq.s32.totalorder %s10, 0
    %p30 = por %p28, %p29
    %p31 = scmp.ne.s32.totalorder %s20, %s23
    %p32 = scmp.eq.s32.totalorder %s15, 1
    %p33 = por %p31, %p32
    %p34 = scmp.ne.s32.totalorder %s23, %s24
    %p35 = scmp.eq.s32.totalorder %s15, 0
    %p36 = por %p34, %p35
    %p37 = scmp.ne.s32.totalorder %s23, %s24
    %p38 = scmp.eq.s32.totalorder %s16, 1
    %p39 = por %p37, %p38
    %p41 = scmp.ne.s32.totalorder %s24, %s40
    %p42 = scmp.eq.s32.totalorder %s16, 0
    %p43 = por %p41, %p42
    %s45 = sadd.s32 %s44, 1
    %p48 = scmp.eq.s32.totalorder %s10, 1
    %p49 = scmp.ne.s32.totalorder %s44, %s46
    %p50 = scmp.eq.s32.totalorder %s10, 0
    %p51 = por %p49, %p50
    %p52 = scmp.ne.s32.totalorder %s44, %s46
    %p53 = scmp.eq.s32.totalorder %s15, 1
    %p54 = por %p52, %p53
    %p55 = scmp.ne.s32.totalorder %s46, %s47
    %p56 = scmp.eq.s32.totalorder %s15, 0
    %p57 = por %p55, %p56
    %p58 = scmp.ne.s32.totalorder %s46, %s47
    %p59 = scmp.eq.s32.totalorder %s16, 1
    %p60 = por %p58, %p59
    %p62 = scmp.ne.s32.totalorder %s47, %s61
    %p63 = scmp.eq.s32.totalorder %s16, 0
    %p64 = por %p62, %p63
    %s66 = sadd.s32 %s65, 1
    %p69 = scmp.eq.s32.totalorder %s10, 1
    %p70 = scmp.ne.s32.totalorder %s65, %s67
    %p71 = scmp.eq.s32.totalorder %s10, 0
    %p72 = por %p70, %p71
    %p73 = scmp.ne.s32.totalorder %s65, %s67
    %p74 = scmp.eq.s32.totalorder %s15, 1
    %p75 = por %p73, %p74
    %p76 = scmp.ne.s32.totalorder %s67, %s68
    %p77 = scmp.eq.s32.totalorder %s15, 0
    %p78 = por %p76, %p77
    %p79 = scmp.ne.s32.totalorder %s67, %s68
    %p80 = scmp.eq.s32.totalorder %s16, 1
    %p81 = por %p79, %p80
    %p83 = scmp.ne.s32.totalorder %s68, %s82
    %p84 = scmp.eq.s32.totalorder %s16, 0
    %p85 = por %p83, %p84
    %s87 = sadd.s32 %s86, 1
    %p90 = scmp.eq.s32.totalorder %s10, 1
    %p91 = scmp.ne.s32.totalorder %s86, %s88
    %p92 = scmp.eq.s32.totalorder %s10, 0
    %p93 = por %p91, %p92
    %p94 = scmp.ne.s32.totalorder %s86, %s88
    %p95 = scmp.eq.s32.totalorder %s15, 1
    %p96 = por %p94, %p95
    %p97 = scmp.ne.s32.totalorder %s88, %s89
    %p98 = scmp.eq.s32.totalorder %s15, 0
    %p99 = por %p97, %p98
    %p100 = scmp.ne.s32.totalorder %s88, %s89
    %p101 = scmp.eq.s32.totalorder %s16, 1
    %p102 = por %p100, %p101
    %p104 = scmp.ne.s32.totalorder %s89, %s103
    %p105 = scmp.eq.s32.totalorder %s16, 0
    %p106 = por %p104, %p105
    %s107 = ssub.s32 %s10, %s17
    %p108 = scmp.eq.s32.totalorder %s107, 0
    %s110 = sadd.s32 %s109, 1
    %s111 = scalar_select %p108, %s109, %s110
    %p114 = pneg %p108
    %p115 = scmp.eq.s32.totalorder %s10, 1
    %p116 = por %p114, %p115
    %p117 = scmp.ne.s32.totalorder %s109, %s112
    %p118 = scmp.eq.s32.totalorder %s10, 0
    %p119 = por %p117, %p118
    %p120 = scmp.ne.s32.totalorder %s109, %s112
    %p121 = scmp.eq.s32.totalorder %s15, 1
    %p122 = por %p120, %p121
    %p123 = scmp.ne.s32.totalorder %s112, %s113
    %p124 = scmp.eq.s32.totalorder %s15, 0
    %p125 = por %p123, %p124
    %p126 = scmp.ne.s32.totalorder %s112, %s113
    %p127 = scmp.eq.s32.totalorder %s16, 1
    %p128 = por %p126, %p127
    %p130 = scmp.ne.s32.totalorder %s113, %s129
    %p131 = scmp.eq.s32.totalorder %s16, 0
    %p132 = por %p130, %p131
    %p133 = scmp.le.s32.totalorder 1, %s10
    %p134 = scmp.lt.s32.totalorder %s10, 3
    %p135 = pnand %p133, %p134
    %p136 = pneg %p135
    // Predicated region
    $region9: #{dense_block_forward.1} parent=5 // pred_check
      _
    $region10: #{dense_block_forward.1} parent=5 // pred_check_branch
      %138 = sbr.rel (%p135) target = $region12
    $region11: #{dense_block_forward.1} parent=5 // pred_region
      %s139 = ssub.s32 %s10, 1
      // Predicated region
      $region13: #{dense_block_forward.1} parent=11 // pred_check
        %p140 = pneg %p57
      $region14: #{dense_block_forward.1} parent=11 // pred_check_branch
        %142 = sbr.rel (%p140) target = $region16
      $region15: #{dense_block_forward.1} parent=11 // pred_region
        _
      $region16: #{dense_block_forward.1} parent=11 // pred_fallthru
        _
      // Predicated region
      $region17: #{dense_block_forward.1} parent=11 // pred_check
        %p143 = pneg %p78
      $region18: #{dense_block_forward.1} parent=11 // pred_check_branch
        %145 = sbr.rel (%p143) target = $region20
      $region19: #{dense_block_forward.1} parent=11 // pred_region
        _
      $region20: #{dense_block_forward.1} parent=11 // pred_fallthru
        _
      // Predicated region
      $region21: #{dense_block_forward.1} parent=11 // pred_check
        %p146 = pneg %p99
      $region22: #{dense_block_forward.1} parent=11 // pred_check_branch
        %148 = sbr.rel (%p146) target = $region24
      $region23: #{dense_block_forward.1} parent=11 // pred_region
        _
      $region24: #{dense_block_forward.1} parent=11 // pred_fallthru
        _
    $region12: #{dense_block_forward.1} parent=5 // pred_fallthru
      _
    %p149 = scmp.lt.s32.totalorder %s10, 2
    // Predicated region
    $region25: #{dense_block_forward.1} parent=5 // pred_check
      %p150 = pneg %p149
    $region26: #{dense_block_forward.1} parent=5 // pred_check_branch
      %152 = sbr.rel (%p150) target = $region28
    $region27: #{dense_block_forward.1} parent=5 // pred_region
      // Predicated region
      $region29: #{dense_block_forward.1} parent=27 // pred_check
        %p153 = pneg %p30
      $region30: #{dense_block_forward.1} parent=27 // pred_check_branch
        %155 = sbr.rel (%p153) target = $region32
      $region31: #{dense_block_forward.1} parent=27 // pred_region
        %s156 = smul.u32 2, %s10
        %p157 = scmp.lt.s32.totalorder %s156, 3
        %s158 = scalar_select %p157, %s156, 3
        %s159 = smul.addr %s158, 5
        %s160 = smul.addr %s159, 4
        %s161 = scalar_lea.vmem %s0, %s160
        %s162 = smul.u32 2, %s10
      $region32: #{dense_block_forward.1} parent=27 // pred_fallthru
        _
    $region28: #{dense_block_forward.1} parent=5 // pred_fallthru
      _
    %p163 = scmp.le.s32.totalorder 1, %s10
    %p164 = scmp.lt.s32.totalorder %s10, 3
    %p165 = pnand %p163, %p164
    %p166 = pneg %p165
    // Predicated region
    $region33: #{dense_block_forward.1} parent=5 // pred_check
      _
    $region34: #{dense_block_forward.1} parent=5 // pred_check_branch
      %168 = sbr.rel (%p165) target = $region36
    $region35: #{dense_block_forward.1} parent=5 // pred_region
      %s169 = ssub.s32 %s10, 1
      %s170 = smul.u32 2, %s15
      %p171 = scmp.lt.s32.totalorder %s170, 3
      %s172 = scalar_select %p171, %s170, 3
      %s173 = smul.addr %s172, 5
      %s174 = smul.addr %s173, 4
      %s175 = scalar_lea.vmem %s0, %s174
      %p176 = pneg %p36
      %p177 = pneg %p33
      %p178 = pneg %p57
      %p179 = pneg %p54
      %p180 = pneg %p78
      %p181 = pneg %p75
      %p182 = pneg %p99
      %p183 = pneg %p96
      %p184 = pneg %p125
      %p185 = pneg %p122
      %s186 = smul.u32 2, %s15
      %p187 = scmp.lt.s32.totalorder %s186, 3
      %s188 = scalar_select %p187, %s186, 3
      %s189 = smul.addr %s188, 6
      %s190 = smul.addr %s189, 8
      %s191 = scalar_lea.vmem %s4, %s190
      %s192 = smul.u32 2, %s15
      %p193 = scmp.lt.s32.totalorder %s192, 3
      %s194 = scalar_select %p193, %s192, 3
      %s195 = smul.addr %s194, 5
      %s196 = smul.addr %s195, 4
      %s197 = scalar_lea.vmem %s0, %s196
      %s198 = smul.u32 2, %s15
      %s199 = smul.u32 2, %s15
      %p200 = scmp.lt.s32.totalorder %s199, 3
      %s201 = scalar_select %p200, %s199, 3
      %s202 = smul.addr %s201, 6
      %s203 = smul.addr %s202, 8
      %s204 = scalar_lea.vmem %s4, %s203
      %s205 = smul.u32 2, %s15
      %v206 = vld [vmem:[%s1] sm:$0x3f]
      %207 = vst [vmem:[#allocation2] sm:$0xff] 0.0
      %208 = vst [vmem:[#allocation2 + $0x50] sm:$0xf] 0.0
      %vm209 = vcmask 1047808
      %210 = vst.msk [vmem:[#allocation2 + $0x18] sm:$0xff] %vm209, 0.0
      %211 = vst [vmem:[#allocation2 + $0x20] sm:$0xff] 0.0
      %vm212 = vcmask 1043712
      %213 = vst.msk [vmem:[#allocation2 + $0x68] sm:$0xf] %vm212, 0.0
      %214 = vst [vmem:[#allocation2 + $0x70] sm:$0xf] 0.0
      %215 = vst [vmem:[#allocation2 + $0x28] sm:$0xff] 0.0
      %216 = vst [vmem:[#allocation2 + $0x78] sm:$0xf] 0.0
      %217 = vst.msk [vmem:[#allocation2 + $0x40] sm:$0xff] %vm209, 0.0
      %218 = vst [vmem:[#allocation2 + $0x48] sm:$0xff] 0.0
      %219 = vst.msk [vmem:[#allocation2 + $0x90] sm:$0xf] %vm212, 0.0
      %220 = vst [vmem:[#allocation2 + $0x98] sm:$0xf] 0.0
      %v221 = vld [vmem:[%s197] sm:$0xff]
      %v222 = vld [vmem:[%s197 + $0x8] sm:$0xff]
      %v225 = vcombine.high %v221, %v221
      %v226 = vcombine.high %v222, %v222
      %227 = vrot.lane.b32.xlu0 %v221, 19
      %v228 = vpop.permute.xlu0 %227
      %229 = vrot.lane.b32.xlu0 %v225, 19
      %v230 = vpop.permute.xlu0 %229
      %231 = vrot.lane.b32.xlu0 %v222, 19
      %v232 = vpop.permute.xlu0 %231
      %233 = vrot.lane.b32.xlu0 %v226, 19
      %v234 = vpop.permute.xlu0 %233
      %vm235 = vcmask 154624
      %v236 = vsel %vm235, %v228, %v230
      %v237 = vsel %vm235, %v230, %v232
      %v238 = vsel %vm235, %v232, %v234
      %242 = vst [vmem:[#allocation3] sm:$0xf] %v236
      %243 = vst [vmem:[#allocation3 + $0x8] sm:$0xf] %v237
      %244 = vst [vmem:[#allocation3 + $0x10] sm:$0xf] %v238
      %s245 = scalar_lea.vmem %s197, 20
      %v246 = vld [vmem:[%s245] sm:$0xff]
      %v247 = vld [vmem:[%s245 + $0x8] sm:$0xff]
      %v250 = vcombine.high %v246, %v246
      %v251 = vcombine.high %v247, %v247
      %252 = vrot.lane.b32.xlu0 %v246, 19
      %v253 = vpop.permute.xlu0 %252
      %254 = vrot.lane.b32.xlu0 %v250, 19
      %v255 = vpop.permute.xlu0 %254
      %256 = vrot.lane.b32.xlu0 %v247, 19
      %v257 = vpop.permute.xlu0 %256
      %258 = vrot.lane.b32.xlu0 %v251, 19
      %v259 = vpop.permute.xlu0 %258
      %v260 = vsel %vm235, %v253, %v255
      %v261 = vsel %vm235, %v255, %v257
      %v262 = vsel %vm235, %v257, %v259
      %266 = vst [vmem:[#allocation3 + $0x18] sm:$0xf] %v260
      %267 = vst [vmem:[#allocation3 + $0x20] sm:$0xf] %v261
      %268 = vst [vmem:[#allocation3 + $0x28] sm:$0xf] %v262
      %v269 = vld [vmem:[%s197] sm:$0xff]
      %v270 = vld [vmem:[%s197 + $0x8] sm:$0xff]
      %v273 = vcombine.low %v269, %v269
      %v274 = vcombine.low %v270, %v270
      %275 = vrot.lane.b32.xlu0 %v273, 18
      %v276 = vpop.permute.xlu0 %275
      %277 = vrot.lane.b32.xlu0 %v269, 18
      %v278 = vpop.permute.xlu0 %277
      %279 = vrot.lane.b32.xlu0 %v274, 18
      %v280 = vpop.permute.xlu0 %279
      %281 = vrot.lane.b32.xlu0 %v270, 18
      %v282 = vpop.permute.xlu0 %281
      %vm283 = vcmask 146432
      %v284 = vsel %vm283, %v276, %v278
      %v285 = vsel %vm283, %v278, %v280
      %v286 = vsel %vm283, %v280, %v282
      %290 = vst [vmem:[#allocation3] sm:$0xf0] %v284
      %291 = vst [vmem:[#allocation3 + $0x8] sm:$0xf0] %v285
      %292 = vst [vmem:[#allocation3 + $0x10] sm:$0xf0] %v286
      %v293 = vld [vmem:[%s245] sm:$0xff]
      %v294 = vld [vmem:[%s245 + $0x8] sm:$0xff]
      %v297 = vcombine.low %v293, %v293
      %v298 = vcombine.low %v294, %v294
      %299 = vrot.lane.b32.xlu0 %v297, 18
      %v300 = vpop.permute.xlu0 %299
      %301 = vrot.lane.b32.xlu0 %v293, 18
      %v302 = vpop.permute.xlu0 %301
      %303 = vrot.lane.b32.xlu0 %v298, 18
      %v304 = vpop.permute.xlu0 %303
      %305 = vrot.lane.b32.xlu0 %v294, 18
      %v306 = vpop.permute.xlu0 %305
      %v307 = vsel %vm283, %v300, %v302
      %v308 = vsel %vm283, %v302, %v304
      %v309 = vsel %vm283, %v304, %v306
      %313 = vst [vmem:[#allocation3 + $0x18] sm:$0xf0] %v307
      %314 = vst [vmem:[#allocation3 + $0x20] sm:$0xf0] %v308
      %315 = vst [vmem:[#allocation3 + $0x28] sm:$0xf0] %v309
      %v316 = vld [vmem:[%s197] sm:$0xff]
      %v317 = vld [vmem:[%s197 + $0x8] sm:$0xff]
      %v320 = vcombine.high %v316, %v316
      %v321 = vcombine.high %v317, %v317
      %322 = vrot.lane.b32.xlu0 %v316, 17
      %v323 = vpop.permute.xlu0 %322
      %324 = vrot.lane.b32.xlu0 %v320, 17
      %v325 = vpop.permute.xlu0 %324
      %326 = vrot.lane.b32.xlu0 %v317, 17
      %v327 = vpop.permute.xlu0 %326
      %328 = vrot.lane.b32.xlu0 %v321, 17
      %v329 = vpop.permute.xlu0 %328
      %vm330 = vcmask 138240
      %v331 = vsel %vm330, %v323, %v325
      %v332 = vsel %vm330, %v325, %v327
      %v333 = vsel %vm330, %v327, %v329
      %337 = vst [vmem:[#allocation3 + $0x30] sm:$0xf] %v331
      %338 = vst [vmem:[#allocation3 + $0x38] sm:$0xf] %v332
      %339 = vst [vmem:[#allocation3 + $0x40] sm:$0xf] %v333
      %v340 = vld [vmem:[%s245] sm:$0xff]
      %v341 = vld [vmem:[%s245 + $0x8] sm:$0xff]
      %v344 = vcombine.high %v340, %v340
      %v345 = vcombine.high %v341, %v341
      %346 = vrot.lane.b32.xlu0 %v340, 17
      %v347 = vpop.permute.xlu0 %346
      %348 = vrot.lane.b32.xlu0 %v344, 17
      %v349 = vpop.permute.xlu0 %348
      %350 = vrot.lane.b32.xlu0 %v341, 17
      %v351 = vpop.permute.xlu0 %350
      %352 = vrot.lane.b32.xlu0 %v345, 17
      %v353 = vpop.permute.xlu0 %352
      %v354 = vsel %vm330, %v347, %v349
      %v355 = vsel %vm330, %v349, %v351
      %v356 = vsel %vm330, %v351, %v353
      %360 = vst [vmem:[#allocation3 + $0x48] sm:$0xf] %v354
      %361 = vst [vmem:[#allocation3 + $0x50] sm:$0xf] %v355
      %362 = vst [vmem:[#allocation3 + $0x58] sm:$0xf] %v356
      %v363 = vld [vmem:[%s197] sm:$0xff]
      %v364 = vld [vmem:[%s197 + $0x8] sm:$0xff]
      %v367 = vcombine.low %v363, %v363
      %v368 = vcombine.low %v364, %v364
      %369 = vrot.lane.b32.xlu0 %v367, 1
      %v370 = vpop.permute.xlu0 %369
      %371 = vrot.lane.b32.xlu0 %v363, 1
      %v372 = vpop.permute.xlu0 %371
      %373 = vrot.lane.b32.xlu0 %v368, 1
      %v374 = vpop.permute.xlu0 %373
      %375 = vrot.lane.b32.xlu0 %v364, 1
      %v376 = vpop.permute.xlu0 %375
      %vm377 = vcmask 7168
      %v378 = vsel %vm377, %v370, %v372
      %v379 = vsel %vm377, %v372, %v374
      %v380 = vsel %vm377, %v374, %v376
      %384 = vst [vmem:[#allocation3 + $0x30] sm:$0xf0] %v378
      %385 = vst [vmem:[#allocation3 + $0x38] sm:$0xf0] %v379
      %386 = vst [vmem:[#allocation3 + $0x40] sm:$0xf0] %v380
      %v387 = vld [vmem:[%s245] sm:$0xff]
      %v388 = vld [vmem:[%s245 + $0x8] sm:$0xff]
      %v391 = vcombine.low %v387, %v387
      %v392 = vcombine.low %v388, %v388
      %393 = vrot.lane.b32.xlu0 %v391, 1
      %v394 = vpop.permute.xlu0 %393
      %395 = vrot.lane.b32.xlu0 %v387, 1
      %v396 = vpop.permute.xlu0 %395
      %397 = vrot.lane.b32.xlu0 %v392, 1
      %v398 = vpop.permute.xlu0 %397
      %399 = vrot.lane.b32.xlu0 %v388, 1
      %v400 = vpop.permute.xlu0 %399
      %v401 = vsel %vm377, %v394, %v396
      %v402 = vsel %vm377, %v396, %v398
      %v403 = vsel %vm377, %v398, %v400
      %407 = vst [vmem:[#allocation3 + $0x48] sm:$0xf0] %v401
      %408 = vst [vmem:[#allocation3 + $0x50] sm:$0xf0] %v402
      %409 = vst [vmem:[#allocation3 + $0x58] sm:$0xf0] %v403
      %v410 = vld [vmem:[%s197 + $0x4] sm:$0xff]
      %v411 = vld [vmem:[%s197 + $0xc] sm:$0xf]
      %v413 = vcombine.high %v410, %v410
      %415 = vst [vmem:[#allocation3 + $0x60] sm:$0xf] %v410
      %416 = vst [vmem:[#allocation3 + $0x68] sm:$0xf] %v413
      %417 = vst [vmem:[#allocation3 + $0x70] sm:$0xf] %v411
      %v418 = vld [vmem:[%s245 + $0x4] sm:$0xff]
      %v419 = vld [vmem:[%s245 + $0xc] sm:$0xf]
      %v421 = vcombine.high %v418, %v418
      %423 = vst [vmem:[#allocation3 + $0x78] sm:$0xf] %v418
      %424 = vst [vmem:[#allocation3 + $0x80] sm:$0xf] %v421
      %425 = vst [vmem:[#allocation3 + $0x88] sm:$0xf] %v419
      %v426 = vld [vmem:[%s197 + $0x4] sm:$0xff]
      %v427 = vld [vmem:[%s197 + $0xc] sm:$0xff]
      %v430 = vcombine.low %v426, %v426
      %v431 = vcombine.low %v427, %v427
      %432 = vrot.lane.b32.xlu0 %v430, 127
      %v433 = vpop.permute.xlu0 %432
      %434 = vrot.lane.b32.xlu0 %v426, 127
      %v435 = vpop.permute.xlu0 %434
      %436 = vrot.lane.b32.xlu0 %v431, 127
      %v437 = vpop.permute.xlu0 %436
      %438 = vrot.lane.b32.xlu0 %v427, 127
      %v439 = vpop.permute.xlu0 %438
      %vm440 = vcmask 1039360
      %v441 = vsel %vm440, %v433, %v435
      %v442 = vsel %vm440, %v435, %v437
      %v443 = vsel %vm440, %v437, %v439
      %447 = vst [vmem:[#allocation3 + $0x60] sm:$0xf0] %v441
      %448 = vst [vmem:[#allocation3 + $0x68] sm:$0xf0] %v442
      %449 = vst [vmem:[#allocation3 + $0x70] sm:$0xf0] %v443
      %v450 = vld [vmem:[%s245 + $0x4] sm:$0xff]
      %v451 = vld [vmem:[%s245 + $0xc] sm:$0xff]
      %v454 = vcombine.low %v450, %v450
      %v455 = vcombine.low %v451, %v451
      %456 = vrot.lane.b32.xlu0 %v454, 127
      %v457 = vpop.permute.xlu0 %456
      %458 = vrot.lane.b32.xlu0 %v450, 127
      %v459 = vpop.permute.xlu0 %458
      %460 = vrot.lane.b32.xlu0 %v455, 127
      %v461 = vpop.permute.xlu0 %460
      %462 = vrot.lane.b32.xlu0 %v451, 127
      %v463 = vpop.permute.xlu0 %462
      %v464 = vsel %vm440, %v457, %v459
      %v465 = vsel %vm440, %v459, %v461
      %v466 = vsel %vm440, %v461, %v463
      %470 = vst [vmem:[#allocation3 + $0x78] sm:$0xf0] %v464
      %471 = vst [vmem:[#allocation3 + $0x80] sm:$0xf0] %v465
      %472 = vst [vmem:[#allocation3 + $0x88] sm:$0xf0] %v466
      %v473 = vld [vmem:[%s197 + $0x4] sm:$0xff]
      %v474 = vld [vmem:[%s197 + $0xc] sm:$0xff]
      %v477 = vcombine.high %v473, %v473
      %v478 = vcombine.high %v474, %v474
      %479 = vrot.lane.b32.xlu0 %v473, 111
      %v480 = vpop.permute.xlu0 %479
      %481 = vrot.lane.b32.xlu0 %v477, 111
      %v482 = vpop.permute.xlu0 %481
      %483 = vrot.lane.b32.xlu0 %v474, 111
      %v484 = vpop.permute.xlu0 %483
      %485 = vrot.lane.b32.xlu0 %v478, 111
      %v486 = vpop.permute.xlu0 %485
      %vm487 = vcmask 908288
      %v488 = vsel %vm487, %v480, %v482
      %v489 = vsel %vm487, %v482, %v484
      %v490 = vsel %vm487, %v484, %v486
      %494 = vst [vmem:[#allocation3 + $0x90] sm:$0xf] %v488
      %495 = vst [vmem:[#allocation3 + $0x98] sm:$0xf] %v489
      %496 = vst [vmem:[#allocation3 + $0xa0] sm:$0xf] %v490
      %v497 = vld [vmem:[%s245 + $0x4] sm:$0xff]
      %v498 = vld [vmem:[%s245 + $0xc] sm:$0xff]
      %v501 = vcombine.high %v497, %v497
      %v502 = vcombine.high %v498, %v498
      %503 = vrot.lane.b32.xlu0 %v497, 111
      %v504 = vpop.permute.xlu0 %503
      %505 = vrot.lane.b32.xlu0 %v501, 111
      %v506 = vpop.permute.xlu0 %505
      %507 = vrot.lane.b32.xlu0 %v498, 111
      %v508 = vpop.permute.xlu0 %507
      %509 = vrot.lane.b32.xlu0 %v502, 111
      %v510 = vpop.permute.xlu0 %509
      %v511 = vsel %vm487, %v504, %v506
      %v512 = vsel %vm487, %v506, %v508
      %v513 = vsel %vm487, %v508, %v510
      %517 = vst [vmem:[#allocation3 + $0xa8] sm:$0xf] %v511
      %518 = vst [vmem:[#allocation3 + $0xb0] sm:$0xf] %v512
      %519 = vst [vmem:[#allocation3 + $0xb8] sm:$0xf] %v513
      %v520 = vld [vmem:[%s197 + $0x4] sm:$0xff]
      %v521 = vld [vmem:[%s197 + $0xc] sm:$0xff]
      %v524 = vcombine.low %v520, %v520
      %v525 = vcombine.low %v521, %v521
      %526 = vrot.lane.b32.xlu0 %v524, 110
      %v527 = vpop.permute.xlu0 %526
      %528 = vrot.lane.b32.xlu0 %v520, 110
      %v529 = vpop.permute.xlu0 %528
      %530 = vrot.lane.b32.xlu0 %v525, 110
      %v531 = vpop.permute.xlu0 %530
      %532 = vrot.lane.b32.xlu0 %v521, 110
      %v533 = vpop.permute.xlu0 %532
      %vm534 = vcmask 900096
      %v535 = vsel %vm534, %v527, %v529
      %v536 = vsel %vm534, %v529, %v531
      %v537 = vsel %vm534, %v531, %v533
      %541 = vst [vmem:[#allocation3 + $0x90] sm:$0xf0] %v535
      %542 = vst [vmem:[#allocation3 + $0x98] sm:$0xf0] %v536
      %543 = vst [vmem:[#allocation3 + $0xa0] sm:$0xf0] %v537
      %v544 = vld [vmem:[%s245 + $0x4] sm:$0xff]
      %v545 = vld [vmem:[%s245 + $0xc] sm:$0xff]
      %v548 = vcombine.low %v544, %v544
      %v549 = vcombine.low %v545, %v545
      %550 = vrot.lane.b32.xlu0 %v548, 110
      %v551 = vpop.permute.xlu0 %550
      %552 = vrot.lane.b32.xlu0 %v544, 110
      %v553 = vpop.permute.xlu0 %552
      %554 = vrot.lane.b32.xlu0 %v549, 110
      %v555 = vpop.permute.xlu0 %554
      %556 = vrot.lane.b32.xlu0 %v545, 110
      %v557 = vpop.permute.xlu0 %556
      %v558 = vsel %vm534, %v551, %v553
      %v559 = vsel %vm534, %v553, %v555
      %v560 = vsel %vm534, %v555, %v557
      %564 = vst [vmem:[#allocation3 + $0xa8] sm:$0xf0] %v558
      %565 = vst [vmem:[#allocation3 + $0xb0] sm:$0xf0] %v559
      %566 = vst [vmem:[#allocation3 + $0xb8] sm:$0xf0] %v560
      %v567 = vld [vmem:[%s197 + $0x4] sm:$0xff]
      %v568 = vld [vmem:[%s197 + $0xc] sm:$0xff]
      %v571 = vcombine.high %v567, %v567
      %v572 = vcombine.high %v568, %v568
      %573 = vrot.lane.b32.xlu0 %v567, 109
      %v574 = vpop.permute.xlu0 %573
      %575 = vrot.lane.b32.xlu0 %v571, 109
      %v576 = vpop.permute.xlu0 %575
      %577 = vrot.lane.b32.xlu0 %v568, 109
      %v578 = vpop.permute.xlu0 %577
      %579 = vrot.lane.b32.xlu0 %v572, 109
      %v580 = vpop.permute.xlu0 %579
      %vm581 = vcmask 891904
      %v582 = vsel %vm581, %v574, %v576
      %v583 = vsel %vm581, %v576, %v578
      %v584 = vsel %vm581, %v578, %v580
      %588 = vst [vmem:[#allocation3 + $0xc0] sm:$0xf] %v582
      %589 = vst [vmem:[#allocation3 + $0xc8] sm:$0xf] %v583
      %590 = vst [vmem:[#allocation3 + $0xd0] sm:$0xf] %v584
      %v591 = vld [vmem:[%s245 + $0x4] sm:$0xff]
      %v592 = vld [vmem:[%s245 + $0xc] sm:$0xff]
      %v595 = vcombine.high %v591, %v591
      %v596 = vcombine.high %v592, %v592
      %597 = vrot.lane.b32.xlu0 %v591, 109
      %v598 = vpop.permute.xlu0 %597
      %599 = vrot.lane.b32.xlu0 %v595, 109
      %v600 = vpop.permute.xlu0 %599
      %601 = vrot.lane.b32.xlu0 %v592, 109
      %v602 = vpop.permute.xlu0 %601
      %603 = vrot.lane.b32.xlu0 %v596, 109
      %v604 = vpop.permute.xlu0 %603
      %v605 = vsel %vm581, %v598, %v600
      %v606 = vsel %vm581, %v600, %v602
      %v607 = vsel %vm581, %v602, %v604
      %611 = vst [vmem:[#allocation3 + $0xd8] sm:$0xf] %v605
      %612 = vst [vmem:[#allocation3 + $0xe0] sm:$0xf] %v606
      %613 = vst [vmem:[#allocation3 + $0xe8] sm:$0xf] %v607
      %v614 = vld [vmem:[%s2] sm:$0xf]
      %v615 = vld [vmem:[#allocation3] sm:$0xff]
      %v616 = vld [vmem:[#allocation3 + $0x8] sm:$0xff]
      %v617 = vld [vmem:[#allocation3 + $0x10] sm:$0xff]
      %v618 = vld [vmem:[#allocation3 + $0x18] sm:$0xff]
      %v619 = vld [vmem:[#allocation3 + $0x20] sm:$0xff]
      %v620 = vld [vmem:[#allocation3 + $0x28] sm:$0xff]
      %v621 = vld [vmem:[#allocation3 + $0x30] sm:$0xff]
      %v622 = vld [vmem:[#allocation3 + $0x38] sm:$0xff]
      %v623 = vld [vmem:[#allocation3 + $0x40] sm:$0xff]
      %v624 = vld [vmem:[#allocation3 + $0x48] sm:$0xff]
      %v625 = vld [vmem:[#allocation3 + $0x50] sm:$0xff]
      %v626 = vld [vmem:[#allocation3 + $0x58] sm:$0xff]
      %v627 = vld [vmem:[#allocation3 + $0x60] sm:$0xff]
      %v628 = vld [vmem:[#allocation3 + $0x68] sm:$0xff]
      %v629 = vld [vmem:[#allocation3 + $0x70] sm:$0xff]
      %v630 = vld [vmem:[#allocation3 + $0x78] sm:$0xff]
      %v631 = vld [vmem:[#allocation3 + $0x80] sm:$0xff]
      %v632 = vld [vmem:[#allocation3 + $0x88] sm:$0xff]
      %v633 = vld [vmem:[#allocation3 + $0x90] sm:$0xff]
      %v634 = vld [vmem:[#allocation3 + $0x98] sm:$0xff]
      %v635 = vld [vmem:[#allocation3 + $0xa0] sm:$0xff]
      %v636 = vld [vmem:[#allocation3 + $0xa8] sm:$0xff]
      %v637 = vld [vmem:[#allocation3 + $0xb0] sm:$0xff]
      %v638 = vld [vmem:[#allocation3 + $0xb8] sm:$0xff]
      %v639 = vld [vmem:[#allocation3 + $0xc0] sm:$0xf]
      %v640 = vld [vmem:[#allocation3 + $0xc8] sm:$0xf]
      %v641 = vld [vmem:[#allocation3 + $0xd0] sm:$0xf]
      %v642 = vld [vmem:[#allocation3 + $0xd8] sm:$0xf]
      %v643 = vld [vmem:[#allocation3 + $0xe0] sm:$0xf]
      %v644 = vld [vmem:[#allocation3 + $0xe8] sm:$0xf]
      %v645 = vld [vmem:[%s3] sm:$0xf]
      %647 = vset.pattern.permute.xlu0 0
      %648 = vperm.xlu0 %647, %v645
      %v649 = vpop.permute.xlu0 %648
      %vm651 = vcmask 293888
      %v653 = vsel %vm651, %v614, 0
      %vm655 = vcmask 1043456
      %v657 = vsel %vm655, %v639, 0
      %v660 = vsel %vm655, %v640, 0
      %v663 = vsel %vm655, %v641, 0
      %v666 = vsel %vm655, %v642, 0
      %v669 = vsel %vm655, %v643, 0
      %v672 = vsel %vm655, %v644, 0
      %674 = vmatprep.subr.mxu0 0.0
      %675 = vmatpush1.msra.mxu0 0.0
      %676 = vmatprep.subr.mxu0 0.0
      %677 = vmatpush1.msra.mxu0 0.0
      %678 = vmatprep.subr.mxu0 0.0
      %679 = vmatpush1.msra.mxu0 0.0
      %680 = vmatprep.subr.mxu0 0.0
      %681 = vmatpush1.msra.mxu0 0.0
      %682 = vmatprep.subr.mxu0 0.0
      %683 = vmatpush1.msra.mxu0 0.0
      %684 = vmatprep.subr.mxu0 0.0
      %685 = vmatpush1.msra.mxu0 0.0
      %686 = vmatprep.subr.mxu0 0.0
      %687 = vmatpush1.msra.mxu0 0.0
      %688 = vmatprep.subr.mxu0 0.0
      %689 = vmatpush1.msra.mxu0 0.0
      %690 = vmatprep.subr.mxu0 0.0
      %691 = vmatpush1.msra.mxu0 0.0
      %692 = vmatprep.subr.mxu0 0.0
      %693 = vmatpush1.msra.mxu0 0.0
      %694 = vmatprep.subr.mxu0 0.0
      %695 = vmatpush1.msra.mxu0 0.0
      %696 = vmatprep.subr.mxu0 %v660
      %697 = vmatpush1.msra.mxu0 %v657
      %698 = vmatprep.subr.mxu0 %v634
      %699 = vmatpush1.msra.mxu0 %v633
      %700 = vmatprep.subr.mxu0 %v628
      %701 = vmatpush1.msra.mxu0 %v627
      %702 = vmatprep.subr.mxu0 %v622
      %703 = vmatpush1.msra.mxu0 %v621
      %704 = vmatprep.subr.mxu0 %v616
      %705 = vmatpush1.msra.mxu0 %v615
      %706 = vmatprep.subr.mxu0 0.0
      %707 = vmatpush2.msra.mxu0 0.0
      %708 = vmatprep.subr.mxu0 0.0
      %709 = vmatpush2.msra.mxu0 0.0
      %710 = vmatprep.subr.mxu0 0.0
      %711 = vmatpush2.msra.mxu0 0.0
      %712 = vmatprep.subr.mxu0 0.0
      %713 = vmatpush2.msra.mxu0 0.0
      %714 = vmatprep.subr.mxu0 0.0
      %715 = vmatpush2.msra.mxu0 0.0
      %716 = vmatprep.subr.mxu0 0.0
      %717 = vmatpush2.msra.mxu0 0.0
      %718 = vmatprep.subr.mxu0 0.0
      %719 = vmatpush2.msra.mxu0 0.0
      %720 = vmatprep.subr.mxu0 0.0
      %721 = vmatpush2.msra.mxu0 0.0
      %722 = vmatprep.subr.mxu0 0.0
      %723 = vmatpush2.msra.mxu0 0.0
      %724 = vmatprep.subr.mxu0 0.0
      %725 = vmatpush2.msra.mxu0 0.0
      %726 = vmatprep.subr.mxu0 0.0
      %727 = vmatpush2.msra.mxu0 0.0
      %728 = vmatprep.subr.mxu0 0.0
      %729 = vmatpush2.msra.mxu0 0.0
      %730 = vmatprep.subr.mxu0 0.0
      %731 = vmatpush2.msra.mxu0 0.0
      %732 = vmatprep.subr.mxu0 0.0
      %733 = vmatpush2.msra.mxu0 0.0
      %734 = vmatprep.subr.mxu0 0.0
      %735 = vmatpush2.msra.mxu0 0.0
      %736 = vmatprep.subr.mxu0 0.0
      %737 = vmatpush2.msra.mxu0 0.0
      %738 = vmatprep.mubr.f32.mxu0 0.0
      %739 = vmatmul.mubr.f32.gmra.mxu0 %v653
      %v740 = vpop.f32.mrf.mxu0
      %v741 = vadd.f32 %v649, %v740
      %v742 = vpop.f32.mrf.mxu0
      %v743 = vadd.f32 %v649, %v742
      %744 = vdwg.mxu0
      %745 = vmatprep.subr.mxu0 0.0
      %746 = vmatpush1.msra.mxu0 0.0
      %747 = vmatprep.subr.mxu0 0.0
      %748 = vmatpush1.msra.mxu0 0.0
      %749 = vmatprep.subr.mxu0 0.0
      %750 = vmatpush1.msra.mxu0 0.0
      %751 = vmatprep.subr.mxu0 0.0
      %752 = vmatpush1.msra.mxu0 0.0
      %753 = vmatprep.subr.mxu0 0.0
      %754 = vmatpush1.msra.mxu0 0.0
      %755 = vmatprep.subr.mxu0 0.0
      %756 = vmatpush1.msra.mxu0 0.0
      %757 = vmatprep.subr.mxu0 0.0
      %758 = vmatpush1.msra.mxu0 0.0
      %759 = vmatprep.subr.mxu0 0.0
      %760 = vmatpush1.msra.mxu0 0.0
      %761 = vmatprep.subr.mxu0 0.0
      %762 = vmatpush1.msra.mxu0 0.0
      %763 = vmatprep.subr.mxu0 0.0
      %764 = vmatpush1.msra.mxu0 0.0
      %765 = vmatprep.subr.mxu0 0.0
      %766 = vmatpush1.msra.mxu0 0.0
      %767 = vmatprep.subr.mxu0 %v666
      %768 = vmatpush1.msra.mxu0 %v663
      %769 = vmatprep.subr.mxu0 %v636
      %770 = vmatpush1.msra.mxu0 %v635
      %771 = vmatprep.subr.mxu0 %v630
      %772 = vmatpush1.msra.mxu0 %v629
      %773 = vmatprep.subr.mxu0 %v624
      %774 = vmatpush1.msra.mxu0 %v623
      %775 = vmatprep.subr.mxu0 %v618
      %776 = vmatpush1.msra.mxu0 %v617
      %777 = vmatprep.subr.mxu0 0.0
      %778 = vmatpush2.msra.mxu0 0.0
      %779 = vmatprep.subr.mxu0 0.0
      %780 = vmatpush2.msra.mxu0 0.0
      %781 = vmatprep.subr.mxu0 0.0
      %782 = vmatpush2.msra.mxu0 0.0
      %783 = vmatprep.subr.mxu0 0.0
      %784 = vmatpush2.msra.mxu0 0.0
      %785 = vmatprep.subr.mxu0 0.0
      %786 = vmatpush2.msra.mxu0 0.0
      %787 = vmatprep.subr.mxu0 0.0
      %788 = vmatpush2.msra.mxu0 0.0
      %789 = vmatprep.subr.mxu0 0.0
      %790 = vmatpush2.msra.mxu0 0.0
      %791 = vmatprep.subr.mxu0 0.0
      %792 = vmatpush2.msra.mxu0 0.0
      %793 = vmatprep.subr.mxu0 0.0
      %794 = vmatpush2.msra.mxu0 0.0
      %795 = vmatprep.subr.mxu0 0.0
      %796 = vmatpush2.msra.mxu0 0.0
      %797 = vmatprep.subr.mxu0 0.0
      %798 = vmatpush2.msra.mxu0 0.0
      %799 = vmatprep.subr.mxu0 0.0
      %800 = vmatpush2.msra.mxu0 0.0
      %801 = vmatprep.subr.mxu0 0.0
      %802 = vmatpush2.msra.mxu0 0.0
      %803 = vmatprep.subr.mxu0 0.0
      %804 = vmatpush2.msra.mxu0 0.0
      %805 = vmatprep.subr.mxu0 0.0
      %806 = vmatpush2.msra.mxu0 0.0
      %807 = vmatprep.subr.mxu0 0.0
      %808 = vmatpush2.msra.mxu0 0.0
      %809 = vmatprep.mubr.f32.mxu0 0.0
      %810 = vmatmul.mubr.f32.gmra.mxu0 %v653
      %v811 = vpop.f32.mrf.mxu0
      %v812 = vadd.f32 %v649, %v811
      %v813 = vpop.f32.mrf.mxu0
      %v814 = vadd.f32 %v649, %v813
      %815 = vdwg.mxu0
      %816 = vmatprep.subr.mxu0 0.0
      %817 = vmatpush1.msra.mxu0 0.0
      %818 = vmatprep.subr.mxu0 0.0
      %819 = vmatpush1.msra.mxu0 0.0
      %820 = vmatprep.subr.mxu0 0.0
      %821 = vmatpush1.msra.mxu0 0.0
      %822 = vmatprep.subr.mxu0 0.0
      %823 = vmatpush1.msra.mxu0 0.0
      %824 = vmatprep.subr.mxu0 0.0
      %825 = vmatpush1.msra.mxu0 0.0
      %826 = vmatprep.subr.mxu0 0.0
      %827 = vmatpush1.msra.mxu0 0.0
      %828 = vmatprep.subr.mxu0 0.0
      %829 = vmatpush1.msra.mxu0 0.0
      %830 = vmatprep.subr.mxu0 0.0
      %831 = vmatpush1.msra.mxu0 0.0
      %832 = vmatprep.subr.mxu0 0.0
      %833 = vmatpush1.msra.mxu0 0.0
      %834 = vmatprep.subr.mxu0 0.0
      %835 = vmatpush1.msra.mxu0 0.0
      %836 = vmatprep.subr.mxu0 0.0
      %837 = vmatpush1.msra.mxu0 0.0
      %838 = vmatprep.subr.mxu0 %v672
      %839 = vmatpush1.msra.mxu0 %v669
      %840 = vmatprep.subr.mxu0 %v638
      %841 = vmatpush1.msra.mxu0 %v637
      %842 = vmatprep.subr.mxu0 %v632
      %843 = vmatpush1.msra.mxu0 %v631
      %844 = vmatprep.subr.mxu0 %v626
      %845 = vmatpush1.msra.mxu0 %v625
      %846 = vmatprep.subr.mxu0 %v620
      %847 = vmatpush1.msra.mxu0 %v619
      %848 = vmatprep.subr.mxu0 0.0
      %849 = vmatpush2.msra.mxu0 0.0
      %850 = vmatprep.subr.mxu0 0.0
      %851 = vmatpush2.msra.mxu0 0.0
      %852 = vmatprep.subr.mxu0 0.0
      %853 = vmatpush2.msra.mxu0 0.0
      %854 = vmatprep.subr.mxu0 0.0
      %855 = vmatpush2.msra.mxu0 0.0
      %856 = vmatprep.subr.mxu0 0.0
      %857 = vmatpush2.msra.mxu0 0.0
      %858 = vmatprep.subr.mxu0 0.0
      %859 = vmatpush2.msra.mxu0 0.0
      %860 = vmatprep.subr.mxu0 0.0
      %861 = vmatpush2.msra.mxu0 0.0
      %862 = vmatprep.subr.mxu0 0.0
      %863 = vmatpush2.msra.mxu0 0.0
      %864 = vmatprep.subr.mxu0 0.0
      %865 = vmatpush2.msra.mxu0 0.0
      %866 = vmatprep.subr.mxu0 0.0
      %867 = vmatpush2.msra.mxu0 0.0
      %868 = vmatprep.subr.mxu0 0.0
      %869 = vmatpush2.msra.mxu0 0.0
      %870 = vmatprep.subr.mxu0 0.0
      %871 = vmatpush2.msra.mxu0 0.0
      %872 = vmatprep.subr.mxu0 0.0
      %873 = vmatpush2.msra.mxu0 0.0
      %874 = vmatprep.subr.mxu0 0.0
      %875 = vmatpush2.msra.mxu0 0.0
      %876 = vmatprep.subr.mxu0 0.0
      %877 = vmatpush2.msra.mxu0 0.0
      %878 = vmatprep.subr.mxu0 0.0
      %879 = vmatpush2.msra.mxu0 0.0
      %880 = vmatprep.mubr.f32.mxu0 0.0
      %881 = vmatmul.mubr.f32.gmra.mxu0 %v653
      %v882 = vpop.f32.mrf.mxu0
      %v883 = vadd.f32 %v649, %v882
      %v884 = vpop.f32.mrf.mxu0
      %v885 = vadd.f32 %v649, %v884
      %886 = vdwg.mxu0
      %v887 = vmax.f32 %v741, 0.0
      %v888 = vmax.f32 %v743, 0.0
      %v889 = vmax.f32 %v812, 0.0
      %v890 = vmax.f32 %v814, 0.0
      %v891 = vmax.f32 %v883, 0.0
      %v892 = vmax.f32 %v885, 0.0
      %v894 = vlaneseq
      %v895 = vshrl.u32 %v894, 7
      %v896 = vsub.s32 0, %v895
      %v897 = vrot.slane %v206, %v896
      %v898 = vlaneseq
      %v899 = vshrl.u32 %v898, 7
      %v900 = vsub.s32 1, %v899
      %v901 = vrot.slane %v206, %v900
      %v902 = vlaneseq
      %v903 = vshrl.u32 %v902, 7
      %v904 = vsub.s32 2, %v903
      %v905 = vrot.slane %v206, %v904
      %v906 = vlaneseq
      %v907 = vshrl.u32 %v906, 7
      %v908 = vsub.s32 3, %v907
      %v909 = vrot.slane %v206, %v908
      %v910 = vlaneseq
      %v911 = vshrl.u32 %v910, 7
      %v912 = vsub.s32 4, %v911
      %v913 = vrot.slane %v206, %v912
      %v914 = vlaneseq
      %v915 = vshrl.u32 %v914, 7
      %v916 = vsub.s32 5, %v915
      %v917 = vrot.slane %v206, %v916
      %v924 = vmul.f32 %v887, %v897
      %v925 = vmul.f32 %v888, %v901
      %v926 = vmul.f32 %v889, %v905
      %v927 = vmul.f32 %v890, %v909
      %v928 = vmul.f32 %v891, %v913
      %v929 = vmul.f32 %v892, %v917
      %930 = vst [vmem:[#allocation2 + $0x8] sm:$0xf] %v924
      %931 = vst [vmem:[#allocation2 + $0x10] sm:$0xf] %v925
      %932 = vst [vmem:[#allocation2 + $0x18] sm:$0xf] %v926
      %933 = vst [vmem:[#allocation2 + $0x30] sm:$0xf] %v927
      %934 = vst [vmem:[#allocation2 + $0x38] sm:$0xf] %v928
      %935 = vst [vmem:[#allocation2 + $0x40] sm:$0xf] %v929
      %v936 = vld [vmem:[#allocation2] sm:$0xf]
      %v937 = vld [vmem:[#allocation2 + $0x8] sm:$0xf]
      %v938 = vld [vmem:[#allocation2 + $0x10] sm:$0xf]
      %v939 = vld [vmem:[#allocation2 + $0x18] sm:$0xf]
      %944 = vrot.lane.b32.xlu0 %v936, 19
      %v945 = vpop.permute.xlu0 %944
      %946 = vrot.lane.b32.xlu0 %v937, 19
      %v947 = vpop.permute.xlu0 %946
      %948 = vrot.lane.b32.xlu0 %v938, 19
      %v949 = vpop.permute.xlu0 %948
      %950 = vrot.lane.b32.xlu0 %v939, 19
      %v951 = vpop.permute.xlu0 %950
      %v952 = vsel %vm235, %v945, %v947
      %v953 = vsel %vm235, %v947, %v949
      %v954 = vsel %vm235, %v949, %v951
      %958 = vst [vmem:[#allocation3] sm:$0xf] %v952
      %959 = vst [vmem:[#allocation3 + $0x8] sm:$0xf] %v953
      %960 = vst [vmem:[#allocation3 + $0x10] sm:$0xf] %v954
      %v961 = vld [vmem:[#allocation2 + $0x28] sm:$0xf]
      %v962 = vld [vmem:[#allocation2 + $0x30] sm:$0xf]
      %v963 = vld [vmem:[#allocation2 + $0x38] sm:$0xf]
      %v964 = vld [vmem:[#allocation2 + $0x40] sm:$0xf]
      %969 = vrot.lane.b32.xlu0 %v961, 19
      %v970 = vpop.permute.xlu0 %969
      %971 = vrot.lane.b32.xlu0 %v962, 19
      %v972 = vpop.permute.xlu0 %971
      %973 = vrot.lane.b32.xlu0 %v963, 19
      %v974 = vpop.permute.xlu0 %973
      %975 = vrot.lane.b32.xlu0 %v964, 19
      %v976 = vpop.permute.xlu0 %975
      %v977 = vsel %vm235, %v970, %v972
      %v978 = vsel %vm235, %v972, %v974
      %v979 = vsel %vm235, %v974, %v976
      %983 = vst [vmem:[#allocation3 + $0x18] sm:$0xf] %v977
      %984 = vst [vmem:[#allocation3 + $0x20] sm:$0xf] %v978
      %985 = vst [vmem:[#allocation3 + $0x28] sm:$0xf] %v979
      %v986 = vld [vmem:[#allocation2] sm:$0xf]
      %v987 = vld [vmem:[#allocation2 + $0x8] sm:$0xf]
      %v988 = vld [vmem:[#allocation2 + $0x10] sm:$0xf]
      %v989 = vld [vmem:[#allocation2 + $0x18] sm:$0xf]
      %v994 = vrot.slane %v986, 4
      %v995 = vrot.slane %v987, 4
      %v996 = vrot.slane %v988, 4
      %v997 = vrot.slane %v989, 4
      %998 = vrot.lane.b32.xlu0 %v994, 18
      %v999 = vpop.permute.xlu0 %998
      %1000 = vrot.lane.b32.xlu0 %v995, 18
      %v1001 = vpop.permute.xlu0 %1000
      %1002 = vrot.lane.b32.xlu0 %v996, 18
      %v1003 = vpop.permute.xlu0 %1002
      %1004 = vrot.lane.b32.xlu0 %v997, 18
      %v1005 = vpop.permute.xlu0 %1004
      %v1006 = vsel %vm283, %v999, %v1001
      %v1007 = vsel %vm283, %v1001, %v1003
      %v1008 = vsel %vm283, %v1003, %v1005
      %1012 = vst [vmem:[#allocation3] sm:$0xf0] %v1006
      %1013 = vst [vmem:[#allocation3 + $0x8] sm:$0xf0] %v1007
      %1014 = vst [vmem:[#allocation3 + $0x10] sm:$0xf0] %v1008
      %v1015 = vld [vmem:[#allocation2 + $0x28] sm:$0xf]
      %v1016 = vld [vmem:[#allocation2 + $0x30] sm:$0xf]
      %v1017 = vld [vmem:[#allocation2 + $0x38] sm:$0xf]
      %v1018 = vld [vmem:[#allocation2 + $0x40] sm:$0xf]
      %v1023 = vrot.slane %v1015, 4
      %v1024 = vrot.slane %v1016, 4
      %v1025 = vrot.slane %v1017, 4
      %v1026 = vrot.slane %v1018, 4
      %1027 = vrot.lane.b32.xlu0 %v1023, 18
      %v1028 = vpop.permute.xlu0 %1027
      %1029 = vrot.lane.b32.xlu0 %v1024, 18
      %v1030 = vpop.permute.xlu0 %1029
      %1031 = vrot.lane.b32.xlu0 %v1025, 18
      %v1032 = vpop.permute.xlu0 %1031
      %1033 = vrot.lane.b32.xlu0 %v1026, 18
      %v1034 = vpop.permute.xlu0 %1033
      %v1035 = vsel %vm283, %v1028, %v1030
      %v1036 = vsel %vm283, %v1030, %v1032
      %v1037 = vsel %vm283, %v1032, %v1034
      %1041 = vst [vmem:[#allocation3 + $0x18] sm:$0xf0] %v1035
      %1042 = vst [vmem:[#allocation3 + $0x20] sm:$0xf0] %v1036
      %1043 = vst [vmem:[#allocation3 + $0x28] sm:$0xf0] %v1037
      %v1044 = vld [vmem:[#allocation2] sm:$0xf]
      %v1045 = vld [vmem:[#allocation2 + $0x8] sm:$0xf]
      %v1046 = vld [vmem:[#allocation2 + $0x10] sm:$0xf]
      %v1047 = vld [vmem:[#allocation2 + $0x18] sm:$0xf]
      %1052 = vrot.lane.b32.xlu0 %v1044, 17
      %v1053 = vpop.permute.xlu0 %1052
      %1054 = vrot.lane.b32.xlu0 %v1045, 17
      %v1055 = vpop.permute.xlu0 %1054
      %1056 = vrot.lane.b32.xlu0 %v1046, 17
      %v1057 = vpop.permute.xlu0 %1056
      %1058 = vrot.lane.b32.xlu0 %v1047, 17
      %v1059 = vpop.permute.xlu0 %1058
      %v1060 = vsel %vm330, %v1053, %v1055
      %v1061 = vsel %vm330, %v1055, %v1057
      %v1062 = vsel %vm330, %v1057, %v1059
      %1066 = vst [vmem:[#allocation3 + $0x30] sm:$0xf] %v1060
      %1067 = vst [vmem:[#allocation3 + $0x38] sm:$0xf] %v1061
      %1068 = vst [vmem:[#allocation3 + $0x40] sm:$0xf] %v1062
      %v1069 = vld [vmem:[#allocation2 + $0x28] sm:$0xf]
      %v1070 = vld [vmem:[#allocation2 + $0x30] sm:$0xf]
      %v1071 = vld [vmem:[#allocation2 + $0x38] sm:$0xf]
      %v1072 = vld [vmem:[#allocation2 + $0x40] sm:$0xf]
      %1077 = vrot.lane.b32.xlu0 %v1069, 17
      %v1078 = vpop.permute.xlu0 %1077
      %1079 = vrot.lane.b32.xlu0 %v1070, 17
      %v1080 = vpop.permute.xlu0 %1079
      %1081 = vrot.lane.b32.xlu0 %v1071, 17
      %v1082 = vpop.permute.xlu0 %1081
      %1083 = vrot.lane.b32.xlu0 %v1072, 17
      %v1084 = vpop.permute.xlu0 %1083
      %v1085 = vsel %vm330, %v1078, %v1080
      %v1086 = vsel %vm330, %v1080, %v1082
      %v1087 = vsel %vm330, %v1082, %v1084
      %1091 = vst [vmem:[#allocation3 + $0x48] sm:$0xf] %v1085
      %1092 = vst [vmem:[#allocation3 + $0x50] sm:$0xf] %v1086
      %1093 = vst [vmem:[#allocation3 + $0x58] sm:$0xf] %v1087
      %v1094 = vld [vmem:[#allocation2] sm:$0xf]
      %v1095 = vld [vmem:[#allocation2 + $0x8] sm:$0xf]
      %v1096 = vld [vmem:[#allocation2 + $0x10] sm:$0xf]
      %v1097 = vld [vmem:[#allocation2 + $0x18] sm:$0xf]
      %v1102 = vrot.slane %v1094, 4
      %v1103 = vrot.slane %v1095, 4
      %v1104 = vrot.slane %v1096, 4
      %v1105 = vrot.slane %v1097, 4
      %1106 = vrot.lane.b32.xlu0 %v1102, 1
      %v1107 = vpop.permute.xlu0 %1106
      %1108 = vrot.lane.b32.xlu0 %v1103, 1
      %v1109 = vpop.permute.xlu0 %1108
      %1110 = vrot.lane.b32.xlu0 %v1104, 1
      %v1111 = vpop.permute.xlu0 %1110
      %1112 = vrot.lane.b32.xlu0 %v1105, 1
      %v1113 = vpop.permute.xlu0 %1112
      %v1114 = vsel %vm377, %v1107, %v1109
      %v1115 = vsel %vm377, %v1109, %v1111
      %v1116 = vsel %vm377, %v1111, %v1113
      %1120 = vst [vmem:[#allocation3 + $0x30] sm:$0xf0] %v1114
      %1121 = vst [vmem:[#allocation3 + $0x38] sm:$0xf0] %v1115
      %1122 = vst [vmem:[#allocation3 + $0x40] sm:$0xf0] %v1116
      %v1123 = vld [vmem:[#allocation2 + $0x28] sm:$0xf]
      %v1124 = vld [vmem:[#allocation2 + $0x30] sm:$0xf]
      %v1125 = vld [vmem:[#allocation2 + $0x38] sm:$0xf]
      %v1126 = vld [vmem:[#allocation2 + $0x40] sm:$0xf]
      %v1131 = vrot.slane %v1123, 4
      %v1132 = vrot.slane %v1124, 4
      %v1133 = vrot.slane %v1125, 4
      %v1134 = vrot.slane %v1126, 4
      %1135 = vrot.lane.b32.xlu0 %v1131, 1
      %v1136 = vpop.permute.xlu0 %1135
      %1137 = vrot.lane.b32.xlu0 %v1132, 1
      %v1138 = vpop.permute.xlu0 %1137
      %1139 = vrot.lane.b32.xlu0 %v1133, 1
      %v1140 = vpop.permute.xlu0 %1139
      %1141 = vrot.lane.b32.xlu0 %v1134, 1
      %v1142 = vpop.permute.xlu0 %1141
      %v1143 = vsel %vm377, %v1136, %v1138
      %v1144 = vsel %vm377, %v1138, %v1140
      %v1145 = vsel %vm377, %v1140, %v1142
      %1149 = vst [vmem:[#allocation3 + $0x48] sm:$0xf0] %v1143
      %1150 = vst [vmem:[#allocation3 + $0x50] sm:$0xf0] %v1144
      %1151 = vst [vmem:[#allocation3 + $0x58] sm:$0xf0] %v1145
      %v1152 = vld [vmem:[#allocation2 + $0x8] sm:$0xf]
      %v1153 = vld [vmem:[#allocation2 + $0x10] sm:$0xf]
      %v1154 = vld [vmem:[#allocation2 + $0x18] sm:$0xf]
      %1155 = vst [vmem:[#allocation3 + $0x60] sm:$0xf] %v1152
      %1156 = vst [vmem:[#allocation3 + $0x68] sm:$0xf] %v1153
      %1157 = vst [vmem:[#allocation3 + $0x70] sm:$0xf] %v1154
      %v1158 = vld [vmem:[#allocation2 + $0x30] sm:$0xf]
      %v1159 = vld [vmem:[#allocation2 + $0x38] sm:$0xf]
      %v1160 = vld [vmem:[#allocation2 + $0x40] sm:$0xf]
      %1161 = vst [vmem:[#allocation3 + $0x78] sm:$0xf] %v1158
      %1162 = vst [vmem:[#allocation3 + $0x80] sm:$0xf] %v1159
      %1163 = vst [vmem:[#allocation3 + $0x88] sm:$0xf] %v1160
      %v1164 = vld [vmem:[#allocation2 + $0x8] sm:$0xf]
      %v1165 = vld [vmem:[#allocation2 + $0x10] sm:$0xf]
      %v1166 = vld [vmem:[#allocation2 + $0x18] sm:$0xf]
      %v1167 = vld [vmem:[#allocation2 + $0x20] sm:$0xf]
      %v1172 = vrot.slane %v1164, 4
      %v1173 = vrot.slane %v1165, 4
      %v1174 = vrot.slane %v1166, 4
      %v1175 = vrot.slane %v1167, 4
      %1176 = vrot.lane.b32.xlu0 %v1172, 127
      %v1177 = vpop.permute.xlu0 %1176
      %1178 = vrot.lane.b32.xlu0 %v1173, 127
      %v1179 = vpop.permute.xlu0 %1178
      %1180 = vrot.lane.b32.xlu0 %v1174, 127
      %v1181 = vpop.permute.xlu0 %1180
      %1182 = vrot.lane.b32.xlu0 %v1175, 127
      %v1183 = vpop.permute.xlu0 %1182
      %v1184 = vsel %vm440, %v1177, %v1179
      %v1185 = vsel %vm440, %v1179, %v1181
      %v1186 = vsel %vm440, %v1181, %v1183
      %1190 = vst [vmem:[#allocation3 + $0x60] sm:$0xf0] %v1184
      %1191 = vst [vmem:[#allocation3 + $0x68] sm:$0xf0] %v1185
      %1192 = vst [vmem:[#allocation3 + $0x70] sm:$0xf0] %v1186
      %v1193 = vld [vmem:[#allocation2 + $0x30] sm:$0xf]
      %v1194 = vld [vmem:[#allocation2 + $0x38] sm:$0xf]
      %v1195 = vld [vmem:[#allocation2 + $0x40] sm:$0xf]
      %v1196 = vld [vmem:[#allocation2 + $0x48] sm:$0xf]
      %v1201 = vrot.slane %v1193, 4
      %v1202 = vrot.slane %v1194, 4
      %v1203 = vrot.slane %v1195, 4
      %v1204 = vrot.slane %v1196, 4
      %1205 = vrot.lane.b32.xlu0 %v1201, 127
      %v1206 = vpop.permute.xlu0 %1205
      %1207 = vrot.lane.b32.xlu0 %v1202, 127
      %v1208 = vpop.permute.xlu0 %1207
      %1209 = vrot.lane.b32.xlu0 %v1203, 127
      %v1210 = vpop.permute.xlu0 %1209
      %1211 = vrot.lane.b32.xlu0 %v1204, 127
      %v1212 = vpop.permute.xlu0 %1211
      %v1213 = vsel %vm440, %v1206, %v1208
      %v1214 = vsel %vm440, %v1208, %v1210
      %v1215 = vsel %vm440, %v1210, %v1212
      %1219 = vst [vmem:[#allocation3 + $0x78] sm:$0xf0] %v1213
      %1220 = vst [vmem:[#allocation3 + $0x80] sm:$0xf0] %v1214
      %1221 = vst [vmem:[#allocation3 + $0x88] sm:$0xf0] %v1215
      %v1222 = vld [vmem:[#allocation2 + $0x8] sm:$0xf]
      %v1223 = vld [vmem:[#allocation2 + $0x10] sm:$0xf]
      %v1224 = vld [vmem:[#allocation2 + $0x18] sm:$0xf]
      %v1225 = vld [vmem:[#allocation2 + $0x20] sm:$0xf]
      %1230 = vrot.lane.b32.xlu0 %v1222, 111
      %v1231 = vpop.permute.xlu0 %1230
      %1232 = vrot.lane.b32.xlu0 %v1223, 111
      %v1233 = vpop.permute.xlu0 %1232
      %1234 = vrot.lane.b32.xlu0 %v1224, 111
      %v1235 = vpop.permute.xlu0 %1234
      %1236 = vrot.lane.b32.xlu0 %v1225, 111
      %v1237 = vpop.permute.xlu0 %1236
      %v1238 = vsel %vm487, %v1231, %v1233
      %v1239 = vsel %vm487, %v1233, %v1235
      %v1240 = vsel %vm487, %v1235, %v1237
      %1244 = vst [vmem:[#allocation3 + $0x90] sm:$0xf] %v1238
      %1245 = vst [vmem:[#allocation3 + $0x98] sm:$0xf] %v1239
      %1246 = vst [vmem:[#allocation3 + $0xa0] sm:$0xf] %v1240
      %v1247 = vld [vmem:[#allocation2 + $0x30] sm:$0xf]
      %v1248 = vld [vmem:[#allocation2 + $0x38] sm:$0xf]
      %v1249 = vld [vmem:[#allocation2 + $0x40] sm:$0xf]
      %v1250 = vld [vmem:[#allocation2 + $0x48] sm:$0xf]
      %1255 = vrot.lane.b32.xlu0 %v1247, 111
      %v1256 = vpop.permute.xlu0 %1255
      %1257 = vrot.lane.b32.xlu0 %v1248, 111
      %v1258 = vpop.permute.xlu0 %1257
      %1259 = vrot.lane.b32.xlu0 %v1249, 111
      %v1260 = vpop.permute.xlu0 %1259
      %1261 = vrot.lane.b32.xlu0 %v1250, 111
      %v1262 = vpop.permute.xlu0 %1261
      %v1263 = vsel %vm487, %v1256, %v1258
      %v1264 = vsel %vm487, %v1258, %v1260
      %v1265 = vsel %vm487, %v1260, %v1262
      %1269 = vst [vmem:[#allocation3 + $0xa8] sm:$0xf] %v1263
      %1270 = vst [vmem:[#allocation3 + $0xb0] sm:$0xf] %v1264
      %1271 = vst [vmem:[#allocation3 + $0xb8] sm:$0xf] %v1265
      %v1272 = vld [vmem:[#allocation2 + $0x8] sm:$0xf]
      %v1273 = vld [vmem:[#allocation2 + $0x10] sm:$0xf]
      %v1274 = vld [vmem:[#allocation2 + $0x18] sm:$0xf]
      %v1275 = vld [vmem:[#allocation2 + $0x20] sm:$0xf]
      %v1280 = vrot.slane %v1272, 4
      %v1281 = vrot.slane %v1273, 4
      %v1282 = vrot.slane %v1274, 4
      %v1283 = vrot.slane %v1275, 4
      %1284 = vrot.lane.b32.xlu0 %v1280, 110
      %v1285 = vpop.permute.xlu0 %1284
      %1286 = vrot.lane.b32.xlu0 %v1281, 110
      %v1287 = vpop.permute.xlu0 %1286
      %1288 = vrot.lane.b32.xlu0 %v1282, 110
      %v1289 = vpop.permute.xlu0 %1288
      %1290 = vrot.lane.b32.xlu0 %v1283, 110
      %v1291 = vpop.permute.xlu0 %1290
      %v1292 = vsel %vm534, %v1285, %v1287
      %v1293 = vsel %vm534, %v1287, %v1289
      %v1294 = vsel %vm534, %v1289, %v1291
      %1298 = vst [vmem:[#allocation3 + $0x90] sm:$0xf0] %v1292
      %1299 = vst [vmem:[#allocation3 + $0x98] sm:$0xf0] %v1293
      %1300 = vst [vmem:[#allocation3 + $0xa0] sm:$0xf0] %v1294
      %v1301 = vld [vmem:[#allocation2 + $0x30] sm:$0xf]
      %v1302 = vld [vmem:[#allocation2 + $0x38] sm:$0xf]
      %v1303 = vld [vmem:[#allocation2 + $0x40] sm:$0xf]
      %v1304 = vld [vmem:[#allocation2 + $0x48] sm:$0xf]
      %v1309 = vrot.slane %v1301, 4
      %v1310 = vrot.slane %v1302, 4
      %v1311 = vrot.slane %v1303, 4
      %v1312 = vrot.slane %v1304, 4
      %1313 = vrot.lane.b32.xlu0 %v1309, 110
      %v1314 = vpop.permute.xlu0 %1313
      %1315 = vrot.lane.b32.xlu0 %v1310, 110
      %v1316 = vpop.permute.xlu0 %1315
      %1317 = vrot.lane.b32.xlu0 %v1311, 110
      %v1318 = vpop.permute.xlu0 %1317
      %1319 = vrot.lane.b32.xlu0 %v1312, 110
      %v1320 = vpop.permute.xlu0 %1319
      %v1321 = vsel %vm534, %v1314, %v1316
      %v1322 = vsel %vm534, %v1316, %v1318
      %v1323 = vsel %vm534, %v1318, %v1320
      %1327 = vst [vmem:[#allocation3 + $0xa8] sm:$0xf0] %v1321
      %1328 = vst [vmem:[#allocation3 + $0xb0] sm:$0xf0] %v1322
      %1329 = vst [vmem:[#allocation3 + $0xb8] sm:$0xf0] %v1323
      %v1330 = vld [vmem:[#allocation2 + $0x8] sm:$0xf]
      %v1331 = vld [vmem:[#allocation2 + $0x10] sm:$0xf]
      %v1332 = vld [vmem:[#allocation2 + $0x18] sm:$0xf]
      %v1333 = vld [vmem:[#allocation2 + $0x20] sm:$0xf]
      %1338 = vrot.lane.b32.xlu0 %v1330, 109
      %v1339 = vpop.permute.xlu0 %1338
      %1340 = vrot.lane.b32.xlu0 %v1331, 109
      %v1341 = vpop.permute.xlu0 %1340
      %1342 = vrot.lane.b32.xlu0 %v1332, 109
      %v1343 = vpop.permute.xlu0 %1342
      %1344 = vrot.lane.b32.xlu0 %v1333, 109
      %v1345 = vpop.permute.xlu0 %1344
      %v1346 = vsel %vm581, %v1339, %v1341
      %v1347 = vsel %vm581, %v1341, %v1343
      %v1348 = vsel %vm581, %v1343, %v1345
      %1352 = vst [vmem:[#allocation3 + $0xc0] sm:$0xf] %v1346
      %1353 = vst [vmem:[#allocation3 + $0xc8] sm:$0xf] %v1347
      %1354 = vst [vmem:[#allocation3 + $0xd0] sm:$0xf] %v1348
      %v1355 = vld [vmem:[#allocation2 + $0x30] sm:$0xf]
      %v1356 = vld [vmem:[#allocation2 + $0x38] sm:$0xf]
      %v1357 = vld [vmem:[#allocation2 + $0x40] sm:$0xf]
      %v1358 = vld [vmem:[#allocation2 + $0x48] sm:$0xf]
      %1363 = vrot.lane.b32.xlu0 %v1355, 109
      %v1364 = vpop.permute.xlu0 %1363
      %1365 = vrot.lane.b32.xlu0 %v1356, 109
      %v1366 = vpop.permute.xlu0 %1365
      %1367 = vrot.lane.b32.xlu0 %v1357, 109
      %v1368 = vpop.permute.xlu0 %1367
      %1369 = vrot.lane.b32.xlu0 %v1358, 109
      %v1370 = vpop.permute.xlu0 %1369
      %v1371 = vsel %vm581, %v1364, %v1366
      %v1372 = vsel %vm581, %v1366, %v1368
      %v1373 = vsel %vm581, %v1368, %v1370
      %1377 = vst [vmem:[#allocation3 + $0xd8] sm:$0xf] %v1371
      %1378 = vst [vmem:[#allocation3 + $0xe0] sm:$0xf] %v1372
      %1379 = vst [vmem:[#allocation3 + $0xe8] sm:$0xf] %v1373
      %v1380 = vld [vmem:[%s2 + $0x8] sm:$0xf]
      %v1381 = vld [vmem:[#allocation3] sm:$0xff]
      %v1382 = vld [vmem:[#allocation3 + $0x8] sm:$0xff]
      %v1383 = vld [vmem:[#allocation3 + $0x10] sm:$0xff]
      %v1384 = vld [vmem:[#allocation3 + $0x18] sm:$0xff]
      %v1385 = vld [vmem:[#allocation3 + $0x20] sm:$0xff]
      %v1386 = vld [vmem:[#allocation3 + $0x28] sm:$0xff]
      %v1387 = vld [vmem:[#allocation3 + $0x30] sm:$0xff]
      %v1388 = vld [vmem:[#allocation3 + $0x38] sm:$0xff]
      %v1389 = vld [vmem:[#allocation3 + $0x40] sm:$0xff]
      %v1390 = vld [vmem:[#allocation3 + $0x48] sm:$0xff]
      %v1391 = vld [vmem:[#allocation3 + $0x50] sm:$0xff]
      %v1392 = vld [vmem:[#allocation3 + $0x58] sm:$0xff]
      %v1393 = vld [vmem:[#allocation3 + $0x60] sm:$0xff]
      %v1394 = vld [vmem:[#allocation3 + $0x68] sm:$0xff]
      %v1395 = vld [vmem:[#allocation3 + $0x70] sm:$0xff]
      %v1396 = vld [vmem:[#allocation3 + $0x78] sm:$0xff]
      %v1397 = vld [vmem:[#allocation3 + $0x80] sm:$0xff]
      %v1398 = vld [vmem:[#allocation3 + $0x88] sm:$0xff]
      %v1399 = vld [vmem:[#allocation3 + $0x90] sm:$0xff]
      %v1400 = vld [vmem:[#allocation3 + $0x98] sm:$0xff]
      %v1401 = vld [vmem:[#allocation3 + $0xa0] sm:$0xff]
      %v1402 = vld [vmem:[#allocation3 + $0xa8] sm:$0xff]
      %v1403 = vld [vmem:[#allocation3 + $0xb0] sm:$0xff]
      %v1404 = vld [vmem:[#allocation3 + $0xb8] sm:$0xff]
      %v1405 = vld [vmem:[#allocation3 + $0xc0] sm:$0xf]
      %v1406 = vld [vmem:[#allocation3 + $0xc8] sm:$0xf]
      %v1407 = vld [vmem:[#allocation3 + $0xd0] sm:$0xf]
      %v1408 = vld [vmem:[#allocation3 + $0xd8] sm:$0xf]
      %v1409 = vld [vmem:[#allocation3 + $0xe0] sm:$0xf]
      %v1410 = vld [vmem:[#allocation3 + $0xe8] sm:$0xf]
      %v1411 = vld [vmem:[%s3 + $0x8] sm:$0xf]
      %1413 = vset.pattern.permute.xlu0 0
      %1414 = vperm.xlu0 %1413, %v1411
      %v1415 = vpop.permute.xlu0 %1414
      %v1418 = vsel %vm651, %v1380, 0
      %v1421 = vsel %vm655, %v1405, 0
      %v1424 = vsel %vm655, %v1406, 0
      %v1427 = vsel %vm655, %v1407, 0
      %v1430 = vsel %vm655, %v1408, 0
      %v1433 = vsel %vm655, %v1409, 0
      %v1436 = vsel %vm655, %v1410, 0
      %1438 = vmatprep.subr.mxu0 0.0
      %1439 = vmatpush1.msra.mxu0 0.0
      %1440 = vmatprep.subr.mxu0 0.0
      %1441 = vmatpush1.msra.mxu0 0.0
      %1442 = vmatprep.subr.mxu0 0.0
      %1443 = vmatpush1.msra.mxu0 0.0
      %1444 = vmatprep.subr.mxu0 0.0
      %1445 = vmatpush1.msra.mxu0 0.0
      %1446 = vmatprep.subr.mxu0 0.0
      %1447 = vmatpush1.msra.mxu0 0.0
      %1448 = vmatprep.subr.mxu0 0.0
      %1449 = vmatpush1.msra.mxu0 0.0
      %1450 = vmatprep.subr.mxu0 0.0
      %1451 = vmatpush1.msra.mxu0 0.0
      %1452 = vmatprep.subr.mxu0 0.0
      %1453 = vmatpush1.msra.mxu0 0.0
      %1454 = vmatprep.subr.mxu0 0.0
      %1455 = vmatpush1.msra.mxu0 0.0
      %1456 = vmatprep.subr.mxu0 0.0
      %1457 = vmatpush1.msra.mxu0 0.0
      %1458 = vmatprep.subr.mxu0 0.0
      %1459 = vmatpush1.msra.mxu0 0.0
      %1460 = vmatprep.subr.mxu0 %v1424
      %1461 = vmatpush1.msra.mxu0 %v1421
      %1462 = vmatprep.subr.mxu0 %v1400
      %1463 = vmatpush1.msra.mxu0 %v1399
      %1464 = vmatprep.subr.mxu0 %v1394
      %1465 = vmatpush1.msra.mxu0 %v1393
      %1466 = vmatprep.subr.mxu0 %v1388
      %1467 = vmatpush1.msra.mxu0 %v1387
      %1468 = vmatprep.subr.mxu0 %v1382
      %1469 = vmatpush1.msra.mxu0 %v1381
      %1470 = vmatprep.subr.mxu0 0.0
      %1471 = vmatpush2.msra.mxu0 0.0
      %1472 = vmatprep.subr.mxu0 0.0
      %1473 = vmatpush2.msra.mxu0 0.0
      %1474 = vmatprep.subr.mxu0 0.0
      %1475 = vmatpush2.msra.mxu0 0.0
      %1476 = vmatprep.subr.mxu0 0.0
      %1477 = vmatpush2.msra.mxu0 0.0
      %1478 = vmatprep.subr.mxu0 0.0
      %1479 = vmatpush2.msra.mxu0 0.0
      %1480 = vmatprep.subr.mxu0 0.0
      %1481 = vmatpush2.msra.mxu0 0.0
      %1482 = vmatprep.subr.mxu0 0.0
      %1483 = vmatpush2.msra.mxu0 0.0
      %1484 = vmatprep.subr.mxu0 0.0
      %1485 = vmatpush2.msra.mxu0 0.0
      %1486 = vmatprep.subr.mxu0 0.0
      %1487 = vmatpush2.msra.mxu0 0.0
      %1488 = vmatprep.subr.mxu0 0.0
      %1489 = vmatpush2.msra.mxu0 0.0
      %1490 = vmatprep.subr.mxu0 0.0
      %1491 = vmatpush2.msra.mxu0 0.0
      %1492 = vmatprep.subr.mxu0 0.0
      %1493 = vmatpush2.msra.mxu0 0.0
      %1494 = vmatprep.subr.mxu0 0.0
      %1495 = vmatpush2.msra.mxu0 0.0
      %1496 = vmatprep.subr.mxu0 0.0
      %1497 = vmatpush2.msra.mxu0 0.0
      %1498 = vmatprep.subr.mxu0 0.0
      %1499 = vmatpush2.msra.mxu0 0.0
      %1500 = vmatprep.subr.mxu0 0.0
      %1501 = vmatpush2.msra.mxu0 0.0
      %1502 = vmatprep.mubr.f32.mxu0 0.0
      %1503 = vmatmul.mubr.f32.gmra.mxu0 %v1418
      %v1504 = vpop.f32.mrf.mxu0
      %v1505 = vadd.f32 %v1415, %v1504
      %v1506 = vpop.f32.mrf.mxu0
      %v1507 = vadd.f32 %v1415, %v1506
      %1508 = vdwg.mxu0
      %1509 = vmatprep.subr.mxu0 0.0
      %1510 = vmatpush1.msra.mxu0 0.0
      %1511 = vmatprep.subr.mxu0 0.0
      %1512 = vmatpush1.msra.mxu0 0.0
      %1513 = vmatprep.subr.mxu0 0.0
      %1514 = vmatpush1.msra.mxu0 0.0
      %1515 = vmatprep.subr.mxu0 0.0
      %1516 = vmatpush1.msra.mxu0 0.0
      %1517 = vmatprep.subr.mxu0 0.0
      %1518 = vmatpush1.msra.mxu0 0.0
      %1519 = vmatprep.subr.mxu0 0.0
      %1520 = vmatpush1.msra.mxu0 0.0
      %1521 = vmatprep.subr.mxu0 0.0
      %1522 = vmatpush1.msra.mxu0 0.0
      %1523 = vmatprep.subr.mxu0 0.0
      %1524 = vmatpush1.msra.mxu0 0.0
      %1525 = vmatprep.subr.mxu0 0.0
      %1526 = vmatpush1.msra.mxu0 0.0
      %1527 = vmatprep.subr.mxu0 0.0
      %1528 = vmatpush1.msra.mxu0 0.0
      %1529 = vmatprep.subr.mxu0 0.0
      %1530 = vmatpush1.msra.mxu0 0.0
      %1531 = vmatprep.subr.mxu0 %v1430
      %1532 = vmatpush1.msra.mxu0 %v1427
      %1533 = vmatprep.subr.mxu0 %v1402
      %1534 = vmatpush1.msra.mxu0 %v1401
      %1535 = vmatprep.subr.mxu0 %v1396
      %1536 = vmatpush1.msra.mxu0 %v1395
      %1537 = vmatprep.subr.mxu0 %v1390
      %1538 = vmatpush1.msra.mxu0 %v1389
      %1539 = vmatprep.subr.mxu0 %v1384
      %1540 = vmatpush1.msra.mxu0 %v1383
      %1541 = vmatprep.subr.mxu0 0.0
      %1542 = vmatpush2.msra.mxu0 0.0
      %1543 = vmatprep.subr.mxu0 0.0
      %1544 = vmatpush2.msra.mxu0 0.0
      %1545 = vmatprep.subr.mxu0 0.0
      %1546 = vmatpush2.msra.mxu0 0.0
      %1547 = vmatprep.subr.mxu0 0.0
      %1548 = vmatpush2.msra.mxu0 0.0
      %1549 = vmatprep.subr.mxu0 0.0
      %1550 = vmatpush2.msra.mxu0 0.0
      %1551 = vmatprep.subr.mxu0 0.0
      %1552 = vmatpush2.msra.mxu0 0.0
      %1553 = vmatprep.subr.mxu0 0.0
      %1554 = vmatpush2.msra.mxu0 0.0
      %1555 = vmatprep.subr.mxu0 0.0
      %1556 = vmatpush2.msra.mxu0 0.0
      %1557 = vmatprep.subr.mxu0 0.0
      %1558 = vmatpush2.msra.mxu0 0.0
      %1559 = vmatprep.subr.mxu0 0.0
      %1560 = vmatpush2.msra.mxu0 0.0
      %1561 = vmatprep.subr.mxu0 0.0
      %1562 = vmatpush2.msra.mxu0 0.0
      %1563 = vmatprep.subr.mxu0 0.0
      %1564 = vmatpush2.msra.mxu0 0.0
      %1565 = vmatprep.subr.mxu0 0.0
      %1566 = vmatpush2.msra.mxu0 0.0
      %1567 = vmatprep.subr.mxu0 0.0
      %1568 = vmatpush2.msra.mxu0 0.0
      %1569 = vmatprep.subr.mxu0 0.0
      %1570 = vmatpush2.msra.mxu0 0.0
      %1571 = vmatprep.subr.mxu0 0.0
      %1572 = vmatpush2.msra.mxu0 0.0
      %1573 = vmatprep.mubr.f32.mxu0 0.0
      %1574 = vmatmul.mubr.f32.gmra.mxu0 %v1418
      %v1575 = vpop.f32.mrf.mxu0
      %v1576 = vadd.f32 %v1415, %v1575
      %v1577 = vpop.f32.mrf.mxu0
      %v1578 = vadd.f32 %v1415, %v1577
      %1579 = vdwg.mxu0
      %1580 = vmatprep.subr.mxu0 0.0
      %1581 = vmatpush1.msra.mxu0 0.0
      %1582 = vmatprep.subr.mxu0 0.0
      %1583 = vmatpush1.msra.mxu0 0.0
      %1584 = vmatprep.subr.mxu0 0.0
      %1585 = vmatpush1.msra.mxu0 0.0
      %1586 = vmatprep.subr.mxu0 0.0
      %1587 = vmatpush1.msra.mxu0 0.0
      %1588 = vmatprep.subr.mxu0 0.0
      %1589 = vmatpush1.msra.mxu0 0.0
      %1590 = vmatprep.subr.mxu0 0.0
      %1591 = vmatpush1.msra.mxu0 0.0
      %1592 = vmatprep.subr.mxu0 0.0
      %1593 = vmatpush1.msra.mxu0 0.0
      %1594 = vmatprep.subr.mxu0 0.0
      %1595 = vmatpush1.msra.mxu0 0.0
      %1596 = vmatprep.subr.mxu0 0.0
      %1597 = vmatpush1.msra.mxu0 0.0
      %1598 = vmatprep.subr.mxu0 0.0
      %1599 = vmatpush1.msra.mxu0 0.0
      %1600 = vmatprep.subr.mxu0 0.0
      %1601 = vmatpush1.msra.mxu0 0.0
      %1602 = vmatprep.subr.mxu0 %v1436
      %1603 = vmatpush1.msra.mxu0 %v1433
      %1604 = vmatprep.subr.mxu0 %v1404
      %1605 = vmatpush1.msra.mxu0 %v1403
      %1606 = vmatprep.subr.mxu0 %v1398
      %1607 = vmatpush1.msra.mxu0 %v1397
      %1608 = vmatprep.subr.mxu0 %v1392
      %1609 = vmatpush1.msra.mxu0 %v1391
      %1610 = vmatprep.subr.mxu0 %v1386
      %1611 = vmatpush1.msra.mxu0 %v1385
      %1612 = vmatprep.subr.mxu0 0.0
      %1613 = vmatpush2.msra.mxu0 0.0
      %1614 = vmatprep.subr.mxu0 0.0
      %1615 = vmatpush2.msra.mxu0 0.0
      %1616 = vmatprep.subr.mxu0 0.0
      %1617 = vmatpush2.msra.mxu0 0.0
      %1618 = vmatprep.subr.mxu0 0.0
      %1619 = vmatpush2.msra.mxu0 0.0
      %1620 = vmatprep.subr.mxu0 0.0
      %1621 = vmatpush2.msra.mxu0 0.0
      %1622 = vmatprep.subr.mxu0 0.0
      %1623 = vmatpush2.msra.mxu0 0.0
      %1624 = vmatprep.subr.mxu0 0.0
      %1625 = vmatpush2.msra.mxu0 0.0
      %1626 = vmatprep.subr.mxu0 0.0
      %1627 = vmatpush2.msra.mxu0 0.0
      %1628 = vmatprep.subr.mxu0 0.0
      %1629 = vmatpush2.msra.mxu0 0.0
      %1630 = vmatprep.subr.mxu0 0.0
      %1631 = vmatpush2.msra.mxu0 0.0
      %1632 = vmatprep.subr.mxu0 0.0
      %1633 = vmatpush2.msra.mxu0 0.0
      %1634 = vmatprep.subr.mxu0 0.0
      %1635 = vmatpush2.msra.mxu0 0.0
      %1636 = vmatprep.subr.mxu0 0.0
      %1637 = vmatpush2.msra.mxu0 0.0
      %1638 = vmatprep.subr.mxu0 0.0
      %1639 = vmatpush2.msra.mxu0 0.0
      %1640 = vmatprep.subr.mxu0 0.0
      %1641 = vmatpush2.msra.mxu0 0.0
      %1642 = vmatprep.subr.mxu0 0.0
      %1643 = vmatpush2.msra.mxu0 0.0
      %1644 = vmatprep.mubr.f32.mxu0 0.0
      %1645 = vmatmul.mubr.f32.gmra.mxu0 %v1418
      %v1646 = vpop.f32.mrf.mxu0
      %v1647 = vadd.f32 %v1415, %v1646
      %v1648 = vpop.f32.mrf.mxu0
      %v1649 = vadd.f32 %v1415, %v1648
      %1650 = vdwg.mxu0
      %v1651 = vmax.f32 %v1505, 0.0
      %v1652 = vmax.f32 %v1507, 0.0
      %v1653 = vmax.f32 %v1576, 0.0
      %v1654 = vmax.f32 %v1578, 0.0
      %v1655 = vmax.f32 %v1647, 0.0
      %v1656 = vmax.f32 %v1649, 0.0
      %v1657 = vmul.f32 %v1651, %v897
      %v1658 = vmul.f32 %v1652, %v901
      %v1659 = vmul.f32 %v1653, %v905
      %v1660 = vmul.f32 %v1654, %v909
      %v1661 = vmul.f32 %v1655, %v913
      %v1662 = vmul.f32 %v1656, %v917
      %v1666 = vrot.slane %v1657, 4
      %v1667 = vrot.slane %v1658, 4
      %v1668 = vrot.slane %v1659, 4
      %1672 = vst [vmem:[#allocation2 + $0x8] sm:$0xf0] %v1666
      %1673 = vst [vmem:[#allocation2 + $0x10] sm:$0xf0] %v1667
      %1674 = vst [vmem:[#allocation2 + $0x18] sm:$0xf0] %v1668
      %v1678 = vrot.slane %v1660, 4
      %v1679 = vrot.slane %v1661, 4
      %v1680 = vrot.slane %v1662, 4
      %1684 = vst [vmem:[#allocation2 + $0x30] sm:$0xf0] %v1678
      %1685 = vst [vmem:[#allocation2 + $0x38] sm:$0xf0] %v1679
      %1686 = vst [vmem:[#allocation2 + $0x40] sm:$0xf0] %v1680
      %v1687 = vld [vmem:[#allocation2] sm:$0xf0]
      %v1688 = vld [vmem:[#allocation2 + $0x8] sm:$0xf0]
      %v1689 = vld [vmem:[#allocation2 + $0x10] sm:$0xf0]
      %v1690 = vld [vmem:[#allocation2 + $0x18] sm:$0xf0]
      %1695 = vrot.lane.b32.xlu0 %v1687, 19
      %v1696 = vpop.permute.xlu0 %1695
      %1697 = vrot.lane.b32.xlu0 %v1688, 19
      %v1698 = vpop.permute.xlu0 %1697
      %1699 = vrot.lane.b32.xlu0 %v1689, 19
      %v1700 = vpop.permute.xlu0 %1699
      %1701 = vrot.lane.b32.xlu0 %v1690, 19
      %v1702 = vpop.permute.xlu0 %1701
      %v1703 = vsel %vm235, %v1696, %v1698
      %v1704 = vsel %vm235, %v1698, %v1700
      %v1705 = vsel %vm235, %v1700, %v1702
      %1709 = vst [vmem:[#allocation3 + $0xc0] sm:$0xf0] %v1703
      %1710 = vst [vmem:[#allocation3 + $0xc8] sm:$0xf0] %v1704
      %1711 = vst [vmem:[#allocation3 + $0xd0] sm:$0xf0] %v1705
      %v1712 = vld [vmem:[#allocation2 + $0x28] sm:$0xf0]
      %v1713 = vld [vmem:[#allocation2 + $0x30] sm:$0xf0]
      %v1714 = vld [vmem:[#allocation2 + $0x38] sm:$0xf0]
      %v1715 = vld [vmem:[#allocation2 + $0x40] sm:$0xf0]
      %1720 = vrot.lane.b32.xlu0 %v1712, 19
      %v1721 = vpop.permute.xlu0 %1720
      %1722 = vrot.lane.b32.xlu0 %v1713, 19
      %v1723 = vpop.permute.xlu0 %1722
      %1724 = vrot.lane.b32.xlu0 %v1714, 19
      %v1725 = vpop.permute.xlu0 %1724
      %1726 = vrot.lane.b32.xlu0 %v1715, 19
      %v1727 = vpop.permute.xlu0 %1726
      %v1728 = vsel %vm235, %v1721, %v1723
      %v1729 = vsel %vm235, %v1723, %v1725
      %v1730 = vsel %vm235, %v1725, %v1727
      %1734 = vst [vmem:[#allocation3 + $0xd8] sm:$0xf0] %v1728
      %1735 = vst [vmem:[#allocation3 + $0xe0] sm:$0xf0] %v1729
      %1736 = vst [vmem:[#allocation3 + $0xe8] sm:$0xf0] %v1730
      %v1737 = vld [vmem:[#allocation2] sm:$0xf0]
      %v1738 = vld [vmem:[#allocation2 + $0x8] sm:$0xf0]
      %v1739 = vld [vmem:[#allocation2 + $0x10] sm:$0xf0]
      %v1740 = vld [vmem:[#allocation2 + $0x18] sm:$0xf0]
      %v1745 = vrot.slane %v1737, 4
      %v1746 = vrot.slane %v1738, 4
      %v1747 = vrot.slane %v1739, 4
      %v1748 = vrot.slane %v1740, 4
      %1749 = vrot.lane.b32.xlu0 %v1745, 18
      %v1750 = vpop.permute.xlu0 %1749
      %1751 = vrot.lane.b32.xlu0 %v1746, 18
      %v1752 = vpop.permute.xlu0 %1751
      %1753 = vrot.lane.b32.xlu0 %v1747, 18
      %v1754 = vpop.permute.xlu0 %1753
      %1755 = vrot.lane.b32.xlu0 %v1748, 18
      %v1756 = vpop.permute.xlu0 %1755
      %v1757 = vsel %vm283, %v1750, %v1752
      %v1758 = vsel %vm283, %v1752, %v1754
      %v1759 = vsel %vm283, %v1754, %v1756
      %1763 = vst [vmem:[#allocation3 + $0xf0] sm:$0xf] %v1757
      %1764 = vst [vmem:[#allocation3 + $0xf8] sm:$0xf] %v1758
      %1765 = vst [vmem:[#allocation3 + $0x100] sm:$0xf] %v1759
      %v1766 = vld [vmem:[#allocation2 + $0x28] sm:$0xf0]
      %v1767 = vld [vmem:[#allocation2 + $0x30] sm:$0xf0]
      %v1768 = vld [vmem:[#allocation2 + $0x38] sm:$0xf0]
      %v1769 = vld [vmem:[#allocation2 + $0x40] sm:$0xf0]
      %v1774 = vrot.slane %v1766, 4
      %v1775 = vrot.slane %v1767, 4
      %v1776 = vrot.slane %v1768, 4
      %v1777 = vrot.slane %v1769, 4
      %1778 = vrot.lane.b32.xlu0 %v1774, 18
      %v1779 = vpop.permute.xlu0 %1778
      %1780 = vrot.lane.b32.xlu0 %v1775, 18
      %v1781 = vpop.permute.xlu0 %1780
      %1782 = vrot.lane.b32.xlu0 %v1776, 18
      %v1783 = vpop.permute.xlu0 %1782
      %1784 = vrot.lane.b32.xlu0 %v1777, 18
      %v1785 = vpop.permute.xlu0 %1784
      %v1786 = vsel %vm283, %v1779, %v1781
      %v1787 = vsel %vm283, %v1781, %v1783
      %v1788 = vsel %vm283, %v1783, %v1785
      %1792 = vst [vmem:[#allocation3 + $0x108] sm:$0xf] %v1786
      %1793 = vst [vmem:[#allocation3 + $0x110] sm:$0xf] %v1787
      %1794 = vst [vmem:[#allocation3 + $0x118] sm:$0xf] %v1788
      %v1795 = vld [vmem:[#allocation2] sm:$0xf0]
      %v1796 = vld [vmem:[#allocation2 + $0x8] sm:$0xf0]
      %v1797 = vld [vmem:[#allocation2 + $0x10] sm:$0xf0]
      %v1798 = vld [vmem:[#allocation2 + $0x18] sm:$0xf0]
      %1803 = vrot.lane.b32.xlu0 %v1795, 17
      %v1804 = vpop.permute.xlu0 %1803
      %1805 = vrot.lane.b32.xlu0 %v1796, 17
      %v1806 = vpop.permute.xlu0 %1805
      %1807 = vrot.lane.b32.xlu0 %v1797, 17
      %v1808 = vpop.permute.xlu0 %1807
      %1809 = vrot.lane.b32.xlu0 %v1798, 17
      %v1810 = vpop.permute.xlu0 %1809
      %v1811 = vsel %vm330, %v1804, %v1806
      %v1812 = vsel %vm330, %v1806, %v1808
      %v1813 = vsel %vm330, %v1808, %v1810
      %1817 = vst [vmem:[#allocation3 + $0xf0] sm:$0xf0] %v1811
      %1818 = vst [vmem:[#allocation3 + $0xf8] sm:$0xf0] %v1812
      %1819 = vst [vmem:[#allocation3 + $0x100] sm:$0xf0] %v1813
      %v1820 = vld [vmem:[#allocation2 + $0x28] sm:$0xf0]
      %v1821 = vld [vmem:[#allocation2 + $0x30] sm:$0xf0]
      %v1822 = vld [vmem:[#allocation2 + $0x38] sm:$0xf0]
      %v1823 = vld [vmem:[#allocation2 + $0x40] sm:$0xf0]
      %1828 = vrot.lane.b32.xlu0 %v1820, 17
      %v1829 = vpop.permute.xlu0 %1828
      %1830 = vrot.lane.b32.xlu0 %v1821, 17
      %v1831 = vpop.permute.xlu0 %1830
      %1832 = vrot.lane.b32.xlu0 %v1822, 17
      %v1833 = vpop.permute.xlu0 %1832
      %1834 = vrot.lane.b32.xlu0 %v1823, 17
      %v1835 = vpop.permute.xlu0 %1834
      %v1836 = vsel %vm330, %v1829, %v1831
      %v1837 = vsel %vm330, %v1831, %v1833
      %v1838 = vsel %vm330, %v1833, %v1835
      %1842 = vst [vmem:[#allocation3 + $0x108] sm:$0xf0] %v1836
      %1843 = vst [vmem:[#allocation3 + $0x110] sm:$0xf0] %v1837
      %1844 = vst [vmem:[#allocation3 + $0x118] sm:$0xf0] %v1838
      %v1845 = vld [vmem:[#allocation2] sm:$0xf0]
      %v1846 = vld [vmem:[#allocation2 + $0x8] sm:$0xf0]
      %v1847 = vld [vmem:[#allocation2 + $0x10] sm:$0xf0]
      %v1848 = vld [vmem:[#allocation2 + $0x18] sm:$0xf0]
      %v1853 = vrot.slane %v1845, 4
      %v1854 = vrot.slane %v1846, 4
      %v1855 = vrot.slane %v1847, 4
      %v1856 = vrot.slane %v1848, 4
      %1857 = vrot.lane.b32.xlu0 %v1853, 1
      %v1858 = vpop.permute.xlu0 %1857
      %1859 = vrot.lane.b32.xlu0 %v1854, 1
      %v1860 = vpop.permute.xlu0 %1859
      %1861 = vrot.lane.b32.xlu0 %v1855, 1
      %v1862 = vpop.permute.xlu0 %1861
      %1863 = vrot.lane.b32.xlu0 %v1856, 1
      %v1864 = vpop.permute.xlu0 %1863
      %v1865 = vsel %vm377, %v1858, %v1860
      %v1866 = vsel %vm377, %v1860, %v1862
      %v1867 = vsel %vm377, %v1862, %v1864
      %1871 = vst [vmem:[#allocation3 + $0x120] sm:$0xf] %v1865
      %1872 = vst [vmem:[#allocation3 + $0x128] sm:$0xf] %v1866
      %1873 = vst [vmem:[#allocation3 + $0x130] sm:$0xf] %v1867
      %v1874 = vld [vmem:[#allocation2 + $0x28] sm:$0xf0]
      %v1875 = vld [vmem:[#allocation2 + $0x30] sm:$0xf0]
      %v1876 = vld [vmem:[#allocation2 + $0x38] sm:$0xf0]
      %v1877 = vld [vmem:[#allocation2 + $0x40] sm:$0xf0]
      %v1882 = vrot.slane %v1874, 4
      %v1883 = vrot.slane %v1875, 4
      %v1884 = vrot.slane %v1876, 4
      %v1885 = vrot.slane %v1877, 4
      %1886 = vrot.lane.b32.xlu0 %v1882, 1
      %v1887 = vpop.permute.xlu0 %1886
      %1888 = vrot.lane.b32.xlu0 %v1883, 1
      %v1889 = vpop.permute.xlu0 %1888
      %1890 = vrot.lane.b32.xlu0 %v1884, 1
      %v1891 = vpop.permute.xlu0 %1890
      %1892 = vrot.lane.b32.xlu0 %v1885, 1
      %v1893 = vpop.permute.xlu0 %1892
      %v1894 = vsel %vm377, %v1887, %v1889
      %v1895 = vsel %vm377, %v1889, %v1891
      %v1896 = vsel %vm377, %v1891, %v1893
      %1900 = vst [vmem:[#allocation3 + $0x138] sm:$0xf] %v1894
      %1901 = vst [vmem:[#allocation3 + $0x140] sm:$0xf] %v1895
      %1902 = vst [vmem:[#allocation3 + $0x148] sm:$0xf] %v1896
      %v1903 = vld [vmem:[#allocation2 + $0x8] sm:$0xf0]
      %v1904 = vld [vmem:[#allocation2 + $0x10] sm:$0xf0]
      %v1905 = vld [vmem:[#allocation2 + $0x18] sm:$0xf0]
      %1906 = vst [vmem:[#allocation3 + $0x120] sm:$0xf0] %v1903
      %1907 = vst [vmem:[#allocation3 + $0x128] sm:$0xf0] %v1904
      %1908 = vst [vmem:[#allocation3 + $0x130] sm:$0xf0] %v1905
      %v1909 = vld [vmem:[#allocation2 + $0x30] sm:$0xf0]
      %v1910 = vld [vmem:[#allocation2 + $0x38] sm:$0xf0]
      %v1911 = vld [vmem:[#allocation2 + $0x40] sm:$0xf0]
      %1912 = vst [vmem:[#allocation3 + $0x138] sm:$0xf0] %v1909
      %1913 = vst [vmem:[#allocation3 + $0x140] sm:$0xf0] %v1910
      %1914 = vst [vmem:[#allocation3 + $0x148] sm:$0xf0] %v1911
      %v1915 = vld [vmem:[#allocation2 + $0x8] sm:$0xf0]
      %v1916 = vld [vmem:[#allocation2 + $0x10] sm:$0xf0]
      %v1917 = vld [vmem:[#allocation2 + $0x18] sm:$0xf0]
      %v1918 = vld [vmem:[#allocation2 + $0x20] sm:$0xf0]
      %v1923 = vrot.slane %v1915, 4
      %v1924 = vrot.slane %v1916, 4
      %v1925 = vrot.slane %v1917, 4
      %v1926 = vrot.slane %v1918, 4
      %1927 = vrot.lane.b32.xlu0 %v1923, 127
      %v1928 = vpop.permute.xlu0 %1927
      %1929 = vrot.lane.b32.xlu0 %v1924, 127
      %v1930 = vpop.permute.xlu0 %1929
      %1931 = vrot.lane.b32.xlu0 %v1925, 127
      %v1932 = vpop.permute.xlu0 %1931
      %1933 = vrot.lane.b32.xlu0 %v1926, 127
      %v1934 = vpop.permute.xlu0 %1933
      %v1935 = vsel %vm440, %v1928, %v1930
      %v1936 = vsel %vm440, %v1930, %v1932
      %v1937 = vsel %vm440, %v1932, %v1934
      %1941 = vst [vmem:[#allocation3 + $0x150] sm:$0xf] %v1935
      %1942 = vst [vmem:[#allocation3 + $0x158] sm:$0xf] %v1936
      %1943 = vst [vmem:[#allocation3 + $0x160] sm:$0xf] %v1937
      %v1944 = vld [vmem:[#allocation2 + $0x30] sm:$0xf0]
      %v1945 = vld [vmem:[#allocation2 + $0x38] sm:$0xf0]
      %v1946 = vld [vmem:[#allocation2 + $0x40] sm:$0xf0]
      %v1947 = vld [vmem:[#allocation2 + $0x48] sm:$0xf0]
      %v1952 = vrot.slane %v1944, 4
      %v1953 = vrot.slane %v1945, 4
      %v1954 = vrot.slane %v1946, 4
      %v1955 = vrot.slane %v1947, 4
      %1956 = vrot.lane.b32.xlu0 %v1952, 127
      %v1957 = vpop.permute.xlu0 %1956
      %1958 = vrot.lane.b32.xlu0 %v1953, 127
      %v1959 = vpop.permute.xlu0 %1958
      %1960 = vrot.lane.b32.xlu0 %v1954, 127
      %v1961 = vpop.permute.xlu0 %1960
      %1962 = vrot.lane.b32.xlu0 %v1955, 127
      %v1963 = vpop.permute.xlu0 %1962
      %v1964 = vsel %vm440, %v1957, %v1959
      %v1965 = vsel %vm440, %v1959, %v1961
      %v1966 = vsel %vm440, %v1961, %v1963
      %1970 = vst [vmem:[#allocation3 + $0x168] sm:$0xf] %v1964
      %1971 = vst [vmem:[#allocation3 + $0x170] sm:$0xf] %v1965
      %1972 = vst [vmem:[#allocation3 + $0x178] sm:$0xf] %v1966
      %v1973 = vld [vmem:[#allocation2 + $0x8] sm:$0xf0]
      %v1974 = vld [vmem:[#allocation2 + $0x10] sm:$0xf0]
      %v1975 = vld [vmem:[#allocation2 + $0x18] sm:$0xf0]
      %v1976 = vld [vmem:[#allocation2 + $0x20] sm:$0xf0]
      %1981 = vrot.lane.b32.xlu0 %v1973, 111
      %v1982 = vpop.permute.xlu0 %1981
      %1983 = vrot.lane.b32.xlu0 %v1974, 111
      %v1984 = vpop.permute.xlu0 %1983
      %1985 = vrot.lane.b32.xlu0 %v1975, 111
      %v1986 = vpop.permute.xlu0 %1985
      %1987 = vrot.lane.b32.xlu0 %v1976, 111
      %v1988 = vpop.permute.xlu0 %1987
      %v1989 = vsel %vm487, %v1982, %v1984
      %v1990 = vsel %vm487, %v1984, %v1986
      %v1991 = vsel %vm487, %v1986, %v1988
      %1995 = vst [vmem:[#allocation3 + $0x150] sm:$0xf0] %v1989
      %1996 = vst [vmem:[#allocation3 + $0x158] sm:$0xf0] %v1990
      %1997 = vst [vmem:[#allocation3 + $0x160] sm:$0xf0] %v1991
      %v1998 = vld [vmem:[#allocation2 + $0x30] sm:$0xf0]
      %v1999 = vld [vmem:[#allocation2 + $0x38] sm:$0xf0]
      %v2000 = vld [vmem:[#allocation2 + $0x40] sm:$0xf0]
      %v2001 = vld [vmem:[#allocation2 + $0x48] sm:$0xf0]
      %2006 = vrot.lane.b32.xlu0 %v1998, 111
      %v2007 = vpop.permute.xlu0 %2006
      %2008 = vrot.lane.b32.xlu0 %v1999, 111
      %v2009 = vpop.permute.xlu0 %2008
      %2010 = vrot.lane.b32.xlu0 %v2000, 111
      %v2011 = vpop.permute.xlu0 %2010
      %2012 = vrot.lane.b32.xlu0 %v2001, 111
      %v2013 = vpop.permute.xlu0 %2012
      %v2014 = vsel %vm487, %v2007, %v2009
      %v2015 = vsel %vm487, %v2009, %v2011
      %v2016 = vsel %vm487, %v2011, %v2013
      %2020 = vst [vmem:[#allocation3 + $0x168] sm:$0xf0] %v2014
      %2021 = vst [vmem:[#allocation3 + $0x170] sm:$0xf0] %v2015
      %2022 = vst [vmem:[#allocation3 + $0x178] sm:$0xf0] %v2016
      %v2023 = vld [vmem:[#allocation2 + $0x8] sm:$0xf0]
      %v2024 = vld [vmem:[#allocation2 + $0x10] sm:$0xf0]
      %v2025 = vld [vmem:[#allocation2 + $0x18] sm:$0xf0]
      %v2026 = vld [vmem:[#allocation2 + $0x20] sm:$0xf0]
      %v2031 = vrot.slane %v2023, 4
      %v2032 = vrot.slane %v2024, 4
      %v2033 = vrot.slane %v2025, 4
      %v2034 = vrot.slane %v2026, 4
      %2035 = vrot.lane.b32.xlu0 %v2031, 110
      %v2036 = vpop.permute.xlu0 %2035
      %2037 = vrot.lane.b32.xlu0 %v2032, 110
      %v2038 = vpop.permute.xlu0 %2037
      %2039 = vrot.lane.b32.xlu0 %v2033, 110
      %v2040 = vpop.permute.xlu0 %2039
      %2041 = vrot.lane.b32.xlu0 %v2034, 110
      %v2042 = vpop.permute.xlu0 %2041
      %v2043 = vsel %vm534, %v2036, %v2038
      %v2044 = vsel %vm534, %v2038, %v2040
      %v2045 = vsel %vm534, %v2040, %v2042
      %2049 = vst [vmem:[#allocation3 + $0x180] sm:$0xf] %v2043
      %2050 = vst [vmem:[#allocation3 + $0x188] sm:$0xf] %v2044
      %2051 = vst [vmem:[#allocation3 + $0x190] sm:$0xf] %v2045
      %v2052 = vld [vmem:[#allocation2 + $0x30] sm:$0xf0]
      %v2053 = vld [vmem:[#allocation2 + $0x38] sm:$0xf0]
      %v2054 = vld [vmem:[#allocation2 + $0x40] sm:$0xf0]
      %v2055 = vld [vmem:[#allocation2 + $0x48] sm:$0xf0]
      %v2060 = vrot.slane %v2052, 4
      %v2061 = vrot.slane %v2053, 4
      %v2062 = vrot.slane %v2054, 4
      %v2063 = vrot.slane %v2055, 4
      %2064 = vrot.lane.b32.xlu0 %v2060, 110
      %v2065 = vpop.permute.xlu0 %2064
      %2066 = vrot.lane.b32.xlu0 %v2061, 110
      %v2067 = vpop.permute.xlu0 %2066
      %2068 = vrot.lane.b32.xlu0 %v2062, 110
      %v2069 = vpop.permute.xlu0 %2068
      %2070 = vrot.lane.b32.xlu0 %v2063, 110
      %v2071 = vpop.permute.xlu0 %2070
      %v2072 = vsel %vm534, %v2065, %v2067
      %v2073 = vsel %vm534, %v2067, %v2069
      %v2074 = vsel %vm534, %v2069, %v2071
      %2078 = vst [vmem:[#allocation3 + $0x198] sm:$0xf] %v2072
      %2079 = vst [vmem:[#allocation3 + $0x1a0] sm:$0xf] %v2073
      %2080 = vst [vmem:[#allocation3 + $0x1a8] sm:$0xf] %v2074
      %v2081 = vld [vmem:[#allocation2 + $0x8] sm:$0xf0]
      %v2082 = vld [vmem:[#allocation2 + $0x10] sm:$0xf0]
      %v2083 = vld [vmem:[#allocation2 + $0x18] sm:$0xf0]
      %v2084 = vld [vmem:[#allocation2 + $0x20] sm:$0xf0]
      %2089 = vrot.lane.b32.xlu0 %v2081, 109
      %v2090 = vpop.permute.xlu0 %2089
      %2091 = vrot.lane.b32.xlu0 %v2082, 109
      %v2092 = vpop.permute.xlu0 %2091
      %2093 = vrot.lane.b32.xlu0 %v2083, 109
      %v2094 = vpop.permute.xlu0 %2093
      %2095 = vrot.lane.b32.xlu0 %v2084, 109
      %v2096 = vpop.permute.xlu0 %2095
      %v2097 = vsel %vm581, %v2090, %v2092
      %v2098 = vsel %vm581, %v2092, %v2094
      %v2099 = vsel %vm581, %v2094, %v2096
      %2103 = vst [vmem:[#allocation3 + $0x180] sm:$0xf0] %v2097
      %2104 = vst [vmem:[#allocation3 + $0x188] sm:$0xf0] %v2098
      %2105 = vst [vmem:[#allocation3 + $0x190] sm:$0xf0] %v2099
      %v2106 = vld [vmem:[#allocation2 + $0x30] sm:$0xf0]
      %v2107 = vld [vmem:[#allocation2 + $0x38] sm:$0xf0]
      %v2108 = vld [vmem:[#allocation2 + $0x40] sm:$0xf0]
      %v2109 = vld [vmem:[#allocation2 + $0x48] sm:$0xf0]
      %2114 = vrot.lane.b32.xlu0 %v2106, 109
      %v2115 = vpop.permute.xlu0 %2114
      %2116 = vrot.lane.b32.xlu0 %v2107, 109
      %v2117 = vpop.permute.xlu0 %2116
      %2118 = vrot.lane.b32.xlu0 %v2108, 109
      %v2119 = vpop.permute.xlu0 %2118
      %2120 = vrot.lane.b32.xlu0 %v2109, 109
      %v2121 = vpop.permute.xlu0 %2120
      %v2122 = vsel %vm581, %v2115, %v2117
      %v2123 = vsel %vm581, %v2117, %v2119
      %v2124 = vsel %vm581, %v2119, %v2121
      %2128 = vst [vmem:[#allocation3 + $0x198] sm:$0xf0] %v2122
      %2129 = vst [vmem:[#allocation3 + $0x1a0] sm:$0xf0] %v2123
      %2130 = vst [vmem:[#allocation3 + $0x1a8] sm:$0xf0] %v2124
      %v2131 = vld [vmem:[%s2 + $0x10] sm:$0xf]
      %v2132 = vld [vmem:[#allocation3] sm:$0xff]
      %v2133 = vld [vmem:[#allocation3 + $0x8] sm:$0xff]
      %v2134 = vld [vmem:[#allocation3 + $0x10] sm:$0xff]
      %v2135 = vld [vmem:[#allocation3 + $0x18] sm:$0xff]
      %v2136 = vld [vmem:[#allocation3 + $0x20] sm:$0xff]
      %v2137 = vld [vmem:[#allocation3 + $0x28] sm:$0xff]
      %v2138 = vld [vmem:[#allocation3 + $0x30] sm:$0xff]
      %v2139 = vld [vmem:[#allocation3 + $0x38] sm:$0xff]
      %v2140 = vld [vmem:[#allocation3 + $0x40] sm:$0xff]
      %v2141 = vld [vmem:[#allocation3 + $0x48] sm:$0xff]
      %v2142 = vld [vmem:[#allocation3 + $0x50] sm:$0xff]
      %v2143 = vld [vmem:[#allocation3 + $0x58] sm:$0xff]
      %v2144 = vld [vmem:[#allocation3 + $0x60] sm:$0xff]
      %v2145 = vld [vmem:[#allocation3 + $0x68] sm:$0xff]
      %v2146 = vld [vmem:[#allocation3 + $0x70] sm:$0xff]
      %v2147 = vld [vmem:[#allocation3 + $0x78] sm:$0xff]
      %v2148 = vld [vmem:[#allocation3 + $0x80] sm:$0xff]
      %v2149 = vld [vmem:[#allocation3 + $0x88] sm:$0xff]
      %v2150 = vld [vmem:[#allocation3 + $0x90] sm:$0xff]
      %v2151 = vld [vmem:[#allocation3 + $0x98] sm:$0xff]
      %v2152 = vld [vmem:[#allocation3 + $0xa0] sm:$0xff]
      %v2153 = vld [vmem:[#allocation3 + $0xa8] sm:$0xff]
      %v2154 = vld [vmem:[#allocation3 + $0xb0] sm:$0xff]
      %v2155 = vld [vmem:[#allocation3 + $0xb8] sm:$0xff]
      %v2156 = vld [vmem:[#allocation3 + $0xc0] sm:$0xff]
      %v2157 = vld [vmem:[#allocation3 + $0xc8] sm:$0xff]
      %v2158 = vld [vmem:[#allocation3 + $0xd0] sm:$0xff]
      %v2159 = vld [vmem:[#allocation3 + $0xd8] sm:$0xff]
      %v2160 = vld [vmem:[#allocation3 + $0xe0] sm:$0xff]
      %v2161 = vld [vmem:[#allocation3 + $0xe8] sm:$0xff]
      %v2162 = vld [vmem:[#allocation3 + $0xf0] sm:$0xff]
      %v2163 = vld [vmem:[#allocation3 + $0xf8] sm:$0xff]
      %v2164 = vld [vmem:[#allocation3 + $0x100] sm:$0xff]
      %v2165 = vld [vmem:[#allocation3 + $0x108] sm:$0xff]
      %v2166 = vld [vmem:[#allocation3 + $0x110] sm:$0xff]
      %v2167 = vld [vmem:[#allocation3 + $0x118] sm:$0xff]
      %v2168 = vld [vmem:[#allocation3 + $0x120] sm:$0xff]
      %v2169 = vld [vmem:[#allocation3 + $0x128] sm:$0xff]
      %v2170 = vld [vmem:[#allocation3 + $0x130] sm:$0xff]
      %v2171 = vld [vmem:[#allocation3 + $0x138] sm:$0xff]
      %v2172 = vld [vmem:[#allocation3 + $0x140] sm:$0xff]
      %v2173 = vld [vmem:[#allocation3 + $0x148] sm:$0xff]
      %v2174 = vld [vmem:[#allocation3 + $0x150] sm:$0xff]
      %v2175 = vld [vmem:[#allocation3 + $0x158] sm:$0xff]
      %v2176 = vld [vmem:[#allocation3 + $0x160] sm:$0xff]
      %v2177 = vld [vmem:[#allocation3 + $0x168] sm:$0xff]
      %v2178 = vld [vmem:[#allocation3 + $0x170] sm:$0xff]
      %v2179 = vld [vmem:[#allocation3 + $0x178] sm:$0xff]
      %v2180 = vld [vmem:[#allocation3 + $0x180] sm:$0xff]
      %v2181 = vld [vmem:[#allocation3 + $0x188] sm:$0xff]
      %v2182 = vld [vmem:[#allocation3 + $0x190] sm:$0xff]
      %v2183 = vld [vmem:[#allocation3 + $0x198] sm:$0xff]
      %v2184 = vld [vmem:[#allocation3 + $0x1a0] sm:$0xff]
      %v2185 = vld [vmem:[#allocation3 + $0x1a8] sm:$0xff]
      %v2186 = vld [vmem:[%s3 + $0x10] sm:$0xf]
      %2188 = vset.pattern.permute.xlu0 0
      %2189 = vperm.xlu0 %2188, %v2186
      %v2190 = vpop.permute.xlu0 %2189
      %vm2192 = vcmask 588800
      %v2194 = vsel %vm2192, %v2131, 0
      %2196 = vmatprep.subr.mxu0 0.0
      %2197 = vmatpush1.msra.mxu0 0.0
      %2198 = vmatprep.subr.mxu0 0.0
      %2199 = vmatpush1.msra.mxu0 0.0
      %2200 = vmatprep.subr.mxu0 0.0
      %2201 = vmatpush1.msra.mxu0 0.0
      %2202 = vmatprep.subr.mxu0 0.0
      %2203 = vmatpush1.msra.mxu0 0.0
      %2204 = vmatprep.subr.mxu0 0.0
      %2205 = vmatpush1.msra.mxu0 0.0
      %2206 = vmatprep.subr.mxu0 0.0
      %2207 = vmatpush1.msra.mxu0 0.0
      %2208 = vmatprep.subr.mxu0 0.0
      %2209 = vmatpush1.msra.mxu0 0.0
      %2210 = vmatprep.subr.mxu0 %v2181
      %2211 = vmatpush1.msra.mxu0 %v2180
      %2212 = vmatprep.subr.mxu0 %v2175
      %2213 = vmatpush1.msra.mxu0 %v2174
      %2214 = vmatprep.subr.mxu0 %v2169
      %2215 = vmatpush1.msra.mxu0 %v2168
      %2216 = vmatprep.subr.mxu0 %v2163
      %2217 = vmatpush1.msra.mxu0 %v2162
      %2218 = vmatprep.subr.mxu0 %v2157
      %2219 = vmatpush1.msra.mxu0 %v2156
      %2220 = vmatprep.subr.mxu0 %v2151
      %2221 = vmatpush1.msra.mxu0 %v2150
      %2222 = vmatprep.subr.mxu0 %v2145
      %2223 = vmatpush1.msra.mxu0 %v2144
      %2224 = vmatprep.subr.mxu0 %v2139
      %2225 = vmatpush1.msra.mxu0 %v2138
      %2226 = vmatprep.subr.mxu0 %v2133
      %2227 = vmatpush1.msra.mxu0 %v2132
      %2228 = vmatprep.subr.mxu0 0.0
      %2229 = vmatpush2.msra.mxu0 0.0
      %2230 = vmatprep.subr.mxu0 0.0
      %2231 = vmatpush2.msra.mxu0 0.0
      %2232 = vmatprep.subr.mxu0 0.0
      %2233 = vmatpush2.msra.mxu0 0.0
      %2234 = vmatprep.subr.mxu0 0.0
      %2235 = vmatpush2.msra.mxu0 0.0
      %2236 = vmatprep.subr.mxu0 0.0
      %2237 = vmatpush2.msra.mxu0 0.0
      %2238 = vmatprep.subr.mxu0 0.0
      %2239 = vmatpush2.msra.mxu0 0.0
      %2240 = vmatprep.subr.mxu0 0.0
      %2241 = vmatpush2.msra.mxu0 0.0
      %2242 = vmatprep.subr.mxu0 0.0
      %2243 = vmatpush2.msra.mxu0 0.0
      %2244 = vmatprep.subr.mxu0 0.0
      %2245 = vmatpush2.msra.mxu0 0.0
      %2246 = vmatprep.subr.mxu0 0.0
      %2247 = vmatpush2.msra.mxu0 0.0
      %2248 = vmatprep.subr.mxu0 0.0
      %2249 = vmatpush2.msra.mxu0 0.0
      %2250 = vmatprep.subr.mxu0 0.0
      %2251 = vmatpush2.msra.mxu0 0.0
      %2252 = vmatprep.subr.mxu0 0.0
      %2253 = vmatpush2.msra.mxu0 0.0
      %2254 = vmatprep.subr.mxu0 0.0
      %2255 = vmatpush2.msra.mxu0 0.0
      %2256 = vmatprep.subr.mxu0 0.0
      %2257 = vmatpush2.msra.mxu0 0.0
      %2258 = vmatprep.subr.mxu0 0.0
      %2259 = vmatpush2.msra.mxu0 0.0
      %2260 = vmatprep.mubr.f32.mxu0 0.0
      %2261 = vmatmul.mubr.f32.gmra.mxu0 %v2194
      %v2262 = vpop.f32.mrf.mxu0
      %v2263 = vadd.f32 %v2190, %v2262
      %v2264 = vpop.f32.mrf.mxu0
      %v2265 = vadd.f32 %v2190, %v2264
      %2266 = vdwg.mxu0
      %2267 = vmatprep.subr.mxu0 0.0
      %2268 = vmatpush1.msra.mxu0 0.0
      %2269 = vmatprep.subr.mxu0 0.0
      %2270 = vmatpush1.msra.mxu0 0.0
      %2271 = vmatprep.subr.mxu0 0.0
      %2272 = vmatpush1.msra.mxu0 0.0
      %2273 = vmatprep.subr.mxu0 0.0
      %2274 = vmatpush1.msra.mxu0 0.0
      %2275 = vmatprep.subr.mxu0 0.0
      %2276 = vmatpush1.msra.mxu0 0.0
      %2277 = vmatprep.subr.mxu0 0.0
      %2278 = vmatpush1.msra.mxu0 0.0
      %2279 = vmatprep.subr.mxu0 0.0
      %2280 = vmatpush1.msra.mxu0 0.0
      %2281 = vmatprep.subr.mxu0 %v2183
      %2282 = vmatpush1.msra.mxu0 %v2182
      %2283 = vmatprep.subr.mxu0 %v2177
      %2284 = vmatpush1.msra.mxu0 %v2176
      %2285 = vmatprep.subr.mxu0 %v2171
      %2286 = vmatpush1.msra.mxu0 %v2170
      %2287 = vmatprep.subr.mxu0 %v2165
      %2288 = vmatpush1.msra.mxu0 %v2164
      %2289 = vmatprep.subr.mxu0 %v2159
      %2290 = vmatpush1.msra.mxu0 %v2158
      %2291 = vmatprep.subr.mxu0 %v2153
      %2292 = vmatpush1.msra.mxu0 %v2152
      %2293 = vmatprep.subr.mxu0 %v2147
      %2294 = vmatpush1.msra.mxu0 %v2146
      %2295 = vmatprep.subr.mxu0 %v2141
      %2296 = vmatpush1.msra.mxu0 %v2140
      %2297 = vmatprep.subr.mxu0 %v2135
      %2298 = vmatpush1.msra.mxu0 %v2134
      %2299 = vmatprep.subr.mxu0 0.0
      %2300 = vmatpush2.msra.mxu0 0.0
      %2301 = vmatprep.subr.mxu0 0.0
      %2302 = vmatpush2.msra.mxu0 0.0
      %2303 = vmatprep.subr.mxu0 0.0
      %2304 = vmatpush2.msra.mxu0 0.0
      %2305 = vmatprep.subr.mxu0 0.0
      %2306 = vmatpush2.msra.mxu0 0.0
      %2307 = vmatprep.subr.mxu0 0.0
      %2308 = vmatpush2.msra.mxu0 0.0
      %2309 = vmatprep.subr.mxu0 0.0
      %2310 = vmatpush2.msra.mxu0 0.0
      %2311 = vmatprep.subr.mxu0 0.0
      %2312 = vmatpush2.msra.mxu0 0.0
      %2313 = vmatprep.subr.mxu0 0.0
      %2314 = vmatpush2.msra.mxu0 0.0
      %2315 = vmatprep.subr.mxu0 0.0
      %2316 = vmatpush2.msra.mxu0 0.0
      %2317 = vmatprep.subr.mxu0 0.0
      %2318 = vmatpush2.msra.mxu0 0.0
      %2319 = vmatprep.subr.mxu0 0.0
      %2320 = vmatpush2.msra.mxu0 0.0
      %2321 = vmatprep.subr.mxu0 0.0
      %2322 = vmatpush2.msra.mxu0 0.0
      %2323 = vmatprep.subr.mxu0 0.0
      %2324 = vmatpush2.msra.mxu0 0.0
      %2325 = vmatprep.subr.mxu0 0.0
      %2326 = vmatpush2.msra.mxu0 0.0
      %2327 = vmatprep.subr.mxu0 0.0
      %2328 = vmatpush2.msra.mxu0 0.0
      %2329 = vmatprep.subr.mxu0 0.0
      %2330 = vmatpush2.msra.mxu0 0.0
      %2331 = vmatprep.mubr.f32.mxu0 0.0
      %2332 = vmatmul.mubr.f32.gmra.mxu0 %v2194
      %v2333 = vpop.f32.mrf.mxu0
      %v2334 = vadd.f32 %v2190, %v2333
      %v2335 = vpop.f32.mrf.mxu0
      %v2336 = vadd.f32 %v2190, %v2335
      %2337 = vdwg.mxu0
      %2338 = vmatprep.subr.mxu0 0.0
      %2339 = vmatpush1.msra.mxu0 0.0
      %2340 = vmatprep.subr.mxu0 0.0
      %2341 = vmatpush1.msra.mxu0 0.0
      %2342 = vmatprep.subr.mxu0 0.0
      %2343 = vmatpush1.msra.mxu0 0.0
      %2344 = vmatprep.subr.mxu0 0.0
      %2345 = vmatpush1.msra.mxu0 0.0
      %2346 = vmatprep.subr.mxu0 0.0
      %2347 = vmatpush1.msra.mxu0 0.0
      %2348 = vmatprep.subr.mxu0 0.0
      %2349 = vmatpush1.msra.mxu0 0.0
      %2350 = vmatprep.subr.mxu0 0.0
      %2351 = vmatpush1.msra.mxu0 0.0
      %2352 = vmatprep.subr.mxu0 %v2185
      %2353 = vmatpush1.msra.mxu0 %v2184
      %2354 = vmatprep.subr.mxu0 %v2179
      %2355 = vmatpush1.msra.mxu0 %v2178
      %2356 = vmatprep.subr.mxu0 %v2173
      %2357 = vmatpush1.msra.mxu0 %v2172
      %2358 = vmatprep.subr.mxu0 %v2167
      %2359 = vmatpush1.msra.mxu0 %v2166
      %2360 = vmatprep.subr.mxu0 %v2161
      %2361 = vmatpush1.msra.mxu0 %v2160
      %2362 = vmatprep.subr.mxu0 %v2155
      %2363 = vmatpush1.msra.mxu0 %v2154
      %2364 = vmatprep.subr.mxu0 %v2149
      %2365 = vmatpush1.msra.mxu0 %v2148
      %2366 = vmatprep.subr.mxu0 %v2143
      %2367 = vmatpush1.msra.mxu0 %v2142
      %2368 = vmatprep.subr.mxu0 %v2137
      %2369 = vmatpush1.msra.mxu0 %v2136
      %2370 = vmatprep.subr.mxu0 0.0
      %2371 = vmatpush2.msra.mxu0 0.0
      %2372 = vmatprep.subr.mxu0 0.0
      %2373 = vmatpush2.msra.mxu0 0.0
      %2374 = vmatprep.subr.mxu0 0.0
      %2375 = vmatpush2.msra.mxu0 0.0
      %2376 = vmatprep.subr.mxu0 0.0
      %2377 = vmatpush2.msra.mxu0 0.0
      %2378 = vmatprep.subr.mxu0 0.0
      %2379 = vmatpush2.msra.mxu0 0.0
      %2380 = vmatprep.subr.mxu0 0.0
      %2381 = vmatpush2.msra.mxu0 0.0
      %2382 = vmatprep.subr.mxu0 0.0
      %2383 = vmatpush2.msra.mxu0 0.0
      %2384 = vmatprep.subr.mxu0 0.0
      %2385 = vmatpush2.msra.mxu0 0.0
      %2386 = vmatprep.subr.mxu0 0.0
      %2387 = vmatpush2.msra.mxu0 0.0
      %2388 = vmatprep.subr.mxu0 0.0
      %2389 = vmatpush2.msra.mxu0 0.0
      %2390 = vmatprep.subr.mxu0 0.0
      %2391 = vmatpush2.msra.mxu0 0.0
      %2392 = vmatprep.subr.mxu0 0.0
      %2393 = vmatpush2.msra.mxu0 0.0
      %2394 = vmatprep.subr.mxu0 0.0
      %2395 = vmatpush2.msra.mxu0 0.0
      %2396 = vmatprep.subr.mxu0 0.0
      %2397 = vmatpush2.msra.mxu0 0.0
      %2398 = vmatprep.subr.mxu0 0.0
      %2399 = vmatpush2.msra.mxu0 0.0
      %2400 = vmatprep.subr.mxu0 0.0
      %2401 = vmatpush2.msra.mxu0 0.0
      %2402 = vmatprep.mubr.f32.mxu0 0.0
      %2403 = vmatmul.mubr.f32.gmra.mxu0 %v2194
      %v2404 = vpop.f32.mrf.mxu0
      %v2405 = vadd.f32 %v2190, %v2404
      %v2406 = vpop.f32.mrf.mxu0
      %v2407 = vadd.f32 %v2190, %v2406
      %2408 = vdwg.mxu0
      %v2409 = vmax.f32 %v2263, 0.0
      %v2410 = vmax.f32 %v2265, 0.0
      %v2411 = vmax.f32 %v2334, 0.0
      %v2412 = vmax.f32 %v2336, 0.0
      %v2413 = vmax.f32 %v2405, 0.0
      %v2414 = vmax.f32 %v2407, 0.0
      %v2415 = vmul.f32 %v2409, %v897
      %v2416 = vmul.f32 %v2410, %v901
      %v2417 = vmul.f32 %v2411, %v905
      %v2418 = vmul.f32 %v2412, %v909
      %v2419 = vmul.f32 %v2413, %v913
      %v2420 = vmul.f32 %v2414, %v917
      %2421 = vst [vmem:[#allocation2 + $0x58] sm:$0xf] %v2415
      %2422 = vst [vmem:[#allocation2 + $0x60] sm:$0xf] %v2416
      %2423 = vst [vmem:[#allocation2 + $0x68] sm:$0xf] %v2417
      %2424 = vst [vmem:[#allocation2 + $0x80] sm:$0xf] %v2418
      %2425 = vst [vmem:[#allocation2 + $0x88] sm:$0xf] %v2419
      %2426 = vst [vmem:[#allocation2 + $0x90] sm:$0xf] %v2420
      %v2427 = vld [vmem:[#allocation2 + $0x50] sm:$0xf]
      %v2428 = vld [vmem:[#allocation2 + $0x58] sm:$0xf]
      %v2429 = vld [vmem:[#allocation2 + $0x60] sm:$0xf]
      %v2430 = vld [vmem:[#allocation2 + $0x68] sm:$0xf]
      %2435 = vrot.lane.b32.xlu0 %v2427, 19
      %v2436 = vpop.permute.xlu0 %2435
      %2437 = vrot.lane.b32.xlu0 %v2428, 19
      %v2438 = vpop.permute.xlu0 %2437
      %2439 = vrot.lane.b32.xlu0 %v2429, 19
      %v2440 = vpop.permute.xlu0 %2439
      %2441 = vrot.lane.b32.xlu0 %v2430, 19
      %v2442 = vpop.permute.xlu0 %2441
      %v2443 = vsel %vm235, %v2436, %v2438
      %v2444 = vsel %vm235, %v2438, %v2440
      %v2445 = vsel %vm235, %v2440, %v2442
      %2449 = vst [vmem:[#allocation3 + $0x1b0] sm:$0xf] %v2443
      %2450 = vst [vmem:[#allocation3 + $0x1b8] sm:$0xf] %v2444
      %2451 = vst [vmem:[#allocation3 + $0x1c0] sm:$0xf] %v2445
      %v2452 = vld [vmem:[#allocation2 + $0x78] sm:$0xf]
      %v2453 = vld [vmem:[#allocation2 + $0x80] sm:$0xf]
      %v2454 = vld [vmem:[#allocation2 + $0x88] sm:$0xf]
      %v2455 = vld [vmem:[#allocation2 + $0x90] sm:$0xf]
      %2460 = vrot.lane.b32.xlu0 %v2452, 19
      %v2461 = vpop.permute.xlu0 %2460
      %2462 = vrot.lane.b32.xlu0 %v2453, 19
      %v2463 = vpop.permute.xlu0 %2462
      %2464 = vrot.lane.b32.xlu0 %v2454, 19
      %v2465 = vpop.permute.xlu0 %2464
      %2466 = vrot.lane.b32.xlu0 %v2455, 19
      %v2467 = vpop.permute.xlu0 %2466
      %v2468 = vsel %vm235, %v2461, %v2463
      %v2469 = vsel %vm235, %v2463, %v2465
      %v2470 = vsel %vm235, %v2465, %v2467
      %2474 = vst [vmem:[#allocation3 + $0x1c8] sm:$0xf] %v2468
      %2475 = vst [vmem:[#allocation3 + $0x1d0] sm:$0xf] %v2469
      %2476 = vst [vmem:[#allocation3 + $0x1d8] sm:$0xf] %v2470
      %v2477 = vld [vmem:[#allocation2 + $0x50] sm:$0xf]
      %v2478 = vld [vmem:[#allocation2 + $0x58] sm:$0xf]
      %v2479 = vld [vmem:[#allocation2 + $0x60] sm:$0xf]
      %v2480 = vld [vmem:[#allocation2 + $0x68] sm:$0xf]
      %v2485 = vrot.slane %v2477, 4
      %v2486 = vrot.slane %v2478, 4
      %v2487 = vrot.slane %v2479, 4
      %v2488 = vrot.slane %v2480, 4
      %2489 = vrot.lane.b32.xlu0 %v2485, 18
      %v2490 = vpop.permute.xlu0 %2489
      %2491 = vrot.lane.b32.xlu0 %v2486, 18
      %v2492 = vpop.permute.xlu0 %2491
      %2493 = vrot.lane.b32.xlu0 %v2487, 18
      %v2494 = vpop.permute.xlu0 %2493
      %2495 = vrot.lane.b32.xlu0 %v2488, 18
      %v2496 = vpop.permute.xlu0 %2495
      %v2497 = vsel %vm283, %v2490, %v2492
      %v2498 = vsel %vm283, %v2492, %v2494
      %v2499 = vsel %vm283, %v2494, %v2496
      %2503 = vst [vmem:[#allocation3 + $0x1b0] sm:$0xf0] %v2497
      %2504 = vst [vmem:[#allocation3 + $0x1b8] sm:$0xf0] %v2498
      %2505 = vst [vmem:[#allocation3 + $0x1c0] sm:$0xf0] %v2499
      %v2506 = vld [vmem:[#allocation2 + $0x78] sm:$0xf]
      %v2507 = vld [vmem:[#allocation2 + $0x80] sm:$0xf]
      %v2508 = vld [vmem:[#allocation2 + $0x88] sm:$0xf]
      %v2509 = vld [vmem:[#allocation2 + $0x90] sm:$0xf]
      %v2514 = vrot.slane %v2506, 4
      %v2515 = vrot.slane %v2507, 4
      %v2516 = vrot.slane %v2508, 4
      %v2517 = vrot.slane %v2509, 4
      %2518 = vrot.lane.b32.xlu0 %v2514, 18
      %v2519 = vpop.permute.xlu0 %2518
      %2520 = vrot.lane.b32.xlu0 %v2515, 18
      %v2521 = vpop.permute.xlu0 %2520
      %2522 = vrot.lane.b32.xlu0 %v2516, 18
      %v2523 = vpop.permute.xlu0 %2522
      %2524 = vrot.lane.b32.xlu0 %v2517, 18
      %v2525 = vpop.permute.xlu0 %2524
      %v2526 = vsel %vm283, %v2519, %v2521
      %v2527 = vsel %vm283, %v2521, %v2523
      %v2528 = vsel %vm283, %v2523, %v2525
      %2532 = vst [vmem:[#allocation3 + $0x1c8] sm:$0xf0] %v2526
      %2533 = vst [vmem:[#allocation3 + $0x1d0] sm:$0xf0] %v2527
      %2534 = vst [vmem:[#allocation3 + $0x1d8] sm:$0xf0] %v2528
      %v2535 = vld [vmem:[#allocation2 + $0x50] sm:$0xf]
      %v2536 = vld [vmem:[#allocation2 + $0x58] sm:$0xf]
      %v2537 = vld [vmem:[#allocation2 + $0x60] sm:$0xf]
      %v2538 = vld [vmem:[#allocation2 + $0x68] sm:$0xf]
      %2543 = vrot.lane.b32.xlu0 %v2535, 17
      %v2544 = vpop.permute.xlu0 %2543
      %2545 = vrot.lane.b32.xlu0 %v2536, 17
      %v2546 = vpop.permute.xlu0 %2545
      %2547 = vrot.lane.b32.xlu0 %v2537, 17
      %v2548 = vpop.permute.xlu0 %2547
      %2549 = vrot.lane.b32.xlu0 %v2538, 17
      %v2550 = vpop.permute.xlu0 %2549
      %v2551 = vsel %vm330, %v2544, %v2546
      %v2552 = vsel %vm330, %v2546, %v2548
      %v2553 = vsel %vm330, %v2548, %v2550
      %2557 = vst [vmem:[#allocation3 + $0x1e0] sm:$0xf] %v2551
      %2558 = vst [vmem:[#allocation3 + $0x1e8] sm:$0xf] %v2552
      %2559 = vst [vmem:[#allocation3 + $0x1f0] sm:$0xf] %v2553
      %v2560 = vld [vmem:[#allocation2 + $0x78] sm:$0xf]
      %v2561 = vld [vmem:[#allocation2 + $0x80] sm:$0xf]
      %v2562 = vld [vmem:[#allocation2 + $0x88] sm:$0xf]
      %v2563 = vld [vmem:[#allocation2 + $0x90] sm:$0xf]
      %2568 = vrot.lane.b32.xlu0 %v2560, 17
      %v2569 = vpop.permute.xlu0 %2568
      %2570 = vrot.lane.b32.xlu0 %v2561, 17
      %v2571 = vpop.permute.xlu0 %2570
      %2572 = vrot.lane.b32.xlu0 %v2562, 17
      %v2573 = vpop.permute.xlu0 %2572
      %2574 = vrot.lane.b32.xlu0 %v2563, 17
      %v2575 = vpop.permute.xlu0 %2574
      %v2576 = vsel %vm330, %v2569, %v2571
      %v2577 = vsel %vm330, %v2571, %v2573
      %v2578 = vsel %vm330, %v2573, %v2575
      %2582 = vst [vmem:[#allocation3 + $0x1f8] sm:$0xf] %v2576
      %2583 = vst [vmem:[#allocation3 + $0x200] sm:$0xf] %v2577
      %2584 = vst [vmem:[#allocation3 + $0x208] sm:$0xf] %v2578
      %v2585 = vld [vmem:[#allocation2 + $0x50] sm:$0xf]
      %v2586 = vld [vmem:[#allocation2 + $0x58] sm:$0xf]
      %v2587 = vld [vmem:[#allocation2 + $0x60] sm:$0xf]
      %v2588 = vld [vmem:[#allocation2 + $0x68] sm:$0xf]
      %v2593 = vrot.slane %v2585, 4
      %v2594 = vrot.slane %v2586, 4
      %v2595 = vrot.slane %v2587, 4
      %v2596 = vrot.slane %v2588, 4
      %2597 = vrot.lane.b32.xlu0 %v2593, 1
      %v2598 = vpop.permute.xlu0 %2597
      %2599 = vrot.lane.b32.xlu0 %v2594, 1
      %v2600 = vpop.permute.xlu0 %2599
      %2601 = vrot.lane.b32.xlu0 %v2595, 1
      %v2602 = vpop.permute.xlu0 %2601
      %2603 = vrot.lane.b32.xlu0 %v2596, 1
      %v2604 = vpop.permute.xlu0 %2603
      %v2605 = vsel %vm377, %v2598, %v2600
      %v2606 = vsel %vm377, %v2600, %v2602
      %v2607 = vsel %vm377, %v2602, %v2604
      %2611 = vst [vmem:[#allocation3 + $0x1e0] sm:$0xf0] %v2605
      %2612 = vst [vmem:[#allocation3 + $0x1e8] sm:$0xf0] %v2606
      %2613 = vst [vmem:[#allocation3 + $0x1f0] sm:$0xf0] %v2607
      %v2614 = vld [vmem:[#allocation2 + $0x78] sm:$0xf]
      %v2615 = vld [vmem:[#allocation2 + $0x80] sm:$0xf]
      %v2616 = vld [vmem:[#allocation2 + $0x88] sm:$0xf]
      %v2617 = vld [vmem:[#allocation2 + $0x90] sm:$0xf]
      %v2622 = vrot.slane %v2614, 4
      %v2623 = vrot.slane %v2615, 4
      %v2624 = vrot.slane %v2616, 4
      %v2625 = vrot.slane %v2617, 4
      %2626 = vrot.lane.b32.xlu0 %v2622, 1
      %v2627 = vpop.permute.xlu0 %2626
      %2628 = vrot.lane.b32.xlu0 %v2623, 1
      %v2629 = vpop.permute.xlu0 %2628
      %2630 = vrot.lane.b32.xlu0 %v2624, 1
      %v2631 = vpop.permute.xlu0 %2630
      %2632 = vrot.lane.b32.xlu0 %v2625, 1
      %v2633 = vpop.permute.xlu0 %2632
      %v2634 = vsel %vm377, %v2627, %v2629
      %v2635 = vsel %vm377, %v2629, %v2631
      %v2636 = vsel %vm377, %v2631, %v2633
      %2640 = vst [vmem:[#allocation3 + $0x1f8] sm:$0xf0] %v2634
      %2641 = vst [vmem:[#allocation3 + $0x200] sm:$0xf0] %v2635
      %2642 = vst [vmem:[#allocation3 + $0x208] sm:$0xf0] %v2636
      %v2643 = vld [vmem:[#allocation2 + $0x58] sm:$0xf]
      %v2644 = vld [vmem:[#allocation2 + $0x60] sm:$0xf]
      %v2645 = vld [vmem:[#allocation2 + $0x68] sm:$0xf]
      %2646 = vst [vmem:[#allocation3 + $0x210] sm:$0xf] %v2643
      %2647 = vst [vmem:[#allocation3 + $0x218] sm:$0xf] %v2644
      %2648 = vst [vmem:[#allocation3 + $0x220] sm:$0xf] %v2645
      %v2649 = vld [vmem:[#allocation2 + $0x80] sm:$0xf]
      %v2650 = vld [vmem:[#allocation2 + $0x88] sm:$0xf]
      %v2651 = vld [vmem:[#allocation2 + $0x90] sm:$0xf]
      %2652 = vst [vmem:[#allocation3 + $0x228] sm:$0xf] %v2649
      %2653 = vst [vmem:[#allocation3 + $0x230] sm:$0xf] %v2650
      %2654 = vst [vmem:[#allocation3 + $0x238] sm:$0xf] %v2651
      %v2655 = vld [vmem:[#allocation2 + $0x58] sm:$0xf]
      %v2656 = vld [vmem:[#allocation2 + $0x60] sm:$0xf]
      %v2657 = vld [vmem:[#allocation2 + $0x68] sm:$0xf]
      %v2658 = vld [vmem:[#allocation2 + $0x70] sm:$0xf]
      %v2663 = vrot.slane %v2655, 4
      %v2664 = vrot.slane %v2656, 4
      %v2665 = vrot.slane %v2657, 4
      %v2666 = vrot.slane %v2658, 4
      %2667 = vrot.lane.b32.xlu0 %v2663, 127
      %v2668 = vpop.permute.xlu0 %2667
      %2669 = vrot.lane.b32.xlu0 %v2664, 127
      %v2670 = vpop.permute.xlu0 %2669
      %2671 = vrot.lane.b32.xlu0 %v2665, 127
      %v2672 = vpop.permute.xlu0 %2671
      %2673 = vrot.lane.b32.xlu0 %v2666, 127
      %v2674 = vpop.permute.xlu0 %2673
      %v2675 = vsel %vm440, %v2668, %v2670
      %v2676 = vsel %vm440, %v2670, %v2672
      %v2677 = vsel %vm440, %v2672, %v2674
      %2681 = vst [vmem:[#allocation3 + $0x210] sm:$0xf0] %v2675
      %2682 = vst [vmem:[#allocation3 + $0x218] sm:$0xf0] %v2676
      %2683 = vst [vmem:[#allocation3 + $0x220] sm:$0xf0] %v2677
      %v2684 = vld [vmem:[#allocation2 + $0x80] sm:$0xf]
      %v2685 = vld [vmem:[#allocation2 + $0x88] sm:$0xf]
      %v2686 = vld [vmem:[#allocation2 + $0x90] sm:$0xf]
      %v2687 = vld [vmem:[#allocation2 + $0x98] sm:$0xf]
      %v2692 = vrot.slane %v2684, 4
      %v2693 = vrot.slane %v2685, 4
      %v2694 = vrot.slane %v2686, 4
      %v2695 = vrot.slane %v2687, 4
      %2696 = vrot.lane.b32.xlu0 %v2692, 127
      %v2697 = vpop.permute.xlu0 %2696
      %2698 = vrot.lane.b32.xlu0 %v2693, 127
      %v2699 = vpop.permute.xlu0 %2698
      %2700 = vrot.lane.b32.xlu0 %v2694, 127
      %v2701 = vpop.permute.xlu0 %2700
      %2702 = vrot.lane.b32.xlu0 %v2695, 127
      %v2703 = vpop.permute.xlu0 %2702
      %v2704 = vsel %vm440, %v2697, %v2699
      %v2705 = vsel %vm440, %v2699, %v2701
      %v2706 = vsel %vm440, %v2701, %v2703
      %2710 = vst [vmem:[#allocation3 + $0x228] sm:$0xf0] %v2704
      %2711 = vst [vmem:[#allocation3 + $0x230] sm:$0xf0] %v2705
      %2712 = vst [vmem:[#allocation3 + $0x238] sm:$0xf0] %v2706
      %v2713 = vld [vmem:[#allocation2 + $0x58] sm:$0xf]
      %v2714 = vld [vmem:[#allocation2 + $0x60] sm:$0xf]
      %v2715 = vld [vmem:[#allocation2 + $0x68] sm:$0xf]
      %v2716 = vld [vmem:[#allocation2 + $0x70] sm:$0xf]
      %2721 = vrot.lane.b32.xlu0 %v2713, 111
      %v2722 = vpop.permute.xlu0 %2721
      %2723 = vrot.lane.b32.xlu0 %v2714, 111
      %v2724 = vpop.permute.xlu0 %2723
      %2725 = vrot.lane.b32.xlu0 %v2715, 111
      %v2726 = vpop.permute.xlu0 %2725
      %2727 = vrot.lane.b32.xlu0 %v2716, 111
      %v2728 = vpop.permute.xlu0 %2727
      %v2729 = vsel %vm487, %v2722, %v2724
      %v2730 = vsel %vm487, %v2724, %v2726
      %v2731 = vsel %vm487, %v2726, %v2728
      %2735 = vst [vmem:[#allocation3 + $0x240] sm:$0xf] %v2729
      %2736 = vst [vmem:[#allocation3 + $0x248] sm:$0xf] %v2730
      %2737 = vst [vmem:[#allocation3 + $0x250] sm:$0xf] %v2731
      %v2738 = vld [vmem:[#allocation2 + $0x80] sm:$0xf]
      %v2739 = vld [vmem:[#allocation2 + $0x88] sm:$0xf]
      %v2740 = vld [vmem:[#allocation2 + $0x90] sm:$0xf]
      %v2741 = vld [vmem:[#allocation2 + $0x98] sm:$0xf]
      %2746 = vrot.lane.b32.xlu0 %v2738, 111
      %v2747 = vpop.permute.xlu0 %2746
      %2748 = vrot.lane.b32.xlu0 %v2739, 111
      %v2749 = vpop.permute.xlu0 %2748
      %2750 = vrot.lane.b32.xlu0 %v2740, 111
      %v2751 = vpop.permute.xlu0 %2750
      %2752 = vrot.lane.b32.xlu0 %v2741, 111
      %v2753 = vpop.permute.xlu0 %2752
      %v2754 = vsel %vm487, %v2747, %v2749
      %v2755 = vsel %vm487, %v2749, %v2751
      %v2756 = vsel %vm487, %v2751, %v2753
      %2760 = vst [vmem:[#allocation3 + $0x258] sm:$0xf] %v2754
      %2761 = vst [vmem:[#allocation3 + $0x260] sm:$0xf] %v2755
      %2762 = vst [vmem:[#allocation3 + $0x268] sm:$0xf] %v2756
      %v2763 = vld [vmem:[#allocation2 + $0x58] sm:$0xf]
      %v2764 = vld [vmem:[#allocation2 + $0x60] sm:$0xf]
      %v2765 = vld [vmem:[#allocation2 + $0x68] sm:$0xf]
      %v2766 = vld [vmem:[#allocation2 + $0x70] sm:$0xf]
      %v2771 = vrot.slane %v2763, 4
      %v2772 = vrot.slane %v2764, 4
      %v2773 = vrot.slane %v2765, 4
      %v2774 = vrot.slane %v2766, 4
      %2775 = vrot.lane.b32.xlu0 %v2771, 110
      %v2776 = vpop.permute.xlu0 %2775
      %2777 = vrot.lane.b32.xlu0 %v2772, 110
      %v2778 = vpop.permute.xlu0 %2777
      %2779 = vrot.lane.b32.xlu0 %v2773, 110
      %v2780 = vpop.permute.xlu0 %2779
      %2781 = vrot.lane.b32.xlu0 %v2774, 110
      %v2782 = vpop.permute.xlu0 %2781
      %v2783 = vsel %vm534, %v2776, %v2778
      %v2784 = vsel %vm534, %v2778, %v2780
      %v2785 = vsel %vm534, %v2780, %v2782
      %2789 = vst [vmem:[#allocation3 + $0x240] sm:$0xf0] %v2783
      %2790 = vst [vmem:[#allocation3 + $0x248] sm:$0xf0] %v2784
      %2791 = vst [vmem:[#allocation3 + $0x250] sm:$0xf0] %v2785
      %v2792 = vld [vmem:[#allocation2 + $0x80] sm:$0xf]
      %v2793 = vld [vmem:[#allocation2 + $0x88] sm:$0xf]
      %v2794 = vld [vmem:[#allocation2 + $0x90] sm:$0xf]
      %v2795 = vld [vmem:[#allocation2 + $0x98] sm:$0xf]
      %v2800 = vrot.slane %v2792, 4
      %v2801 = vrot.slane %v2793, 4
      %v2802 = vrot.slane %v2794, 4
      %v2803 = vrot.slane %v2795, 4
      %2804 = vrot.lane.b32.xlu0 %v2800, 110
      %v2805 = vpop.permute.xlu0 %2804
      %2806 = vrot.lane.b32.xlu0 %v2801, 110
      %v2807 = vpop.permute.xlu0 %2806
      %2808 = vrot.lane.b32.xlu0 %v2802, 110
      %v2809 = vpop.permute.xlu0 %2808
      %2810 = vrot.lane.b32.xlu0 %v2803, 110
      %v2811 = vpop.permute.xlu0 %2810
      %v2812 = vsel %vm534, %v2805, %v2807
      %v2813 = vsel %vm534, %v2807, %v2809
      %v2814 = vsel %vm534, %v2809, %v2811
      %2818 = vst [vmem:[#allocation3 + $0x258] sm:$0xf0] %v2812
      %2819 = vst [vmem:[#allocation3 + $0x260] sm:$0xf0] %v2813
      %2820 = vst [vmem:[#allocation3 + $0x268] sm:$0xf0] %v2814
      %v2821 = vld [vmem:[#allocation2 + $0x58] sm:$0xf]
      %v2822 = vld [vmem:[#allocation2 + $0x60] sm:$0xf]
      %v2823 = vld [vmem:[#allocation2 + $0x68] sm:$0xf]
      %v2824 = vld [vmem:[#allocation2 + $0x70] sm:$0xf]
      %2829 = vrot.lane.b32.xlu0 %v2821, 109
      %v2830 = vpop.permute.xlu0 %2829
      %2831 = vrot.lane.b32.xlu0 %v2822, 109
      %v2832 = vpop.permute.xlu0 %2831
      %2833 = vrot.lane.b32.xlu0 %v2823, 109
      %v2834 = vpop.permute.xlu0 %2833
      %2835 = vrot.lane.b32.xlu0 %v2824, 109
      %v2836 = vpop.permute.xlu0 %2835
      %v2837 = vsel %vm581, %v2830, %v2832
      %v2838 = vsel %vm581, %v2832, %v2834
      %v2839 = vsel %vm581, %v2834, %v2836
      %2843 = vst [vmem:[#allocation3 + $0x270] sm:$0xf] %v2837
      %2844 = vst [vmem:[#allocation3 + $0x278] sm:$0xf] %v2838
      %2845 = vst [vmem:[#allocation3 + $0x280] sm:$0xf] %v2839
      %v2846 = vld [vmem:[#allocation2 + $0x80] sm:$0xf]
      %v2847 = vld [vmem:[#allocation2 + $0x88] sm:$0xf]
      %v2848 = vld [vmem:[#allocation2 + $0x90] sm:$0xf]
      %v2849 = vld [vmem:[#allocation2 + $0x98] sm:$0xf]
      %2854 = vrot.lane.b32.xlu0 %v2846, 109
      %v2855 = vpop.permute.xlu0 %2854
      %2856 = vrot.lane.b32.xlu0 %v2847, 109
      %v2857 = vpop.permute.xlu0 %2856
      %2858 = vrot.lane.b32.xlu0 %v2848, 109
      %v2859 = vpop.permute.xlu0 %2858
      %2860 = vrot.lane.b32.xlu0 %v2849, 109
      %v2861 = vpop.permute.xlu0 %2860
      %v2862 = vsel %vm581, %v2855, %v2857
      %v2863 = vsel %vm581, %v2857, %v2859
      %v2864 = vsel %vm581, %v2859, %v2861
      %2868 = vst [vmem:[#allocation3 + $0x288] sm:$0xf] %v2862
      %2869 = vst [vmem:[#allocation3 + $0x290] sm:$0xf] %v2863
      %2870 = vst [vmem:[#allocation3 + $0x298] sm:$0xf] %v2864
      %v2871 = vld [vmem:[%s2 + $0x18] sm:$0xff]
      %v2872 = vld [vmem:[%s2 + $0x20] sm:$0xff]
      %v2873 = vld [vmem:[#allocation3] sm:$0xff]
      %v2874 = vld [vmem:[#allocation3 + $0x8] sm:$0xff]
      %v2875 = vld [vmem:[#allocation3 + $0x10] sm:$0xff]
      %v2876 = vld [vmem:[#allocation3 + $0x18] sm:$0xff]
      %v2877 = vld [vmem:[#allocation3 + $0x20] sm:$0xff]
      %v2878 = vld [vmem:[#allocation3 + $0x28] sm:$0xff]
      %v2879 = vld [vmem:[#allocation3 + $0x30] sm:$0xff]
      %v2880 = vld [vmem:[#allocation3 + $0x38] sm:$0xff]
      %v2881 = vld [vmem:[#allocation3 + $0x40] sm:$0xff]
      %v2882 = vld [vmem:[#allocation3 + $0x48] sm:$0xff]
      %v2883 = vld [vmem:[#allocation3 + $0x50] sm:$0xff]
      %v2884 = vld [vmem:[#allocation3 + $0x58] sm:$0xff]
      %v2885 = vld [vmem:[#allocation3 + $0x60] sm:$0xff]
      %v2886 = vld [vmem:[#allocation3 + $0x68] sm:$0xff]
      %v2887 = vld [vmem:[#allocation3 + $0x70] sm:$0xff]
      %v2888 = vld [vmem:[#allocation3 + $0x78] sm:$0xff]
      %v2889 = vld [vmem:[#allocation3 + $0x80] sm:$0xff]
      %v2890 = vld [vmem:[#allocation3 + $0x88] sm:$0xff]
      %v2891 = vld [vmem:[#allocation3 + $0x90] sm:$0xff]
      %v2892 = vld [vmem:[#allocation3 + $0x98] sm:$0xff]
      %v2893 = vld [vmem:[#allocation3 + $0xa0] sm:$0xff]
      %v2894 = vld [vmem:[#allocation3 + $0xa8] sm:$0xff]
      %v2895 = vld [vmem:[#allocation3 + $0xb0] sm:$0xff]
      %v2896 = vld [vmem:[#allocation3 + $0xb8] sm:$0xff]
      %v2897 = vld [vmem:[#allocation3 + $0xc0] sm:$0xff]
      %v2898 = vld [vmem:[#allocation3 + $0xc8] sm:$0xff]
      %v2899 = vld [vmem:[#allocation3 + $0xd0] sm:$0xff]
      %v2900 = vld [vmem:[#allocation3 + $0xd8] sm:$0xff]
      %v2901 = vld [vmem:[#allocation3 + $0xe0] sm:$0xff]
      %v2902 = vld [vmem:[#allocation3 + $0xe8] sm:$0xff]
      %v2903 = vld [vmem:[#allocation3 + $0xf0] sm:$0xff]
      %v2904 = vld [vmem:[#allocation3 + $0xf8] sm:$0xff]
      %v2905 = vld [vmem:[#allocation3 + $0x100] sm:$0xff]
      %v2906 = vld [vmem:[#allocation3 + $0x108] sm:$0xff]
      %v2907 = vld [vmem:[#allocation3 + $0x110] sm:$0xff]
      %v2908 = vld [vmem:[#allocation3 + $0x118] sm:$0xff]
      %v2909 = vld [vmem:[#allocation3 + $0x120] sm:$0xff]
      %v2910 = vld [vmem:[#allocation3 + $0x128] sm:$0xff]
      %v2911 = vld [vmem:[#allocation3 + $0x130] sm:$0xff]
      %v2912 = vld [vmem:[#allocation3 + $0x138] sm:$0xff]
      %v2913 = vld [vmem:[#allocation3 + $0x140] sm:$0xff]
      %v2914 = vld [vmem:[#allocation3 + $0x148] sm:$0xff]
      %v2915 = vld [vmem:[#allocation3 + $0x150] sm:$0xff]
      %v2916 = vld [vmem:[#allocation3 + $0x158] sm:$0xff]
      %v2917 = vld [vmem:[#allocation3 + $0x160] sm:$0xff]
      %v2918 = vld [vmem:[#allocation3 + $0x168] sm:$0xff]
      %v2919 = vld [vmem:[#allocation3 + $0x170] sm:$0xff]
      %v2920 = vld [vmem:[#allocation3 + $0x178] sm:$0xff]
      %v2921 = vld [vmem:[#allocation3 + $0x180] sm:$0xff]
      %v2922 = vld [vmem:[#allocation3 + $0x188] sm:$0xff]
      %v2923 = vld [vmem:[#allocation3 + $0x190] sm:$0xff]
      %v2924 = vld [vmem:[#allocation3 + $0x198] sm:$0xff]
      %v2925 = vld [vmem:[#allocation3 + $0x1a0] sm:$0xff]
      %v2926 = vld [vmem:[#allocation3 + $0x1a8] sm:$0xff]
      %v2927 = vld [vmem:[#allocation3 + $0x1b0] sm:$0xff]
      %v2928 = vld [vmem:[#allocation3 + $0x1b8] sm:$0xff]
      %v2929 = vld [vmem:[#allocation3 + $0x1c0] sm:$0xff]
      %v2930 = vld [vmem:[#allocation3 + $0x1c8] sm:$0xff]
      %v2931 = vld [vmem:[#allocation3 + $0x1d0] sm:$0xff]
      %v2932 = vld [vmem:[#allocation3 + $0x1d8] sm:$0xff]
      %v2933 = vld [vmem:[#allocation3 + $0x1e0] sm:$0xff]
      %v2934 = vld [vmem:[#allocation3 + $0x1e8] sm:$0xff]
      %v2935 = vld [vmem:[#allocation3 + $0x1f0] sm:$0xff]
      %v2936 = vld [vmem:[#allocation3 + $0x1f8] sm:$0xff]
      %v2937 = vld [vmem:[#allocation3 + $0x200] sm:$0xff]
      %v2938 = vld [vmem:[#allocation3 + $0x208] sm:$0xff]
      %v2939 = vld [vmem:[#allocation3 + $0x210] sm:$0xff]
      %v2940 = vld [vmem:[#allocation3 + $0x218] sm:$0xff]
      %v2941 = vld [vmem:[#allocation3 + $0x220] sm:$0xff]
      %v2942 = vld [vmem:[#allocation3 + $0x228] sm:$0xff]
      %v2943 = vld [vmem:[#allocation3 + $0x230] sm:$0xff]
      %v2944 = vld [vmem:[#allocation3 + $0x238] sm:$0xff]
      %v2945 = vld [vmem:[#allocation3 + $0x240] sm:$0xff]
      %v2946 = vld [vmem:[#allocation3 + $0x248] sm:$0xff]
      %v2947 = vld [vmem:[#allocation3 + $0x250] sm:$0xff]
      %v2948 = vld [vmem:[#allocation3 + $0x258] sm:$0xff]
      %v2949 = vld [vmem:[#allocation3 + $0x260] sm:$0xff]
      %v2950 = vld [vmem:[#allocation3 + $0x268] sm:$0xff]
      %v2951 = vld [vmem:[#allocation3 + $0x270] sm:$0xf]
      %v2952 = vld [vmem:[#allocation3 + $0x278] sm:$0xf]
      %v2953 = vld [vmem:[#allocation3 + $0x280] sm:$0xf]
      %v2954 = vld [vmem:[#allocation3 + $0x288] sm:$0xf]
      %v2955 = vld [vmem:[#allocation3 + $0x290] sm:$0xf]
      %v2956 = vld [vmem:[#allocation3 + $0x298] sm:$0xf]
      %v2957 = vld [vmem:[%s3 + $0x18] sm:$0xff]
      %v2958 = vld [vmem:[%s3 + $0x20] sm:$0xff]
      %2960 = vset.pattern.permute.xlu0 0
      %2961 = vperm.xlu0 %2960, %v2957
      %v2962 = vpop.permute.xlu0 %2961
      %2965 = vset.pattern.permute.xlu0 0
      %2966 = vperm.xlu0 %2965, %v2958
      %v2967 = vpop.permute.xlu0 %2966
      %vm2969 = vcmask 883712
      %v2971 = vsel %vm2969, %v2871, 0
      %v2974 = vsel %vm2969, %v2872, 0
      %v2977 = vsel %vm655, %v2951, 0
      %v2980 = vsel %vm655, %v2952, 0
      %v2983 = vsel %vm655, %v2953, 0
      %v2986 = vsel %vm655, %v2954, 0
      %v2989 = vsel %vm655, %v2955, 0
      %v2992 = vsel %vm655, %v2956, 0
      %2994 = vmatprep.subr.mxu0 0.0
      %2995 = vmatpush1.msra.mxu0 0.0
      %2996 = vmatprep.subr.mxu0 0.0
      %2997 = vmatpush1.msra.mxu0 0.0
      %2998 = vmatprep.subr.mxu0 %v2980
      %2999 = vmatpush1.msra.mxu0 %v2977
      %3000 = vmatprep.subr.mxu0 %v2946
      %3001 = vmatpush1.msra.mxu0 %v2945
      %3002 = vmatprep.subr.mxu0 %v2940
      %3003 = vmatpush1.msra.mxu0 %v2939
      %3004 = vmatprep.subr.mxu0 %v2934
      %3005 = vmatpush1.msra.mxu0 %v2933
      %3006 = vmatprep.subr.mxu0 %v2928
      %3007 = vmatpush1.msra.mxu0 %v2927
      %3008 = vmatprep.subr.mxu0 %v2922
      %3009 = vmatpush1.msra.mxu0 %v2921
      %3010 = vmatprep.subr.mxu0 %v2916
      %3011 = vmatpush1.msra.mxu0 %v2915
      %3012 = vmatprep.subr.mxu0 %v2910
      %3013 = vmatpush1.msra.mxu0 %v2909
      %3014 = vmatprep.subr.mxu0 %v2904
      %3015 = vmatpush1.msra.mxu0 %v2903
      %3016 = vmatprep.subr.mxu0 %v2898
      %3017 = vmatpush1.msra.mxu0 %v2897
      %3018 = vmatprep.subr.mxu0 %v2892
      %3019 = vmatpush1.msra.mxu0 %v2891
      %3020 = vmatprep.subr.mxu0 %v2886
      %3021 = vmatpush1.msra.mxu0 %v2885
      %3022 = vmatprep.subr.mxu0 %v2880
      %3023 = vmatpush1.msra.mxu0 %v2879
      %3024 = vmatprep.subr.mxu0 %v2874
      %3025 = vmatpush1.msra.mxu0 %v2873
      %3026 = vmatprep.subr.mxu0 0.0
      %3027 = vmatpush2.msra.mxu0 0.0
      %3028 = vmatprep.subr.mxu0 0.0
      %3029 = vmatpush2.msra.mxu0 0.0
      %3030 = vmatprep.subr.mxu0 0.0
      %3031 = vmatpush2.msra.mxu0 0.0
      %3032 = vmatprep.subr.mxu0 0.0
      %3033 = vmatpush2.msra.mxu0 0.0
      %3034 = vmatprep.subr.mxu0 0.0
      %3035 = vmatpush2.msra.mxu0 0.0
      %3036 = vmatprep.subr.mxu0 0.0
      %3037 = vmatpush2.msra.mxu0 0.0
      %3038 = vmatprep.subr.mxu0 0.0
      %3039 = vmatpush2.msra.mxu0 0.0
      %3040 = vmatprep.subr.mxu0 0.0
      %3041 = vmatpush2.msra.mxu0 0.0
      %3042 = vmatprep.subr.mxu0 0.0
      %3043 = vmatpush2.msra.mxu0 0.0
      %3044 = vmatprep.subr.mxu0 0.0
      %3045 = vmatpush2.msra.mxu0 0.0
      %3046 = vmatprep.subr.mxu0 0.0
      %3047 = vmatpush2.msra.mxu0 0.0
      %3048 = vmatprep.subr.mxu0 0.0
      %3049 = vmatpush2.msra.mxu0 0.0
      %3050 = vmatprep.subr.mxu0 0.0
      %3051 = vmatpush2.msra.mxu0 0.0
      %3052 = vmatprep.subr.mxu0 0.0
      %3053 = vmatpush2.msra.mxu0 0.0
      %3054 = vmatprep.subr.mxu0 0.0
      %3055 = vmatpush2.msra.mxu0 0.0
      %3056 = vmatprep.subr.mxu0 0.0
      %3057 = vmatpush2.msra.mxu0 0.0
      %3058 = vmatprep.mubr.f32.mxu0 0.0
      %3059 = vmatmul.mubr.f32.gmra.mxu0 %v2971
      %v3060 = vpop.f32.mrf.mxu0
      %v3061 = vadd.f32 %v2962, %v3060
      %v3062 = vpop.f32.mrf.mxu0
      %v3063 = vadd.f32 %v2962, %v3062
      %3064 = vmatprep.mubr.f32.mxu0 0.0
      %3065 = vmatmul.mubr.f32.gmra.mxu0 %v2974
      %v3066 = vpop.f32.mrf.mxu0
      %v3067 = vadd.f32 %v2967, %v3066
      %v3068 = vpop.f32.mrf.mxu0
      %v3069 = vadd.f32 %v2967, %v3068
      %3070 = vdwg.mxu0
      %3071 = vmatprep.subr.mxu0 0.0
      %3072 = vmatpush1.msra.mxu0 0.0
      %3073 = vmatprep.subr.mxu0 0.0
      %3074 = vmatpush1.msra.mxu0 0.0
      %3075 = vmatprep.subr.mxu0 %v2986
      %3076 = vmatpush1.msra.mxu0 %v2983
      %3077 = vmatprep.subr.mxu0 %v2948
      %3078 = vmatpush1.msra.mxu0 %v2947
      %3079 = vmatprep.subr.mxu0 %v2942
      %3080 = vmatpush1.msra.mxu0 %v2941
      %3081 = vmatprep.subr.mxu0 %v2936
      %3082 = vmatpush1.msra.mxu0 %v2935
      %3083 = vmatprep.subr.mxu0 %v2930
      %3084 = vmatpush1.msra.mxu0 %v2929
      %3085 = vmatprep.subr.mxu0 %v2924
      %3086 = vmatpush1.msra.mxu0 %v2923
      %3087 = vmatprep.subr.mxu0 %v2918
      %3088 = vmatpush1.msra.mxu0 %v2917
      %3089 = vmatprep.subr.mxu0 %v2912
      %3090 = vmatpush1.msra.mxu0 %v2911
      %3091 = vmatprep.subr.mxu0 %v2906
      %3092 = vmatpush1.msra.mxu0 %v2905
      %3093 = vmatprep.subr.mxu0 %v2900
      %3094 = vmatpush1.msra.mxu0 %v2899
      %3095 = vmatprep.subr.mxu0 %v2894
      %3096 = vmatpush1.msra.mxu0 %v2893
      %3097 = vmatprep.subr.mxu0 %v2888
      %3098 = vmatpush1.msra.mxu0 %v2887
      %3099 = vmatprep.subr.mxu0 %v2882
      %3100 = vmatpush1.msra.mxu0 %v2881
      %3101 = vmatprep.subr.mxu0 %v2876
      %3102 = vmatpush1.msra.mxu0 %v2875
      %3103 = vmatprep.subr.mxu0 0.0
      %3104 = vmatpush2.msra.mxu0 0.0
      %3105 = vmatprep.subr.mxu0 0.0
      %3106 = vmatpush2.msra.mxu0 0.0
      %3107 = vmatprep.subr.mxu0 0.0
      %3108 = vmatpush2.msra.mxu0 0.0
      %3109 = vmatprep.subr.mxu0 0.0
      %3110 = vmatpush2.msra.mxu0 0.0
      %3111 = vmatprep.subr.mxu0 0.0
      %3112 = vmatpush2.msra.mxu0 0.0
      %3113 = vmatprep.subr.mxu0 0.0
      %3114 = vmatpush2.msra.mxu0 0.0
      %3115 = vmatprep.subr.mxu0 0.0
      %3116 = vmatpush2.msra.mxu0 0.0
      %3117 = vmatprep.subr.mxu0 0.0
      %3118 = vmatpush2.msra.mxu0 0.0
      %3119 = vmatprep.subr.mxu0 0.0
      %3120 = vmatpush2.msra.mxu0 0.0
      %3121 = vmatprep.subr.mxu0 0.0
      %3122 = vmatpush2.msra.mxu0 0.0
      %3123 = vmatprep.subr.mxu0 0.0
      %3124 = vmatpush2.msra.mxu0 0.0
      %3125 = vmatprep.subr.mxu0 0.0
      %3126 = vmatpush2.msra.mxu0 0.0
      %3127 = vmatprep.subr.mxu0 0.0
      %3128 = vmatpush2.msra.mxu0 0.0
      %3129 = vmatprep.subr.mxu0 0.0
      %3130 = vmatpush2.msra.mxu0 0.0
      %3131 = vmatprep.subr.mxu0 0.0
      %3132 = vmatpush2.msra.mxu0 0.0
      %3133 = vmatprep.subr.mxu0 0.0
      %3134 = vmatpush2.msra.mxu0 0.0
      %3135 = vmatprep.mubr.f32.mxu0 0.0
      %3136 = vmatmul.mubr.f32.gmra.mxu0 %v2971
      %v3137 = vpop.f32.mrf.mxu0
      %v3138 = vadd.f32 %v2962, %v3137
      %v3139 = vpop.f32.mrf.mxu0
      %v3140 = vadd.f32 %v2962, %v3139
      %3141 = vmatprep.mubr.f32.mxu0 0.0
      %3142 = vmatmul.mubr.f32.gmra.mxu0 %v2974
      %v3143 = vpop.f32.mrf.mxu0
      %v3144 = vadd.f32 %v2967, %v3143
      %v3145 = vpop.f32.mrf.mxu0
      %v3146 = vadd.f32 %v2967, %v3145
      %3147 = vdwg.mxu0
      %3148 = vmatprep.subr.mxu0 0.0
      %3149 = vmatpush1.msra.mxu0 0.0
      %3150 = vmatprep.subr.mxu0 0.0
      %3151 = vmatpush1.msra.mxu0 0.0
      %3152 = vmatprep.subr.mxu0 %v2992
      %3153 = vmatpush1.msra.mxu0 %v2989
      %3154 = vmatprep.subr.mxu0 %v2950
      %3155 = vmatpush1.msra.mxu0 %v2949
      %3156 = vmatprep.subr.mxu0 %v2944
      %3157 = vmatpush1.msra.mxu0 %v2943
      %3158 = vmatprep.subr.mxu0 %v2938
      %3159 = vmatpush1.msra.mxu0 %v2937
      %3160 = vmatprep.subr.mxu0 %v2932
      %3161 = vmatpush1.msra.mxu0 %v2931
      %3162 = vmatprep.subr.mxu0 %v2926
      %3163 = vmatpush1.msra.mxu0 %v2925
      %3164 = vmatprep.subr.mxu0 %v2920
      %3165 = vmatpush1.msra.mxu0 %v2919
      %3166 = vmatprep.subr.mxu0 %v2914
      %3167 = vmatpush1.msra.mxu0 %v2913
      %3168 = vmatprep.subr.mxu0 %v2908
      %3169 = vmatpush1.msra.mxu0 %v2907
      %3170 = vmatprep.subr.mxu0 %v2902
      %3171 = vmatpush1.msra.mxu0 %v2901
      %3172 = vmatprep.subr.mxu0 %v2896
      %3173 = vmatpush1.msra.mxu0 %v2895
      %3174 = vmatprep.subr.mxu0 %v2890
      %3175 = vmatpush1.msra.mxu0 %v2889
      %3176 = vmatprep.subr.mxu0 %v2884
      %3177 = vmatpush1.msra.mxu0 %v2883
      %3178 = vmatprep.subr.mxu0 %v2878
      %3179 = vmatpush1.msra.mxu0 %v2877
      %3180 = vmatprep.subr.mxu0 0.0
      %3181 = vmatpush2.msra.mxu0 0.0
      %3182 = vmatprep.subr.mxu0 0.0
      %3183 = vmatpush2.msra.mxu0 0.0
      %3184 = vmatprep.subr.mxu0 0.0
      %3185 = vmatpush2.msra.mxu0 0.0
      %3186 = vmatprep.subr.mxu0 0.0
      %3187 = vmatpush2.msra.mxu0 0.0
      %3188 = vmatprep.subr.mxu0 0.0
      %3189 = vmatpush2.msra.mxu0 0.0
      %3190 = vmatprep.subr.mxu0 0.0
      %3191 = vmatpush2.msra.mxu0 0.0
      %3192 = vmatprep.subr.mxu0 0.0
      %3193 = vmatpush2.msra.mxu0 0.0
      %3194 = vmatprep.subr.mxu0 0.0
      %3195 = vmatpush2.msra.mxu0 0.0
      %3196 = vmatprep.subr.mxu0 0.0
      %3197 = vmatpush2.msra.mxu0 0.0
      %3198 = vmatprep.subr.mxu0 0.0
      %3199 = vmatpush2.msra.mxu0 0.0
      %3200 = vmatprep.subr.mxu0 0.0
      %3201 = vmatpush2.msra.mxu0 0.0
      %3202 = vmatprep.subr.mxu0 0.0
      %3203 = vmatpush2.msra.mxu0 0.0
      %3204 = vmatprep.subr.mxu0 0.0
      %3205 = vmatpush2.msra.mxu0 0.0
      %3206 = vmatprep.subr.mxu0 0.0
      %3207 = vmatpush2.msra.mxu0 0.0
      %3208 = vmatprep.subr.mxu0 0.0
      %3209 = vmatpush2.msra.mxu0 0.0
      %3210 = vmatprep.subr.mxu0 0.0
      %3211 = vmatpush2.msra.mxu0 0.0
      %3212 = vmatprep.mubr.f32.mxu0 0.0
      %3213 = vmatmul.mubr.f32.gmra.mxu0 %v2971
      %v3214 = vpop.f32.mrf.mxu0
      %v3215 = vadd.f32 %v2962, %v3214
      %v3216 = vpop.f32.mrf.mxu0
      %v3217 = vadd.f32 %v2962, %v3216
      %3218 = vmatprep.mubr.f32.mxu0 0.0
      %3219 = vmatmul.mubr.f32.gmra.mxu0 %v2974
      %v3220 = vpop.f32.mrf.mxu0
      %v3221 = vadd.f32 %v2967, %v3220
      %v3222 = vpop.f32.mrf.mxu0
      %v3223 = vadd.f32 %v2967, %v3222
      %3224 = vdwg.mxu0
      %v3225 = vmax.f32 %v3061, 0.0
      %v3226 = vmax.f32 %v3063, 0.0
      %v3227 = vmax.f32 %v3138, 0.0
      %v3228 = vmax.f32 %v3140, 0.0
      %v3229 = vmax.f32 %v3215, 0.0
      %v3230 = vmax.f32 %v3217, 0.0
      %v3231 = vmax.f32 %v3067, 0.0
      %v3232 = vmax.f32 %v3069, 0.0
      %v3233 = vmax.f32 %v3144, 0.0
      %v3234 = vmax.f32 %v3146, 0.0
      %v3235 = vmax.f32 %v3221, 0.0
      %v3236 = vmax.f32 %v3223, 0.0
      %3237 = vst [vmem:[%s204] sm:$0xff] %v3225
      %3238 = vst [vmem:[%s204 + $0x8] sm:$0xff] %v3226
      %3239 = vst [vmem:[%s204 + $0x10] sm:$0xff] %v3227
      %3240 = vst [vmem:[%s204 + $0x18] sm:$0xff] %v3231
      %3241 = vst [vmem:[%s204 + $0x20] sm:$0xff] %v3232
      %3242 = vst [vmem:[%s204 + $0x28] sm:$0xff] %v3233
      %s3243 = scalar_lea.vmem %s204, 48
      %3244 = vst [vmem:[%s3243] sm:$0xff] %v3228
      %3245 = vst [vmem:[%s3243 + $0x8] sm:$0xff] %v3229
      %3246 = vst [vmem:[%s3243 + $0x10] sm:$0xff] %v3230
      %3247 = vst [vmem:[%s3243 + $0x18] sm:$0xff] %v3234
      %3248 = vst [vmem:[%s3243 + $0x20] sm:$0xff] %v3235
      %3249 = vst [vmem:[%s3243 + $0x28] sm:$0xff] %v3236
      %s3250 = smul.u32 2, %s15
      %p3251 = scmp.lt.s32.totalorder %s3250, 3
      %s3252 = scalar_select %p3251, %s3250, 3
      %s3253 = smul.addr %s3252, 6
      %s3254 = smul.addr %s3253, 8
      %s3255 = scalar_lea.vmem %s4, %s3254
      // Predicated region
      $region37: #{dense_block_forward.1} parent=35 // pred_check
        %p3256 = pneg %p122
      $region38: #{dense_block_forward.1} parent=35 // pred_check_branch
        %3258 = sbr.rel (%p3256) target = $region40
      $region39: #{dense_block_forward.1} parent=35 // pred_region
        %s3259 = smul.u32 2, %s15
      $region40: #{dense_block_forward.1} parent=35 // pred_fallthru
        _
    $region36: #{dense_block_forward.1} parent=5 // pred_fallthru
      _
    %p3260 = scmp.le.s32.totalorder 2, %s10
    // Predicated region
    $region41: #{dense_block_forward.1} parent=5 // pred_check
      %p3261 = pneg %p3260
    $region42: #{dense_block_forward.1} parent=5 // pred_check_branch
      %3263 = sbr.rel (%p3261) target = $region44
    $region43: #{dense_block_forward.1} parent=5 // pred_region
      %s3264 = ssub.s32 %s10, 2
      // Predicated region
      $region45: #{dense_block_forward.1} parent=43 // pred_check
        %p3265 = pneg %p128
      $region46: #{dense_block_forward.1} parent=43 // pred_check_branch
        %3267 = sbr.rel (%p3265) target = $region48
      $region47: #{dense_block_forward.1} parent=43 // pred_region
        %s3268 = smul.u32 2, %s16
        %p3269 = scmp.lt.s32.totalorder %s3268, 3
        %s3270 = scalar_select %p3269, %s3268, 3
        %s3271 = smul.addr %s3270, 6
        %s3272 = smul.addr %s3271, 8
        %s3273 = scalar_lea.vmem %s4, %s3272
      $region48: #{dense_block_forward.1} parent=43 // pred_fallthru
        _
    $region44: #{dense_block_forward.1} parent=5 // pred_fallthru
      _
  $region6: #{dense_block_forward.1} parent=0 // loop_footer
    %s14 = sadd.s32 1, %s10
  $region7: #{dense_block_forward.1} parent=0 // loop_footer_branch
    %9 = sbr.rel target = $region3
  $region8: #{dense_block_forward.1} parent=0 // loop_exit
    _

</llo_original>
